<compile_context>
chip_gen: v5e
topology: v5e:2x2
jax: 0.10.0
libtpu: 0.0.40
codegen_flags: <defaults>
</compile_context>

<pallas_src>
import functools

import jax
import jax.numpy as jnp
from jax.experimental import pallas as pl
from jax.experimental.pallas import tpu as pltpu

BN_EPS = 1e-5


def _vmem_spec():
    return pl.BlockSpec(memory_space=pltpu.MemorySpace.VMEM)


# ----------------------------- Pallas kernels ------------------------------

def _double_conv_kernel(x_ref, w1_ref, g1_ref, b1_ref, w2_ref, g2_ref, b2_ref,
                        o_ref, xpad1, xpad2, *, n, h, w, c_img):
    """Fused Conv3x3 -> BN -> ReLU -> Conv3x3 -> BN -> ReLU (all in VMEM).

    x_ref : (N, H, W, C_lat) f32 NHWC latent
    w1_ref: (9, C_lat, C_img) bf16  tap-major 3x3 weights (bias=False)
    w2_ref: (9, C_img, C_img) bf16
    g*/b* : (1, C_img) f32 BatchNorm affine
    o_ref : (N, C_img, H*W) f32     channel-major, decode-ready
    xpad1 : VMEM (N, H+2, W+2, C_lat) f32 scratch (zero-padded input)
    xpad2 : VMEM (N, H+2, W+2, C_img) f32 scratch (zero-padded hidden)
    """
    m = n * h * w

    def conv3x3(pad_ref, w_ref):
        # 9 statically shifted slices of the padded scratch, each a
        # (M, C_in) x (C_in, C_out) bf16 MXU matmul with f32 accumulation.
        c_in, c_out = w_ref.shape[1], w_ref.shape[2]
        acc = jnp.zeros((m, c_out), jnp.float32)
        for t in range(9):
            dy, dx = divmod(t, 3)
            tap = pad_ref[:, dy:dy + h, dx:dx + w, :]          # (N, H, W, Cin)
            tap2 = tap.reshape(m, c_in).astype(jnp.bfloat16)
            acc = acc + jnp.dot(tap2, w_ref[t],
                                preferred_element_type=jnp.float32)
        return acc

    def bn_relu(acc, g_ref, b_ref):
        # Training-mode BatchNorm2d: biased stats over (N, H, W), f32 math.
        mean = jnp.mean(acc, axis=0, keepdims=True)
        var = jnp.mean(jnp.square(acc - mean), axis=0, keepdims=True)
        y = (acc - mean) * jax.lax.rsqrt(var + BN_EPS) * g_ref[...] + b_ref[...]
        return jnp.maximum(y, 0.0)

    # conv1 + BN + ReLU
    xpad1[...] = jnp.zeros_like(xpad1)
    xpad1[:, 1:h + 1, 1:w + 1, :] = x_ref[...]
    h1 = bn_relu(conv3x3(xpad1, w1_ref), g1_ref, b1_ref)        # (M, C_img)

    # conv2 + BN + ReLU (hidden activation never leaves VMEM)
    xpad2[...] = jnp.zeros_like(xpad2)
    xpad2[:, 1:h + 1, 1:w + 1, :] = h1.reshape(n, h, w, c_img)
    h2 = bn_relu(conv3x3(xpad2, w2_ref), g2_ref, b2_ref)        # (M, C_img)

    # Pixel-major (N*H*W, C) -> channel-major (N, C, H*W): one small 2-D
    # transpose per image so the decode hand-off is a free row-major reshape.
    for i in range(n):
        o_ref[i] = h2[i * h * w:(i + 1) * h * w, :].T


def _decode_kernel(y_ref, a1h_ref, a1w_ref, a2h_ref, a2w_ref, o_ref):
    """Separable 2x bilinear upsample (align_corners=True) -> ReLU, twice.

    y_ref : (Bb, H, W)   block of per-(n, c) spatial slabs
    a1h   : (2H, H),  a1w: (2W, W)    first-stage interpolation matrices
    a2h   : (4H, 2H), a2w: (4W, 2W)   second-stage interpolation matrices
    o_ref : (Bb, 4H, 4W)

    Each stage is a pair of batched MXU einsums over all slabs of the block:
      Z[b] = A_h @ Y[b]       ('bph,bhw->bpw')
      T[b] = Z[b] @ A_w^T     ('bpw,bqw->bpq')
    """
    bb, h, w = y_ref.shape
    h2x, w2x = a1h_ref.shape[0], a1w_ref.shape[0]
    h4x, w4x = a2h_ref.shape[0], a2w_ref.shape[0]

    y = y_ref[...]
    a1h = jnp.broadcast_to(a1h_ref[...], (bb, h2x, h))
    a1w = jnp.broadcast_to(a1w_ref[...], (bb, w2x, w))
    a2h = jnp.broadcast_to(a2h_ref[...], (bb, h4x, h2x))
    a2w = jnp.broadcast_to(a2w_ref[...], (bb, w4x, w2x))

    t = jnp.einsum('bph,bhw->bpw', a1h, y, preferred_element_type=jnp.float32)
    t = jnp.einsum('bpw,bqw->bpq', t, a1w, preferred_element_type=jnp.float32)
    t = jnp.maximum(t, 0.0)                 # ReLU after first Upsample
    t = jnp.einsum('bph,bhw->bpw', a2h, t, preferred_element_type=jnp.float32)
    t = jnp.einsum('bpw,bqw->bpq', t, a2w, preferred_element_type=jnp.float32)
    o_ref[...] = jnp.maximum(t, 0.0)        # trailing ReLU


# ------------------------------- wrappers -----------------------------------

def double_conv(x_nhwc, w1, g1, b1, w2, g2, b2):
    n, h, w, c_lat = x_nhwc.shape
    c_img = w1.shape[0]
    # (C_out, C_in, 3, 3) -> (9, C_in, C_out), tap-major, bf16 MXU operands.
    w1m = jnp.transpose(w1, (2, 3, 1, 0)).reshape(9, c_lat, c_img)
    w2m = jnp.transpose(w2, (2, 3, 1, 0)).reshape(9, c_img, c_img)
    w1m = w1m.astype(jnp.bfloat16)
    w2m = w2m.astype(jnp.bfloat16)

    m = n * h * w
    flops = 2 * m * 9 * (c_lat * c_img + c_img * c_img)
    bytes_accessed = (x_nhwc.size * 4 + w1m.size * 2 + w2m.size * 2
                      + 4 * c_img * 4 + m * c_img * 4)

    kernel = functools.partial(_double_conv_kernel, n=n, h=h, w=w, c_img=c_img)
    return pl.pallas_call(
        kernel,
        out_shape=jax.ShapeDtypeStruct((n, c_img, h * w), jnp.float32),
        in_specs=[_vmem_spec()] * 7,
        out_specs=_vmem_spec(),
        scratch_shapes=[
            pltpu.VMEM((n, h + 2, w + 2, c_lat), jnp.float32),
            pltpu.VMEM((n, h + 2, w + 2, c_img), jnp.float32),
        ],
        cost_estimate=pl.CostEstimate(flops=flops, transcendentals=0,
                                      bytes_accessed=bytes_accessed),
    )(x_nhwc, w1m, g1.reshape(1, c_img), b1.reshape(1, c_img),
      w2m, g2.reshape(1, c_img), b2.reshape(1, c_img))


def decode_upsample(y_slabs, h, w):
    """y_slabs: (B, H, W) per-(n, c) slabs -> (B, 4H, 4W)."""
    b = y_slabs.shape[0]
    a1h = _upsample_matrix(h)            # (2H, H)
    a1w = _upsample_matrix(w)            # (2W, W)
    a2h = _upsample_matrix(2 * h)        # (4H, 2H)
    a2w = _upsample_matrix(2 * w)        # (4W, 2W)

    nblk = 2 if b % 2 == 0 else 1        # 2-way parallel grid (megacore)
    bb = b // nblk
    flops = 2 * b * (2 * h * h * w + 2 * h * w * 2 * w
                     + 4 * h * 2 * h * 2 * w + 4 * h * 2 * w * 4 * w)
    bytes_accessed = (y_slabs.size + a1h.size + a1w.size + a2h.size
                      + a2w.size + b * 16 * h * w) * 4

    return pl.pallas_call(
        _decode_kernel,
        out_shape=jax.ShapeDtypeStruct((b, 4 * h, 4 * w), jnp.float32),
        grid=(nblk,),
        in_specs=[
            pl.BlockSpec((bb, h, w), lambda i: (i, 0, 0)),
            pl.BlockSpec((2 * h, h), lambda i: (0, 0)),
            pl.BlockSpec((2 * w, w), lambda i: (0, 0)),
            pl.BlockSpec((4 * h, 2 * h), lambda i: (0, 0)),
            pl.BlockSpec((4 * w, 2 * w), lambda i: (0, 0)),
        ],
        out_specs=pl.BlockSpec((bb, 4 * h, 4 * w), lambda i: (i, 0, 0)),
        compiler_params=pltpu.CompilerParams(
            dimension_semantics=("parallel",)),
        cost_estimate=pl.CostEstimate(flops=flops, transcendentals=0,
                                      bytes_accessed=bytes_accessed),
    )(y_slabs, a1h, a1w, a2h, a2w)


# ---------------------------------- glue -------------------------------------

def _upsample_matrix(s):
    """(2s, s) bilinear interpolation matrix, align_corners=True."""
    out = 2 * s
    if s == 1:
        return jnp.ones((out, 1), jnp.float32)
    idx = jnp.arange(out, dtype=jnp.float32)
    src = idx * (s - 1) / (out - 1)
    i0 = jnp.clip(jnp.floor(src).astype(jnp.int32), 0, s - 2)
    frac = src - i0.astype(jnp.float32)
    m = jnp.zeros((out, s), jnp.float32)
    m = m.at[jnp.arange(out), i0].set(1.0 - frac)
    m = m.at[jnp.arange(out), i0 + 1].add(frac)
    return m


def latent_decoder_forward(latent_nchw, params):
    n, _, h, w = latent_nchw.shape
    c_img = params["w1"].shape[0]

    x = jnp.transpose(latent_nchw, (0, 2, 3, 1))          # NCHW -> NHWC (tiny)

    # double_conv: fused Conv+BN+ReLU x2, channel-major (N, C, H*W) output.
    h2 = double_conv(x, params["w1"], params["g1"], params["b1"],
                     params["w2"], params["g2"], params["b2"])

    # decode: separable 2x bilinear upsample + ReLU, twice, per (n, c) slab.
    y = h2.reshape(n * c_img, h, w)                        # free reshape
    out = decode_upsample(y, h, w)                         # (N*C, 4H, 4W)
    return out.reshape(n, c_img, 4 * h, 4 * w)             # free reshape


# --------------------------- pure-JAX reference ------------------------------

def latent_decoder_reference(latent_nchw, params):
    def conv(x, wgt):
        return jax.lax.conv_general_dilated(
            x, wgt, window_strides=(1, 1), padding="SAME",
            dimension_numbers=("NCHW", "OIHW", "NCHW"))

    def bn_relu(x, g, b):
        mean = jnp.mean(x, axis=(0, 2, 3), keepdims=True)
        var = jnp.mean(jnp.square(x - mean), axis=(0, 2, 3), keepdims=True)
        y = (x - mean) * jax.lax.rsqrt(var + BN_EPS)
        y = y * g.reshape(1, -1, 1, 1) + b.reshape(1, -1, 1, 1)
        return jnp.maximum(y, 0.0)

    hid = bn_relu(conv(latent_nchw, params["w1"]), params["g1"], params["b1"])
    hid = bn_relu(conv(hid, params["w2"]), params["g2"], params["b2"])
    _, _, hh, ww = hid.shape
    u = jnp.einsum("ph,nchw,qw->ncpq",
                   _upsample_matrix(hh), hid, _upsample_matrix(ww))
    u = jnp.maximum(u, 0.0)
    u = jnp.einsum("ph,nchw,qw->ncpq",
                   _upsample_matrix(2 * hh), u, _upsample_matrix(2 * ww))
    return jnp.maximum(u, 0.0)


# ----------------------------------- main ------------------------------------

if __name__ == "__main__":
    key = jax.random.PRNGKey(0)
    n, c_lat, c_img, spatial = 2, 4, 8, 8  # latent (2,4,8,8) -> img (2,8,32,32)
    ka, kb, kc, kd, ke, kf, kg = jax.random.split(key, 7)

    # Deterministic synthetic parameters (shapes per the module's __init__;
    # BN affine made non-trivial so the affine path is exercised).
    params = dict(
        w1=0.20 * jax.random.normal(ka, (c_img, c_lat, 3, 3), jnp.float32),
        g1=1.0 + 0.1 * jax.random.normal(kb, (c_img,), jnp.float32),
        b1=0.1 * jax.random.normal(kc, (c_img,), jnp.float32),
        w2=0.15 * jax.random.normal(kd, (c_img, c_img, 3, 3), jnp.float32),
        g2=1.0 + 0.1 * jax.random.normal(ke, (c_img,), jnp.float32),
        b2=0.1 * jax.random.normal(kf, (c_img,), jnp.float32),
    )
    latent = jax.random.normal(kg, (n, c_lat, spatial, spatial), jnp.float32)

    out = jax.jit(latent_decoder_forward)(latent, params)
    out = jax.block_until_ready(out)

    ref = latent_decoder_reference(latent, params)
    assert out.shape == (n, c_img, 4 * spatial, 4 * spatial), out.shape
    max_err = float(jnp.max(jnp.abs(out - ref)))
    assert max_err < 5e-2, f"max abs err {max_err}"

    print("KERNEL_OK")
</pallas_src>

<mosaic_0001>
module attributes {stable_mosaic.version = 11 : i64} {
  func.func @_decode_kernel(%arg0: i32, %arg1: memref<8x8x8xf32, #tpu.memory_space<vmem>>, %arg2: memref<16x8xf32, #tpu.memory_space<vmem>>, %arg3: memref<16x8xf32, #tpu.memory_space<vmem>>, %arg4: memref<32x16xf32, #tpu.memory_space<vmem>>, %arg5: memref<32x16xf32, #tpu.memory_space<vmem>>, %arg6: memref<8x32x32xf32, #tpu.memory_space<vmem>>) attributes {dimension_semantics = [#tpu.dimension_semantics<parallel>], iteration_bounds = array<i64: 2>, scalar_prefetch = 0 : i64, scratch_operands = 0 : i64, tpu.core_type = #tpu.core_type<tc>, window_params = [{transform_indices = @transform_0, window_bounds = array<i64: 8, 8, 8>}, {pipeline_mode = #tpu.pipeline_mode<synchronous>, transform_indices = @transform_1, window_bounds = array<i64: 16, 8>}, {pipeline_mode = #tpu.pipeline_mode<synchronous>, transform_indices = @transform_2, window_bounds = array<i64: 16, 8>}, {pipeline_mode = #tpu.pipeline_mode<synchronous>, transform_indices = @transform_3, window_bounds = array<i64: 32, 16>}, {pipeline_mode = #tpu.pipeline_mode<synchronous>, transform_indices = @transform_4, window_bounds = array<i64: 32, 16>}, {transform_indices = @transform_5, window_bounds = array<i64: 8, 32, 32>}]} {
    %c0 = arith.constant 0 : index
    %c0_0 = arith.constant 0 : index
    %c0_1 = arith.constant 0 : index
    %0 = vector.load %arg1[%c0, %c0_0, %c0_1] : memref<8x8x8xf32, #tpu.memory_space<vmem>>, vector<8x8x8xf32>
    %c0_2 = arith.constant 0 : index
    %c0_3 = arith.constant 0 : index
    %1 = vector.load %arg2[%c0_2, %c0_3] : memref<16x8xf32, #tpu.memory_space<vmem>>, vector<16x8xf32>
    %2 = vector.shape_cast %1 : vector<16x8xf32> to vector<1x16x8xf32>
    %3 = vector.broadcast %2 : vector<1x16x8xf32> to vector<8x16x8xf32>
    %c0_4 = arith.constant 0 : index
    %c0_5 = arith.constant 0 : index
    %4 = vector.load %arg3[%c0_4, %c0_5] : memref<16x8xf32, #tpu.memory_space<vmem>>, vector<16x8xf32>
    %5 = vector.shape_cast %4 : vector<16x8xf32> to vector<1x16x8xf32>
    %6 = vector.broadcast %5 : vector<1x16x8xf32> to vector<8x16x8xf32>
    %c0_6 = arith.constant 0 : index
    %c0_7 = arith.constant 0 : index
    %7 = vector.load %arg4[%c0_6, %c0_7] : memref<32x16xf32, #tpu.memory_space<vmem>>, vector<32x16xf32>
    %8 = vector.shape_cast %7 : vector<32x16xf32> to vector<1x32x16xf32>
    %9 = vector.broadcast %8 : vector<1x32x16xf32> to vector<8x32x16xf32>
    %c0_8 = arith.constant 0 : index
    %c0_9 = arith.constant 0 : index
    %10 = vector.load %arg5[%c0_8, %c0_9] : memref<32x16xf32, #tpu.memory_space<vmem>>, vector<32x16xf32>
    %11 = vector.shape_cast %10 : vector<32x16xf32> to vector<1x32x16xf32>
    %12 = vector.broadcast %11 : vector<1x32x16xf32> to vector<8x32x16xf32>
    "tpu.trace_start"() <{level = 10 : i32, message = "bph,bhw->bpw"}> : () -> ()
    %cst = arith.constant dense<0.000000e+00> : vector<8x16x8xf32>
    %13 = tpu.matmul %3, %0, %cst {dimension_numbers = #tpu.dot_dimension_numbers<[2], [1], [1], [2], [0, 0, 0, 1, 1, 2], [0], [0]>} : vector<8x16x8xf32>, vector<8x8x8xf32>, vector<8x16x8xf32> -> vector<8x16x8xf32>
    "tpu.trace_stop"() : () -> ()
    "tpu.trace_start"() <{level = 10 : i32, message = "bpw,bqw->bpq"}> : () -> ()
    %cst_10 = arith.constant dense<0.000000e+00> : vector<8x16x16xf32>
    %14 = tpu.matmul %13, %6, %cst_10 {dimension_numbers = #tpu.dot_dimension_numbers<[2], [2], [1], [1], [0, 0, 0, 1, 1, 1], [0], [0]>} : vector<8x16x8xf32>, vector<8x16x8xf32>, vector<8x16x16xf32> -> vector<8x16x16xf32>
    "tpu.trace_stop"() : () -> ()
    %cst_11 = arith.constant 0.000000e+00 : f32
    %15 = vector.broadcast %cst_11 : f32 to vector<8x16x16xf32>
    %16 = arith.maximumf %14, %15 : vector<8x16x16xf32>
    "tpu.trace_start"() <{level = 10 : i32, message = "bph,bhw->bpw"}> : () -> ()
    %cst_12 = arith.constant dense<0.000000e+00> : vector<8x32x16xf32>
    %17 = tpu.matmul %9, %16, %cst_12 {dimension_numbers = #tpu.dot_dimension_numbers<[2], [1], [1], [2], [0, 0, 0, 1, 1, 2], [0], [0]>} : vector<8x32x16xf32>, vector<8x16x16xf32>, vector<8x32x16xf32> -> vector<8x32x16xf32>
    "tpu.trace_stop"() : () -> ()
    "tpu.trace_start"() <{level = 10 : i32, message = "bpw,bqw->bpq"}> : () -> ()
    %cst_13 = arith.constant dense<0.000000e+00> : vector<8x32x32xf32>
    %18 = tpu.matmul %17, %12, %cst_13 {dimension_numbers = #tpu.dot_dimension_numbers<[2], [2], [1], [1], [0, 0, 0, 1, 1, 1], [0], [0]>} : vector<8x32x16xf32>, vector<8x32x16xf32>, vector<8x32x32xf32> -> vector<8x32x32xf32>
    "tpu.trace_stop"() : () -> ()
    %cst_14 = arith.constant 0.000000e+00 : f32
    %19 = vector.broadcast %cst_14 : f32 to vector<8x32x32xf32>
    %20 = arith.maximumf %18, %19 : vector<8x32x32xf32>
    %c0_15 = arith.constant 0 : index
    %c0_16 = arith.constant 0 : index
    %c0_17 = arith.constant 0 : index
    %21 = vector.load %arg6[%c0_15, %c0_16, %c0_17] : memref<8x32x32xf32, #tpu.memory_space<vmem>>, vector<8x32x32xf32>
    tpu.vector_store %arg6[%c0_15, %c0_16, %c0_17], %20 {strides = array<i32>} : memref<8x32x32xf32, #tpu.memory_space<vmem>>, vector<8x32x32xf32>,
    return
  }
  func.func @transform_0(%arg0: i32) -> (i32, i32, i32) {
    %c0_i32 = arith.constant 0 : i32
    %c0_i32_0 = arith.constant 0 : i32
    %c0_i32_1 = arith.constant 0 : i32
    return %arg0, %c0_i32, %c0_i32_0 : i32, i32, i32
  }
  func.func @transform_1(%arg0: i32) -> (i32, i32) {
    %c0_i32 = arith.constant 0 : i32
    %c0_i32_0 = arith.constant 0 : i32
    %c0_i32_1 = arith.constant 0 : i32
    return %c0_i32, %c0_i32_0 : i32, i32
  }
  func.func @transform_2(%arg0: i32) -> (i32, i32) {
    %c0_i32 = arith.constant 0 : i32
    %c0_i32_0 = arith.constant 0 : i32
    %c0_i32_1 = arith.constant 0 : i32
    return %c0_i32, %c0_i32_0 : i32, i32
  }
  func.func @transform_3(%arg0: i32) -> (i32, i32) {
    %c0_i32 = arith.constant 0 : i32
    %c0_i32_0 = arith.constant 0 : i32
    %c0_i32_1 = arith.constant 0 : i32
    return %c0_i32, %c0_i32_0 : i32, i32
  }
  func.func @transform_4(%arg0: i32) -> (i32, i32) {
    %c0_i32 = arith.constant 0 : i32
    %c0_i32_0 = arith.constant 0 : i32
    %c0_i32_1 = arith.constant 0 : i32
    return %c0_i32, %c0_i32_0 : i32, i32
  }
  func.func @transform_5(%arg0: i32) -> (i32, i32, i32) {
    %c0_i32 = arith.constant 0 : i32
    %c0_i32_0 = arith.constant 0 : i32
    %c0_i32_1 = arith.constant 0 : i32
    return %arg0, %c0_i32, %c0_i32_0 : i32, i32, i32
  }
}

module attributes {stable_mosaic.version = 11 : i64} {
  func.func @_double_conv_kernel(%arg0: memref<2x8x8x4xf32, #tpu.memory_space<vmem>>, %arg1: memref<9x4x8xbf16, #tpu.memory_space<vmem>>, %arg2: memref<1x8xf32, #tpu.memory_space<vmem>>, %arg3: memref<1x8xf32, #tpu.memory_space<vmem>>, %arg4: memref<9x8x8xbf16, #tpu.memory_space<vmem>>, %arg5: memref<1x8xf32, #tpu.memory_space<vmem>>, %arg6: memref<1x8xf32, #tpu.memory_space<vmem>>, %arg7: memref<2x8x64xf32, #tpu.memory_space<vmem>>, %arg8: memref<2x10x10x4xf32, #tpu.memory_space<vmem>>, %arg9: memref<2x10x10x8xf32, #tpu.memory_space<vmem>>) attributes {dimension_semantics = [], scalar_prefetch = 0 : i64, scratch_operands = 2 : i64, tpu.core_type = #tpu.core_type<tc>} {
    %cst = arith.constant 0.000000e+00 : f32
    %0 = vector.broadcast %cst : f32 to vector<2x10x10x4xf32>
    %c0 = arith.constant 0 : index
    %c0_0 = arith.constant 0 : index
    %c0_1 = arith.constant 0 : index
    %c0_2 = arith.constant 0 : index
    %1 = vector.load %arg8[%c0, %c0_0, %c0_1, %c0_2] : memref<2x10x10x4xf32, #tpu.memory_space<vmem>>, vector<2x10x10x4xf32>
    tpu.vector_store %arg8[%c0, %c0_0, %c0_1, %c0_2], %0 {strides = array<i32>} : memref<2x10x10x4xf32, #tpu.memory_space<vmem>>, vector<2x10x10x4xf32>,
    %c0_3 = arith.constant 0 : index
    %c0_4 = arith.constant 0 : index
    %c0_5 = arith.constant 0 : index
    %c0_6 = arith.constant 0 : index
    %2 = vector.load %arg0[%c0_3, %c0_4, %c0_5, %c0_6] : memref<2x8x8x4xf32, #tpu.memory_space<vmem>>, vector<2x8x8x4xf32>
    %c0_7 = arith.constant 0 : index
    %c1 = arith.constant 1 : index
    %c1_8 = arith.constant 1 : index
    %c0_9 = arith.constant 0 : index
    %3 = vector.load %arg8[%c0_7, %c1, %c1_8, %c0_9] : memref<2x10x10x4xf32, #tpu.memory_space<vmem>>, vector<2x8x8x4xf32>
    tpu.vector_store %arg8[%c0_7, %c1, %c1_8, %c0_9], %2 {strides = array<i32>} : memref<2x10x10x4xf32, #tpu.memory_space<vmem>>, vector<2x8x8x4xf32>,
    %cst_10 = arith.constant 0.000000e+00 : f32
    %4 = vector.broadcast %cst_10 : f32 to vector<128x8xf32>
    %c0_11 = arith.constant 0 : index
    %c0_12 = arith.constant 0 : index
    %c0_13 = arith.constant 0 : index
    %c0_14 = arith.constant 0 : index
    %5 = vector.load %arg8[%c0_11, %c0_12, %c0_13, %c0_14] : memref<2x10x10x4xf32, #tpu.memory_space<vmem>>, vector<2x8x8x4xf32>
    %6 = vector.shape_cast %5 : vector<2x8x8x4xf32> to vector<128x4xf32>
    %7 = arith.truncf %6 : vector<128x4xf32> to vector<128x4xbf16>
    %c0_15 = arith.constant 0 : index
    %c0_16 = arith.constant 0 : index
    %c0_17 = arith.constant 0 : index
    %8 = vector.load %arg1[%c0_15, %c0_16, %c0_17] : memref<9x4x8xbf16, #tpu.memory_space<vmem>>, vector<1x4x8xbf16>
    %9 = vector.shape_cast %8 : vector<1x4x8xbf16> to vector<4x8xbf16>
    %cst_18 = arith.constant dense<0.000000e+00> : vector<128x8xf32>
    %10 = tpu.matmul %7, %9, %cst_18 {dimension_numbers = #tpu.dot_dimension_numbers<[1], [0], [0], [1], [0, 0, 1, 1], [], []>} : vector<128x4xbf16>, vector<4x8xbf16>, vector<128x8xf32> -> vector<128x8xf32>
    %11 = arith.addf %4, %10 : vector<128x8xf32>
    %c0_19 = arith.constant 0 : index
    %c0_20 = arith.constant 0 : index
    %c1_21 = arith.constant 1 : index
    %c0_22 = arith.constant 0 : index
    %12 = vector.load %arg8[%c0_19, %c0_20, %c1_21, %c0_22] : memref<2x10x10x4xf32, #tpu.memory_space<vmem>>, vector<2x8x8x4xf32>
    %13 = vector.shape_cast %12 : vector<2x8x8x4xf32> to vector<128x4xf32>
    %14 = arith.truncf %13 : vector<128x4xf32> to vector<128x4xbf16>
    %c1_23 = arith.constant 1 : index
    %c0_24 = arith.constant 0 : index
    %c0_25 = arith.constant 0 : index
    %15 = vector.load %arg1[%c1_23, %c0_24, %c0_25] : memref<9x4x8xbf16, #tpu.memory_space<vmem>>, vector<1x4x8xbf16>
    %16 = vector.shape_cast %15 : vector<1x4x8xbf16> to vector<4x8xbf16>
    %cst_26 = arith.constant dense<0.000000e+00> : vector<128x8xf32>
    %17 = tpu.matmul %14, %16, %cst_26 {dimension_numbers = #tpu.dot_dimension_numbers<[1], [0], [0], [1], [0, 0, 1, 1], [], []>} : vector<128x4xbf16>, vector<4x8xbf16>, vector<128x8xf32> -> vector<128x8xf32>
    %18 = arith.addf %11, %17 : vector<128x8xf32>
    %c0_27 = arith.constant 0 : index
    %c0_28 = arith.constant 0 : index
    %c2 = arith.constant 2 : index
    %c0_29 = arith.constant 0 : index
    %19 = vector.load %arg8[%c0_27, %c0_28, %c2, %c0_29] : memref<2x10x10x4xf32, #tpu.memory_space<vmem>>, vector<2x8x8x4xf32>
    %20 = vector.shape_cast %19 : vector<2x8x8x4xf32> to vector<128x4xf32>
    %21 = arith.truncf %20 : vector<128x4xf32> to vector<128x4xbf16>
    %c2_30 = arith.constant 2 : index
    %c0_31 = arith.constant 0 : index
    %c0_32 = arith.constant 0 : index
    %22 = vector.load %arg1[%c2_30, %c0_31, %c0_32] : memref<9x4x8xbf16, #tpu.memory_space<vmem>>, vector<1x4x8xbf16>
    %23 = vector.shape_cast %22 : vector<1x4x8xbf16> to vector<4x8xbf16>
    %cst_33 = arith.constant dense<0.000000e+00> : vector<128x8xf32>
    %24 = tpu.matmul %21, %23, %cst_33 {dimension_numbers = #tpu.dot_dimension_numbers<[1], [0], [0], [1], [0, 0, 1, 1], [], []>} : vector<128x4xbf16>, vector<4x8xbf16>, vector<128x8xf32> -> vector<128x8xf32>
    %25 = arith.addf %18, %24 : vector<128x8xf32>
    %c0_34 = arith.constant 0 : index
    %c1_35 = arith.constant 1 : index
    %c0_36 = arith.constant 0 : index
    %c0_37 = arith.constant 0 : index
    %26 = vector.load %arg8[%c0_34, %c1_35, %c0_36, %c0_37] : memref<2x10x10x4xf32, #tpu.memory_space<vmem>>, vector<2x8x8x4xf32>
    %27 = vector.shape_cast %26 : vector<2x8x8x4xf32> to vector<128x4xf32>
    %28 = arith.truncf %27 : vector<128x4xf32> to vector<128x4xbf16>
    %c3 = arith.constant 3 : index
    %c0_38 = arith.constant 0 : index
    %c0_39 = arith.constant 0 : index
    %29 = vector.load %arg1[%c3, %c0_38, %c0_39] : memref<9x4x8xbf16, #tpu.memory_space<vmem>>, vector<1x4x8xbf16>
    %30 = vector.shape_cast %29 : vector<1x4x8xbf16> to vector<4x8xbf16>
    %cst_40 = arith.constant dense<0.000000e+00> : vector<128x8xf32>
    %31 = tpu.matmul %28, %30, %cst_40 {dimension_numbers = #tpu.dot_dimension_numbers<[1], [0], [0], [1], [0, 0, 1, 1], [], []>} : vector<128x4xbf16>, vector<4x8xbf16>, vector<128x8xf32> -> vector<128x8xf32>
    %32 = arith.addf %25, %31 : vector<128x8xf32>
    %c0_41 = arith.constant 0 : index
    %c1_42 = arith.constant 1 : index
    %c1_43 = arith.constant 1 : index
    %c0_44 = arith.constant 0 : index
    %33 = vector.load %arg8[%c0_41, %c1_42, %c1_43, %c0_44] : memref<2x10x10x4xf32, #tpu.memory_space<vmem>>, vector<2x8x8x4xf32>
    %34 = vector.shape_cast %33 : vector<2x8x8x4xf32> to vector<128x4xf32>
    %35 = arith.truncf %34 : vector<128x4xf32> to vector<128x4xbf16>
    %c4 = arith.constant 4 : index
    %c0_45 = arith.constant 0 : index
    %c0_46 = arith.constant 0 : index
    %36 = vector.load %arg1[%c4, %c0_45, %c0_46] : memref<9x4x8xbf16, #tpu.memory_space<vmem>>, vector<1x4x8xbf16>
    %37 = vector.shape_cast %36 : vector<1x4x8xbf16> to vector<4x8xbf16>
    %cst_47 = arith.constant dense<0.000000e+00> : vector<128x8xf32>
    %38 = tpu.matmul %35, %37, %cst_47 {dimension_numbers = #tpu.dot_dimension_numbers<[1], [0], [0], [1], [0, 0, 1, 1], [], []>} : vector<128x4xbf16>, vector<4x8xbf16>, vector<128x8xf32> -> vector<128x8xf32>
    %39 = arith.addf %32, %38 : vector<128x8xf32>
    %c0_48 = arith.constant 0 : index
    %c1_49 = arith.constant 1 : index
    %c2_50 = arith.constant 2 : index
    %c0_51 = arith.constant 0 : index
    %40 = vector.load %arg8[%c0_48, %c1_49, %c2_50, %c0_51] : memref<2x10x10x4xf32, #tpu.memory_space<vmem>>, vector<2x8x8x4xf32>
    %41 = vector.shape_cast %40 : vector<2x8x8x4xf32> to vector<128x4xf32>
    %42 = arith.truncf %41 : vector<128x4xf32> to vector<128x4xbf16>
    %c5 = arith.constant 5 : index
    %c0_52 = arith.constant 0 : index
    %c0_53 = arith.constant 0 : index
    %43 = vector.load %arg1[%c5, %c0_52, %c0_53] : memref<9x4x8xbf16, #tpu.memory_space<vmem>>, vector<1x4x8xbf16>
    %44 = vector.shape_cast %43 : vector<1x4x8xbf16> to vector<4x8xbf16>
    %cst_54 = arith.constant dense<0.000000e+00> : vector<128x8xf32>
    %45 = tpu.matmul %42, %44, %cst_54 {dimension_numbers = #tpu.dot_dimension_numbers<[1], [0], [0], [1], [0, 0, 1, 1], [], []>} : vector<128x4xbf16>, vector<4x8xbf16>, vector<128x8xf32> -> vector<128x8xf32>
    %46 = arith.addf %39, %45 : vector<128x8xf32>
    %c0_55 = arith.constant 0 : index
    %c2_56 = arith.constant 2 : index
    %c0_57 = arith.constant 0 : index
    %c0_58 = arith.constant 0 : index
    %47 = vector.load %arg8[%c0_55, %c2_56, %c0_57, %c0_58] : memref<2x10x10x4xf32, #tpu.memory_space<vmem>>, vector<2x8x8x4xf32>
    %48 = vector.shape_cast %47 : vector<2x8x8x4xf32> to vector<128x4xf32>
    %49 = arith.truncf %48 : vector<128x4xf32> to vector<128x4xbf16>
    %c6 = arith.constant 6 : index
    %c0_59 = arith.constant 0 : index
    %c0_60 = arith.constant 0 : index
    %50 = vector.load %arg1[%c6, %c0_59, %c0_60] : memref<9x4x8xbf16, #tpu.memory_space<vmem>>, vector<1x4x8xbf16>
    %51 = vector.shape_cast %50 : vector<1x4x8xbf16> to vector<4x8xbf16>
    %cst_61 = arith.constant dense<0.000000e+00> : vector<128x8xf32>
    %52 = tpu.matmul %49, %51, %cst_61 {dimension_numbers = #tpu.dot_dimension_numbers<[1], [0], [0], [1], [0, 0, 1, 1], [], []>} : vector<128x4xbf16>, vector<4x8xbf16>, vector<128x8xf32> -> vector<128x8xf32>
    %53 = arith.addf %46, %52 : vector<128x8xf32>
    %c0_62 = arith.constant 0 : index
    %c2_63 = arith.constant 2 : index
    %c1_64 = arith.constant 1 : index
    %c0_65 = arith.constant 0 : index
    %54 = vector.load %arg8[%c0_62, %c2_63, %c1_64, %c0_65] : memref<2x10x10x4xf32, #tpu.memory_space<vmem>>, vector<2x8x8x4xf32>
    %55 = vector.shape_cast %54 : vector<2x8x8x4xf32> to vector<128x4xf32>
    %56 = arith.truncf %55 : vector<128x4xf32> to vector<128x4xbf16>
    %c7 = arith.constant 7 : index
    %c0_66 = arith.constant 0 : index
    %c0_67 = arith.constant 0 : index
    %57 = vector.load %arg1[%c7, %c0_66, %c0_67] : memref<9x4x8xbf16, #tpu.memory_space<vmem>>, vector<1x4x8xbf16>
    %58 = vector.shape_cast %57 : vector<1x4x8xbf16> to vector<4x8xbf16>
    %cst_68 = arith.constant dense<0.000000e+00> : vector<128x8xf32>
    %59 = tpu.matmul %56, %58, %cst_68 {dimension_numbers = #tpu.dot_dimension_numbers<[1], [0], [0], [1], [0, 0, 1, 1], [], []>} : vector<128x4xbf16>, vector<4x8xbf16>, vector<128x8xf32> -> vector<128x8xf32>
    %60 = arith.addf %53, %59 : vector<128x8xf32>
    %c0_69 = arith.constant 0 : index
    %c2_70 = arith.constant 2 : index
    %c2_71 = arith.constant 2 : index
    %c0_72 = arith.constant 0 : index
    %61 = vector.load %arg8[%c0_69, %c2_70, %c2_71, %c0_72] : memref<2x10x10x4xf32, #tpu.memory_space<vmem>>, vector<2x8x8x4xf32>
    %62 = vector.shape_cast %61 : vector<2x8x8x4xf32> to vector<128x4xf32>
    %63 = arith.truncf %62 : vector<128x4xf32> to vector<128x4xbf16>
    %c8 = arith.constant 8 : index
    %c0_73 = arith.constant 0 : index
    %c0_74 = arith.constant 0 : index
    %64 = vector.load %arg1[%c8, %c0_73, %c0_74] : memref<9x4x8xbf16, #tpu.memory_space<vmem>>, vector<1x4x8xbf16>
    %65 = vector.shape_cast %64 : vector<1x4x8xbf16> to vector<4x8xbf16>
    %cst_75 = arith.constant dense<0.000000e+00> : vector<128x8xf32>
    %66 = tpu.matmul %63, %65, %cst_75 {dimension_numbers = #tpu.dot_dimension_numbers<[1], [0], [0], [1], [0, 0, 1, 1], [], []>} : vector<128x4xbf16>, vector<4x8xbf16>, vector<128x8xf32> -> vector<128x8xf32>
    %67 = arith.addf %60, %66 : vector<128x8xf32>
    %cst_76 = arith.constant dense<0.000000e+00> : vector<8xf32>
    %68 = vector.multi_reduction <add>, %67, %cst_76 [0] : vector<128x8xf32> to vector<8xf32>
    %69 = vector.shape_cast %68 : vector<8xf32> to vector<1x8xf32>
    %cst_77 = arith.constant 1.280000e+02 : f32
    %70 = vector.broadcast %cst_77 : f32 to vector<1x8xf32>
    %71 = arith.divf %69, %70 : vector<1x8xf32>
    %72 = vector.broadcast %71 : vector<1x8xf32> to vector<128x8xf32>
    %73 = arith.subf %67, %72 : vector<128x8xf32>
    %74 = arith.mulf %73, %73 : vector<128x8xf32>
    %cst_78 = arith.constant dense<0.000000e+00> : vector<8xf32>
    %75 = vector.multi_reduction <add>, %74, %cst_78 [0] : vector<128x8xf32> to vector<8xf32>
    %76 = vector.shape_cast %75 : vector<8xf32> to vector<1x8xf32>
    %cst_79 = arith.constant 1.280000e+02 : f32
    %77 = vector.broadcast %cst_79 : f32 to vector<1x8xf32>
    %78 = arith.divf %76, %77 : vector<1x8xf32>
    %79 = vector.broadcast %71 : vector<1x8xf32> to vector<128x8xf32>
    %80 = arith.subf %67, %79 : vector<128x8xf32>
    %cst_80 = arith.constant 9.99999974E-6 : f32
    %81 = vector.broadcast %cst_80 : f32 to vector<1x8xf32>
    %82 = arith.addf %78, %81 : vector<1x8xf32>
    %83 = math.rsqrt %82 : vector<1x8xf32>
    %84 = vector.broadcast %83 : vector<1x8xf32> to vector<128x8xf32>
    %85 = arith.mulf %80, %84 : vector<128x8xf32>
    %c0_81 = arith.constant 0 : index
    %c0_82 = arith.constant 0 : index
    %86 = vector.load %arg2[%c0_81, %c0_82] : memref<1x8xf32, #tpu.memory_space<vmem>>, vector<1x8xf32>
    %87 = vector.broadcast %86 : vector<1x8xf32> to vector<128x8xf32>
    %88 = arith.mulf %85, %87 : vector<128x8xf32>
    %c0_83 = arith.constant 0 : index
    %c0_84 = arith.constant 0 : index
    %89 = vector.load %arg3[%c0_83, %c0_84] : memref<1x8xf32, #tpu.memory_space<vmem>>, vector<1x8xf32>
    %90 = vector.broadcast %89 : vector<1x8xf32> to vector<128x8xf32>
    %91 = arith.addf %88, %90 : vector<128x8xf32>
    %cst_85 = arith.constant 0.000000e+00 : f32
    %92 = vector.broadcast %cst_85 : f32 to vector<128x8xf32>
    %93 = arith.maximumf %91, %92 : vector<128x8xf32>
    %cst_86 = arith.constant 0.000000e+00 : f32
    %94 = vector.broadcast %cst_86 : f32 to vector<2x10x10x8xf32>
    %c0_87 = arith.constant 0 : index
    %c0_88 = arith.constant 0 : index
    %c0_89 = arith.constant 0 : index
    %c0_90 = arith.constant 0 : index
    %95 = vector.load %arg9[%c0_87, %c0_88, %c0_89, %c0_90] : memref<2x10x10x8xf32, #tpu.memory_space<vmem>>, vector<2x10x10x8xf32>
    tpu.vector_store %arg9[%c0_87, %c0_88, %c0_89, %c0_90], %94 {strides = array<i32>} : memref<2x10x10x8xf32, #tpu.memory_space<vmem>>, vector<2x10x10x8xf32>,
    %96 = vector.shape_cast %93 : vector<128x8xf32> to vector<2x8x8x8xf32>
    %c0_91 = arith.constant 0 : index
    %c1_92 = arith.constant 1 : index
    %c1_93 = arith.constant 1 : index
    %c0_94 = arith.constant 0 : index
    %97 = vector.load %arg9[%c0_91, %c1_92, %c1_93, %c0_94] : memref<2x10x10x8xf32, #tpu.memory_space<vmem>>, vector<2x8x8x8xf32>
    tpu.vector_store %arg9[%c0_91, %c1_92, %c1_93, %c0_94], %96 {strides = array<i32>} : memref<2x10x10x8xf32, #tpu.memory_space<vmem>>, vector<2x8x8x8xf32>,
    %cst_95 = arith.constant 0.000000e+00 : f32
    %98 = vector.broadcast %cst_95 : f32 to vector<128x8xf32>
    %c0_96 = arith.constant 0 : index
    %c0_97 = arith.constant 0 : index
    %c0_98 = arith.constant 0 : index
    %c0_99 = arith.constant 0 : index
    %99 = vector.load %arg9[%c0_96, %c0_97, %c0_98, %c0_99] : memref<2x10x10x8xf32, #tpu.memory_space<vmem>>, vector<2x8x8x8xf32>
    %100 = vector.shape_cast %99 : vector<2x8x8x8xf32> to vector<128x8xf32>
    %101 = arith.truncf %100 : vector<128x8xf32> to vector<128x8xbf16>
    %c0_100 = arith.constant 0 : index
    %c0_101 = arith.constant 0 : index
    %c0_102 = arith.constant 0 : index
    %102 = vector.load %arg4[%c0_100, %c0_101, %c0_102] : memref<9x8x8xbf16, #tpu.memory_space<vmem>>, vector<1x8x8xbf16>
    %103 = vector.shape_cast %102 : vector<1x8x8xbf16> to vector<8x8xbf16>
    %cst_103 = arith.constant dense<0.000000e+00> : vector<128x8xf32>
    %104 = tpu.matmul %101, %103, %cst_103 {dimension_numbers = #tpu.dot_dimension_numbers<[1], [0], [0], [1], [0, 0, 1, 1], [], []>} : vector<128x8xbf16>, vector<8x8xbf16>, vector<128x8xf32> -> vector<128x8xf32>
    %105 = arith.addf %98, %104 : vector<128x8xf32>
    %c0_104 = arith.constant 0 : index
    %c0_105 = arith.constant 0 : index
    %c1_106 = arith.constant 1 : index
    %c0_107 = arith.constant 0 : index
    %106 = vector.load %arg9[%c0_104, %c0_105, %c1_106, %c0_107] : memref<2x10x10x8xf32, #tpu.memory_space<vmem>>, vector<2x8x8x8xf32>
    %107 = vector.shape_cast %106 : vector<2x8x8x8xf32> to vector<128x8xf32>
    %108 = arith.truncf %107 : vector<128x8xf32> to vector<128x8xbf16>
    %c1_108 = arith.constant 1 : index
    %c0_109 = arith.constant 0 : index
    %c0_110 = arith.constant 0 : index
    %109 = vector.load %arg4[%c1_108, %c0_109, %c0_110] : memref<9x8x8xbf16, #tpu.memory_space<vmem>>, vector<1x8x8xbf16>
    %110 = vector.shape_cast %109 : vector<1x8x8xbf16> to vector<8x8xbf16>
    %cst_111 = arith.constant dense<0.000000e+00> : vector<128x8xf32>
    %111 = tpu.matmul %108, %110, %cst_111 {dimension_numbers = #tpu.dot_dimension_numbers<[1], [0], [0], [1], [0, 0, 1, 1], [], []>} : vector<128x8xbf16>, vector<8x8xbf16>, vector<128x8xf32> -> vector<128x8xf32>
    %112 = arith.addf %105, %111 : vector<128x8xf32>
    %c0_112 = arith.constant 0 : index
    %c0_113 = arith.constant 0 : index
    %c2_114 = arith.constant 2 : index
    %c0_115 = arith.constant 0 : index
    %113 = vector.load %arg9[%c0_112, %c0_113, %c2_114, %c0_115] : memref<2x10x10x8xf32, #tpu.memory_space<vmem>>, vector<2x8x8x8xf32>
    %114 = vector.shape_cast %113 : vector<2x8x8x8xf32> to vector<128x8xf32>
    %115 = arith.truncf %114 : vector<128x8xf32> to vector<128x8xbf16>
    %c2_116 = arith.constant 2 : index
    %c0_117 = arith.constant 0 : index
    %c0_118 = arith.constant 0 : index
    %116 = vector.load %arg4[%c2_116, %c0_117, %c0_118] : memref<9x8x8xbf16, #tpu.memory_space<vmem>>, vector<1x8x8xbf16>
    %117 = vector.shape_cast %116 : vector<1x8x8xbf16> to vector<8x8xbf16>
    %cst_119 = arith.constant dense<0.000000e+00> : vector<128x8xf32>
    %118 = tpu.matmul %115, %117, %cst_119 {dimension_numbers = #tpu.dot_dimension_numbers<[1], [0], [0], [1], [0, 0, 1, 1], [], []>} : vector<128x8xbf16>, vector<8x8xbf16>, vector<128x8xf32> -> vector<128x8xf32>
    %119 = arith.addf %112, %118 : vector<128x8xf32>
    %c0_120 = arith.constant 0 : index
    %c1_121 = arith.constant 1 : index
    %c0_122 = arith.constant 0 : index
    %c0_123 = arith.constant 0 : index
    %120 = vector.load %arg9[%c0_120, %c1_121, %c0_122, %c0_123] : memref<2x10x10x8xf32, #tpu.memory_space<vmem>>, vector<2x8x8x8xf32>
    %121 = vector.shape_cast %120 : vector<2x8x8x8xf32> to vector<128x8xf32>
    %122 = arith.truncf %121 : vector<128x8xf32> to vector<128x8xbf16>
    %c3_124 = arith.constant 3 : index
    %c0_125 = arith.constant 0 : index
    %c0_126 = arith.constant 0 : index
    %123 = vector.load %arg4[%c3_124, %c0_125, %c0_126] : memref<9x8x8xbf16, #tpu.memory_space<vmem>>, vector<1x8x8xbf16>
    %124 = vector.shape_cast %123 : vector<1x8x8xbf16> to vector<8x8xbf16>
    %cst_127 = arith.constant dense<0.000000e+00> : vector<128x8xf32>
    %125 = tpu.matmul %122, %124, %cst_127 {dimension_numbers = #tpu.dot_dimension_numbers<[1], [0], [0], [1], [0, 0, 1, 1], [], []>} : vector<128x8xbf16>, vector<8x8xbf16>, vector<128x8xf32> -> vector<128x8xf32>
    %126 = arith.addf %119, %125 : vector<128x8xf32>
    %c0_128 = arith.constant 0 : index
    %c1_129 = arith.constant 1 : index
    %c1_130 = arith.constant 1 : index
    %c0_131 = arith.constant 0 : index
    %127 = vector.load %arg9[%c0_128, %c1_129, %c1_130, %c0_131] : memref<2x10x10x8xf32, #tpu.memory_space<vmem>>, vector<2x8x8x8xf32>
    %128 = vector.shape_cast %127 : vector<2x8x8x8xf32> to vector<128x8xf32>
    %129 = arith.truncf %128 : vector<128x8xf32> to vector<128x8xbf16>
    %c4_132 = arith.constant 4 : index
    %c0_133 = arith.constant 0 : index
    %c0_134 = arith.constant 0 : index
    %130 = vector.load %arg4[%c4_132, %c0_133, %c0_134] : memref<9x8x8xbf16, #tpu.memory_space<vmem>>, vector<1x8x8xbf16>
    %131 = vector.shape_cast %130 : vector<1x8x8xbf16> to vector<8x8xbf16>
    %cst_135 = arith.constant dense<0.000000e+00> : vector<128x8xf32>
    %132 = tpu.matmul %129, %131, %cst_135 {dimension_numbers = #tpu.dot_dimension_numbers<[1], [0], [0], [1], [0, 0, 1, 1], [], []>} : vector<128x8xbf16>, vector<8x8xbf16>, vector<128x8xf32> -> vector<128x8xf32>
    %133 = arith.addf %126, %132 : vector<128x8xf32>
    %c0_136 = arith.constant 0 : index
    %c1_137 = arith.constant 1 : index
    %c2_138 = arith.constant 2 : index
    %c0_139 = arith.constant 0 : index
    %134 = vector.load %arg9[%c0_136, %c1_137, %c2_138, %c0_139] : memref<2x10x10x8xf32, #tpu.memory_space<vmem>>, vector<2x8x8x8xf32>
    %135 = vector.shape_cast %134 : vector<2x8x8x8xf32> to vector<128x8xf32>
    %136 = arith.truncf %135 : vector<128x8xf32> to vector<128x8xbf16>
    %c5_140 = arith.constant 5 : index
    %c0_141 = arith.constant 0 : index
    %c0_142 = arith.constant 0 : index
    %137 = vector.load %arg4[%c5_140, %c0_141, %c0_142] : memref<9x8x8xbf16, #tpu.memory_space<vmem>>, vector<1x8x8xbf16>
    %138 = vector.shape_cast %137 : vector<1x8x8xbf16> to vector<8x8xbf16>
    %cst_143 = arith.constant dense<0.000000e+00> : vector<128x8xf32>
    %139 = tpu.matmul %136, %138, %cst_143 {dimension_numbers = #tpu.dot_dimension_numbers<[1], [0], [0], [1], [0, 0, 1, 1], [], []>} : vector<128x8xbf16>, vector<8x8xbf16>, vector<128x8xf32> -> vector<128x8xf32>
    %140 = arith.addf %133, %139 : vector<128x8xf32>
    %c0_144 = arith.constant 0 : index
    %c2_145 = arith.constant 2 : index
    %c0_146 = arith.constant 0 : index
    %c0_147 = arith.constant 0 : index
    %141 = vector.load %arg9[%c0_144, %c2_145, %c0_146, %c0_147] : memref<2x10x10x8xf32, #tpu.memory_space<vmem>>, vector<2x8x8x8xf32>
    %142 = vector.shape_cast %141 : vector<2x8x8x8xf32> to vector<128x8xf32>
    %143 = arith.truncf %142 : vector<128x8xf32> to vector<128x8xbf16>
    %c6_148 = arith.constant 6 : index
    %c0_149 = arith.constant 0 : index
    %c0_150 = arith.constant 0 : index
    %144 = vector.load %arg4[%c6_148, %c0_149, %c0_150] : memref<9x8x8xbf16, #tpu.memory_space<vmem>>, vector<1x8x8xbf16>
    %145 = vector.shape_cast %144 : vector<1x8x8xbf16> to vector<8x8xbf16>
    %cst_151 = arith.constant dense<0.000000e+00> : vector<128x8xf32>
    %146 = tpu.matmul %143, %145, %cst_151 {dimension_numbers = #tpu.dot_dimension_numbers<[1], [0], [0], [1], [0, 0, 1, 1], [], []>} : vector<128x8xbf16>, vector<8x8xbf16>, vector<128x8xf32> -> vector<128x8xf32>
    %147 = arith.addf %140, %146 : vector<128x8xf32>
    %c0_152 = arith.constant 0 : index
    %c2_153 = arith.constant 2 : index
    %c1_154 = arith.constant 1 : index
    %c0_155 = arith.constant 0 : index
    %148 = vector.load %arg9[%c0_152, %c2_153, %c1_154, %c0_155] : memref<2x10x10x8xf32, #tpu.memory_space<vmem>>, vector<2x8x8x8xf32>
    %149 = vector.shape_cast %148 : vector<2x8x8x8xf32> to vector<128x8xf32>
    %150 = arith.truncf %149 : vector<128x8xf32> to vector<128x8xbf16>
    %c7_156 = arith.constant 7 : index
    %c0_157 = arith.constant 0 : index
    %c0_158 = arith.constant 0 : index
    %151 = vector.load %arg4[%c7_156, %c0_157, %c0_158] : memref<9x8x8xbf16, #tpu.memory_space<vmem>>, vector<1x8x8xbf16>
    %152 = vector.shape_cast %151 : vector<1x8x8xbf16> to vector<8x8xbf16>
    %cst_159 = arith.constant dense<0.000000e+00> : vector<128x8xf32>
    %153 = tpu.matmul %150, %152, %cst_159 {dimension_numbers = #tpu.dot_dimension_numbers<[1], [0], [0], [1], [0, 0, 1, 1], [], []>} : vector<128x8xbf16>, vector<8x8xbf16>, vector<128x8xf32> -> vector<128x8xf32>
    %154 = arith.addf %147, %153 : vector<128x8xf32>
    %c0_160 = arith.constant 0 : index
    %c2_161 = arith.constant 2 : index
    %c2_162 = arith.constant 2 : index
    %c0_163 = arith.constant 0 : index
    %155 = vector.load %arg9[%c0_160, %c2_161, %c2_162, %c0_163] : memref<2x10x10x8xf32, #tpu.memory_space<vmem>>, vector<2x8x8x8xf32>
    %156 = vector.shape_cast %155 : vector<2x8x8x8xf32> to vector<128x8xf32>
    %157 = arith.truncf %156 : vector<128x8xf32> to vector<128x8xbf16>
    %c8_164 = arith.constant 8 : index
    %c0_165 = arith.constant 0 : index
    %c0_166 = arith.constant 0 : index
    %158 = vector.load %arg4[%c8_164, %c0_165, %c0_166] : memref<9x8x8xbf16, #tpu.memory_space<vmem>>, vector<1x8x8xbf16>
    %159 = vector.shape_cast %158 : vector<1x8x8xbf16> to vector<8x8xbf16>
    %cst_167 = arith.constant dense<0.000000e+00> : vector<128x8xf32>
    %160 = tpu.matmul %157, %159, %cst_167 {dimension_numbers = #tpu.dot_dimension_numbers<[1], [0], [0], [1], [0, 0, 1, 1], [], []>} : vector<128x8xbf16>, vector<8x8xbf16>, vector<128x8xf32> -> vector<128x8xf32>
    %161 = arith.addf %154, %160 : vector<128x8xf32>
    %cst_168 = arith.constant dense<0.000000e+00> : vector<8xf32>
    %162 = vector.multi_reduction <add>, %161, %cst_168 [0] : vector<128x8xf32> to vector<8xf32>
    %163 = vector.shape_cast %162 : vector<8xf32> to vector<1x8xf32>
    %cst_169 = arith.constant 1.280000e+02 : f32
    %164 = vector.broadcast %cst_169 : f32 to vector<1x8xf32>
    %165 = arith.divf %163, %164 : vector<1x8xf32>
    %166 = vector.broadcast %165 : vector<1x8xf32> to vector<128x8xf32>
    %167 = arith.subf %161, %166 : vector<128x8xf32>
    %168 = arith.mulf %167, %167 : vector<128x8xf32>
    %cst_170 = arith.constant dense<0.000000e+00> : vector<8xf32>
    %169 = vector.multi_reduction <add>, %168, %cst_170 [0] : vector<128x8xf32> to vector<8xf32>
    %170 = vector.shape_cast %169 : vector<8xf32> to vector<1x8xf32>
    %cst_171 = arith.constant 1.280000e+02 : f32
    %171 = vector.broadcast %cst_171 : f32 to vector<1x8xf32>
    %172 = arith.divf %170, %171 : vector<1x8xf32>
    %173 = vector.broadcast %165 : vector<1x8xf32> to vector<128x8xf32>
    %174 = arith.subf %161, %173 : vector<128x8xf32>
    %cst_172 = arith.constant 9.99999974E-6 : f32
    %175 = vector.broadcast %cst_172 : f32 to vector<1x8xf32>
    %176 = arith.addf %172, %175 : vector<1x8xf32>
    %177 = math.rsqrt %176 : vector<1x8xf32>
    %178 = vector.broadcast %177 : vector<1x8xf32> to vector<128x8xf32>
    %179 = arith.mulf %174, %178 : vector<128x8xf32>
    %c0_173 = arith.constant 0 : index
    %c0_174 = arith.constant 0 : index
    %180 = vector.load %arg5[%c0_173, %c0_174] : memref<1x8xf32, #tpu.memory_space<vmem>>, vector<1x8xf32>
    %181 = vector.broadcast %180 : vector<1x8xf32> to vector<128x8xf32>
    %182 = arith.mulf %179, %181 : vector<128x8xf32>
    %c0_175 = arith.constant 0 : index
    %c0_176 = arith.constant 0 : index
    %183 = vector.load %arg6[%c0_175, %c0_176] : memref<1x8xf32, #tpu.memory_space<vmem>>, vector<1x8xf32>
    %184 = vector.broadcast %183 : vector<1x8xf32> to vector<128x8xf32>
    %185 = arith.addf %182, %184 : vector<128x8xf32>
    %cst_177 = arith.constant 0.000000e+00 : f32
    %186 = vector.broadcast %cst_177 : f32 to vector<128x8xf32>
    %187 = arith.maximumf %185, %186 : vector<128x8xf32>
    %188 = vector.extract_strided_slice %187 {offsets = [0, 0], sizes = [64, 8], strides = [1, 1]} : vector<128x8xf32> to vector<64x8xf32>
    %189 = tpu.transpose %188, [1, 0] : vector<64x8xf32> -> vector<8x64xf32>
    %c0_178 = arith.constant 0 : index
    %c0_179 = arith.constant 0 : index
    %c0_180 = arith.constant 0 : index
    %190 = vector.load %arg7[%c0_178, %c0_179, %c0_180] : memref<2x8x64xf32, #tpu.memory_space<vmem>>, vector<1x8x64xf32>
    %191 = vector.shape_cast %190 : vector<1x8x64xf32> to vector<8x64xf32>
    %192 = vector.shape_cast %189 : vector<8x64xf32> to vector<1x8x64xf32>
    tpu.vector_store %arg7[%c0_178, %c0_179, %c0_180], %192 {strides = array<i32>} : memref<2x8x64xf32, #tpu.memory_space<vmem>>, vector<1x8x64xf32>,
    %193 = vector.extract_strided_slice %187 {offsets = [64, 0], sizes = [64, 8], strides = [1, 1]} : vector<128x8xf32> to vector<64x8xf32>
    %194 = tpu.transpose %193, [1, 0] : vector<64x8xf32> -> vector<8x64xf32>
    %c1_181 = arith.constant 1 : index
    %c0_182 = arith.constant 0 : index
    %c0_183 = arith.constant 0 : index
    %195 = vector.load %arg7[%c1_181, %c0_182, %c0_183] : memref<2x8x64xf32, #tpu.memory_space<vmem>>, vector<1x8x64xf32>
    %196 = vector.shape_cast %195 : vector<1x8x64xf32> to vector<8x64xf32>
    %197 = vector.shape_cast %194 : vector<8x64xf32> to vector<1x8x64xf32>
    tpu.vector_store %arg7[%c1_181, %c0_182, %c0_183], %197 {strides = array<i32>} : memref<2x8x64xf32, #tpu.memory_space<vmem>>, vector<1x8x64xf32>,
    return
  }
}

</mosaic_0001>

<llo_original>
// kernel: latent_decoder_forward.3
$region0: #{latent_decoder_forward.3}
  #allocation0 [shape = 'u32[]', space=smem, size = 0x4, offset = 0x4, fixed_abs, tag = 'smem constant byte address 0x4 - core index']
  #allocation1 [shape = 'u32[72,128]{1,0:T(1,128)}', space=vmem, size = 0x9000, scoped, tag = 'internal scratch']
  %s0 = inlined_call_operand.vmem [shape: f32[16,8,8], index: 0, kind: input, shape index: {}]
  %s1 = inlined_call_operand.vmem [shape: f32[16,8], index: 1, kind: input, shape index: {}, may-alias: {1,2}]
  %s2 = inlined_call_operand.vmem [shape: f32[16,8], index: 2, kind: input, shape index: {}, may-alias: {1,2}]
  %s3 = inlined_call_operand.vmem [shape: f32[32,16], index: 3, kind: input, shape index: {}, may-alias: {3,4}]
  %s4 = inlined_call_operand.vmem [shape: f32[32,16], index: 4, kind: input, shape index: {}, may-alias: {3,4}]
  %s5 = inlined_call_operand.hbm [shape: f32[16,32,32], index: 5, kind: output, shape index: {}]
  %s6 = sld [smem:[#allocation0]]
  $region53: #{latent_decoder_forward.3} parent=0
    _
  %s8 = ssub.s32 1, %s6
  %s9 = scalar_select 0, %s8, %s6
  $region1: #{latent_decoder_forward.3} parent=0
    #allocation2 [shape = 'u8[262144]{0}', space=vmem, size = 0x40000, scoped, tag = 'output window, operand 0']
    #allocation3 [shape = 's32[2]{0}', space=sflag, size = 0x8, scoped, tag = 'scoped memory for latent_decoder_forward.3']
    %10 = vsyncpa [#allocation3], 0
    %s11 = scalar_lea.sflag [#allocation3], 1
    %12 = vsyncpa %s11, 0
    loop: start=0, step=1, limit=4
    $region2: #{latent_decoder_forward.3} parent=1 // loop_pre_header
      _
    $region3: #{latent_decoder_forward.3} parent=1 // loop_header
      %s14 = sphi 0, %s18
      %p15 = scmp.ge.s32.totalorder %s14, 4
      %s24 = sphi 0, %s26
      %s27 = sphi 0, %s24
      %s28 = sphi 0, %s27
      %s44 = sphi 0, %s28
      %s48 = sphi 0, %s48
      %s50 = sphi 0, %s48
      %s51 = sphi 0, %s50
      %s65 = sphi 0, %s51
      %s69 = sphi 0, %s69
      %s71 = sphi 0, %s69
      %s72 = sphi 0, %s71
      %s86 = sphi 0, %s72
      %s90 = sphi 0, %s90
      %s92 = sphi 0, %s90
      %s93 = sphi 0, %s92
      %s107 = sphi 0, %s93
      %s111 = sphi 0, %s111
      %s113 = sphi 0, %s111
      %s114 = sphi 0, %s113
      %s128 = sphi 0, %s114
      %s134 = sphi 0, %s136
      %s137 = sphi 0, %s134
      %s138 = sphi 0, %s137
      %s154 = sphi 0, %s138
    $region4: #{latent_decoder_forward.3} parent=1 // loop_header_branch
      %17 = sbr.rel (%p15) target = $region8
    $region5: #{latent_decoder_forward.3} parent=1 // loop_body
      %s19 = ssub.s32 %s14, 1
      %s20 = ssub.s32 %s14, 2
      %s21 = sadd.s32 %s14, 1
      %s22 = ssub.s32 %s14, %s21
      %p23 = scmp.eq.s32.totalorder %s22, 0
      %s25 = sadd.s32 %s24, 1
      %s26 = scalar_select %p23, %s24, %s25
      %p29 = pneg %p23
      %p30 = scmp.eq.s32.totalorder %s14, 1
      %p31 = por %p29, %p30
      %p32 = scmp.ne.s32.totalorder %s24, %s27
      %p33 = scmp.eq.s32.totalorder %s14, 0
      %p34 = por %p32, %p33
      %p35 = scmp.ne.s32.totalorder %s24, %s27
      %p36 = scmp.eq.s32.totalorder %s19, 1
      %p37 = por %p35, %p36
      %p38 = scmp.ne.s32.totalorder %s27, %s28
      %p39 = scmp.eq.s32.totalorder %s19, 0
      %p40 = por %p38, %p39
      %p41 = scmp.ne.s32.totalorder %s27, %s28
      %p42 = scmp.eq.s32.totalorder %s20, 1
      %p43 = por %p41, %p42
      %p45 = scmp.ne.s32.totalorder %s28, %s44
      %p46 = scmp.eq.s32.totalorder %s20, 0
      %p47 = por %p45, %p46
      %s49 = sadd.s32 %s48, 1
      %p52 = scmp.eq.s32.totalorder %s14, 1
      %p53 = scmp.ne.s32.totalorder %s48, %s50
      %p54 = scmp.eq.s32.totalorder %s14, 0
      %p55 = por %p53, %p54
      %p56 = scmp.ne.s32.totalorder %s48, %s50
      %p57 = scmp.eq.s32.totalorder %s19, 1
      %p58 = por %p56, %p57
      %p59 = scmp.ne.s32.totalorder %s50, %s51
      %p60 = scmp.eq.s32.totalorder %s19, 0
      %p61 = por %p59, %p60
      %p62 = scmp.ne.s32.totalorder %s50, %s51
      %p63 = scmp.eq.s32.totalorder %s20, 1
      %p64 = por %p62, %p63
      %p66 = scmp.ne.s32.totalorder %s51, %s65
      %p67 = scmp.eq.s32.totalorder %s20, 0
      %p68 = por %p66, %p67
      %s70 = sadd.s32 %s69, 1
      %p73 = scmp.eq.s32.totalorder %s14, 1
      %p74 = scmp.ne.s32.totalorder %s69, %s71
      %p75 = scmp.eq.s32.totalorder %s14, 0
      %p76 = por %p74, %p75
      %p77 = scmp.ne.s32.totalorder %s69, %s71
      %p78 = scmp.eq.s32.totalorder %s19, 1
      %p79 = por %p77, %p78
      %p80 = scmp.ne.s32.totalorder %s71, %s72
      %p81 = scmp.eq.s32.totalorder %s19, 0
      %p82 = por %p80, %p81
      %p83 = scmp.ne.s32.totalorder %s71, %s72
      %p84 = scmp.eq.s32.totalorder %s20, 1
      %p85 = por %p83, %p84
      %p87 = scmp.ne.s32.totalorder %s72, %s86
      %p88 = scmp.eq.s32.totalorder %s20, 0
      %p89 = por %p87, %p88
      %s91 = sadd.s32 %s90, 1
      %p94 = scmp.eq.s32.totalorder %s14, 1
      %p95 = scmp.ne.s32.totalorder %s90, %s92
      %p96 = scmp.eq.s32.totalorder %s14, 0
      %p97 = por %p95, %p96
      %p98 = scmp.ne.s32.totalorder %s90, %s92
      %p99 = scmp.eq.s32.totalorder %s19, 1
      %p100 = por %p98, %p99
      %p101 = scmp.ne.s32.totalorder %s92, %s93
      %p102 = scmp.eq.s32.totalorder %s19, 0
      %p103 = por %p101, %p102
      %p104 = scmp.ne.s32.totalorder %s92, %s93
      %p105 = scmp.eq.s32.totalorder %s20, 1
      %p106 = por %p104, %p105
      %p108 = scmp.ne.s32.totalorder %s93, %s107
      %p109 = scmp.eq.s32.totalorder %s20, 0
      %p110 = por %p108, %p109
      %s112 = sadd.s32 %s111, 1
      %p115 = scmp.eq.s32.totalorder %s14, 1
      %p116 = scmp.ne.s32.totalorder %s111, %s113
      %p117 = scmp.eq.s32.totalorder %s14, 0
      %p118 = por %p116, %p117
      %p119 = scmp.ne.s32.totalorder %s111, %s113
      %p120 = scmp.eq.s32.totalorder %s19, 1
      %p121 = por %p119, %p120
      %p122 = scmp.ne.s32.totalorder %s113, %s114
      %p123 = scmp.eq.s32.totalorder %s19, 0
      %p124 = por %p122, %p123
      %p125 = scmp.ne.s32.totalorder %s113, %s114
      %p126 = scmp.eq.s32.totalorder %s20, 1
      %p127 = por %p125, %p126
      %p129 = scmp.ne.s32.totalorder %s114, %s128
      %p130 = scmp.eq.s32.totalorder %s20, 0
      %p131 = por %p129, %p130
      %s132 = ssub.s32 %s14, %s21
      %p133 = scmp.eq.s32.totalorder %s132, 0
      %s135 = sadd.s32 %s134, 1
      %s136 = scalar_select %p133, %s134, %s135
      %p139 = pneg %p133
      %p140 = scmp.eq.s32.totalorder %s14, 1
      %p141 = por %p139, %p140
      %p142 = scmp.ne.s32.totalorder %s134, %s137
      %p143 = scmp.eq.s32.totalorder %s14, 0
      %p144 = por %p142, %p143
      %p145 = scmp.ne.s32.totalorder %s134, %s137
      %p146 = scmp.eq.s32.totalorder %s19, 1
      %p147 = por %p145, %p146
      %p148 = scmp.ne.s32.totalorder %s137, %s138
      %p149 = scmp.eq.s32.totalorder %s19, 0
      %p150 = por %p148, %p149
      %p151 = scmp.ne.s32.totalorder %s137, %s138
      %p152 = scmp.eq.s32.totalorder %s20, 1
      %p153 = por %p151, %p152
      %p155 = scmp.ne.s32.totalorder %s138, %s154
      %p156 = scmp.eq.s32.totalorder %s20, 0
      %p157 = por %p155, %p156
      %p158 = scmp.le.s32.totalorder 1, %s14
      %p159 = scmp.lt.s32.totalorder %s14, 3
      %p160 = pnand %p158, %p159
      %p161 = pneg %p160
      // Predicated region
      $region9: #{latent_decoder_forward.3} parent=5 // pred_check
        _
      $region10: #{latent_decoder_forward.3} parent=5 // pred_check_branch
        %163 = sbr.rel (%p160) target = $region12
      $region11: #{latent_decoder_forward.3} parent=5 // pred_region
        %s164 = ssub.s32 %s14, 1
        // Predicated region
        $region13: #{latent_decoder_forward.3} parent=11 // pred_check
          %p165 = pneg %p61
        $region14: #{latent_decoder_forward.3} parent=11 // pred_check_branch
          %167 = sbr.rel (%p165) target = $region16
        $region15: #{latent_decoder_forward.3} parent=11 // pred_region
          _
        $region16: #{latent_decoder_forward.3} parent=11 // pred_fallthru
          _
        // Predicated region
        $region17: #{latent_decoder_forward.3} parent=11 // pred_check
          %p168 = pneg %p82
        $region18: #{latent_decoder_forward.3} parent=11 // pred_check_branch
          %170 = sbr.rel (%p168) target = $region20
        $region19: #{latent_decoder_forward.3} parent=11 // pred_region
          _
        $region20: #{latent_decoder_forward.3} parent=11 // pred_fallthru
          _
        // Predicated region
        $region21: #{latent_decoder_forward.3} parent=11 // pred_check
          %p171 = pneg %p103
        $region22: #{latent_decoder_forward.3} parent=11 // pred_check_branch
          %173 = sbr.rel (%p171) target = $region24
        $region23: #{latent_decoder_forward.3} parent=11 // pred_region
          _
        $region24: #{latent_decoder_forward.3} parent=11 // pred_fallthru
          _
        // Predicated region
        $region25: #{latent_decoder_forward.3} parent=11 // pred_check
          %p174 = pneg %p124
        $region26: #{latent_decoder_forward.3} parent=11 // pred_check_branch
          %176 = sbr.rel (%p174) target = $region28
        $region27: #{latent_decoder_forward.3} parent=11 // pred_region
          _
        $region28: #{latent_decoder_forward.3} parent=11 // pred_fallthru
          _
      $region12: #{latent_decoder_forward.3} parent=5 // pred_fallthru
        _
      %p177 = scmp.lt.s32.totalorder %s14, 2
      // Predicated region
      $region29: #{latent_decoder_forward.3} parent=5 // pred_check
        %p178 = pneg %p177
      $region30: #{latent_decoder_forward.3} parent=5 // pred_check_branch
        %180 = sbr.rel (%p178) target = $region32
      $region31: #{latent_decoder_forward.3} parent=5 // pred_region
        // Predicated region
        $region33: #{latent_decoder_forward.3} parent=31 // pred_check
          %p181 = pneg %p34
        $region34: #{latent_decoder_forward.3} parent=31 // pred_check_branch
          %183 = sbr.rel (%p181) target = $region36
        $region35: #{latent_decoder_forward.3} parent=31 // pred_region
          %s184 = smul.u32 8, %s14
          %p185 = scmp.lt.s32.totalorder %s184, 15
          %s186 = scalar_select %p185, %s184, 15
          %s187 = smul.addr %s186, 8
          %s188 = scalar_lea.vmem %s0, %s187
          %s189 = smul.u32 8, %s14
        $region36: #{latent_decoder_forward.3} parent=31 // pred_fallthru
          _
      $region32: #{latent_decoder_forward.3} parent=5 // pred_fallthru
        _
      %p190 = scmp.le.s32.totalorder 1, %s14
      %p191 = scmp.lt.s32.totalorder %s14, 3
      %p192 = pnand %p190, %p191
      %p193 = pneg %p192
      // Predicated region
      $region37: #{latent_decoder_forward.3} parent=5 // pred_check
        _
      $region38: #{latent_decoder_forward.3} parent=5 // pred_check_branch
        %195 = sbr.rel (%p192) target = $region40
      $region39: #{latent_decoder_forward.3} parent=5 // pred_region
        %s196 = ssub.s32 %s14, 1
        %s197 = smul.u32 8, %s19
        %p198 = scmp.lt.s32.totalorder %s197, 15
        %s199 = scalar_select %p198, %s197, 15
        %s200 = smul.addr %s199, 8
        %s201 = scalar_lea.vmem %s0, %s200
        %p202 = pneg %p40
        %p203 = pneg %p37
        %p204 = pneg %p61
        %p205 = pneg %p58
        %p206 = pneg %p82
        %p207 = pneg %p79
        %p208 = pneg %p103
        %p209 = pneg %p100
        %p210 = pneg %p124
        %p211 = pneg %p121
        %p212 = pneg %p150
        %p213 = pneg %p147
        %s214 = sand.u32 %s137, 1
        %s215 = scalar_lea.sflag [#allocation3], %s214
        %s216 = sand.u32 %s137, 1
        %s217 = smul.addr %s216, 256
        %s218 = scalar_lea.vmem [#allocation2], %s217
        %s219 = smul.u32 8, %s19
        %p220 = scmp.lt.s32.totalorder %s219, 15
        %s221 = scalar_select %p220, %s219, 15
        %s222 = smul.addr %s221, 8
        %s223 = scalar_lea.vmem %s0, %s222
        %s224 = smul.u32 8, %s19
        %s225 = smul.u32 8, %s19
        %v226 = vld [vmem:[%s223] sm:$0xff]
        %v227 = vld [vmem:[%s223 + $0x8] sm:$0xff]
        %v228 = vld [vmem:[%s223 + $0x10] sm:$0xff]
        %v229 = vld [vmem:[%s223 + $0x18] sm:$0xff]
        %v230 = vld [vmem:[%s223 + $0x20] sm:$0xff]
        %v231 = vld [vmem:[%s223 + $0x28] sm:$0xff]
        %v232 = vld [vmem:[%s223 + $0x30] sm:$0xff]
        %v233 = vld [vmem:[%s223 + $0x38] sm:$0xff]
        %v234 = vld [vmem:[%s1] sm:$0xff]
        %v235 = vld [vmem:[%s1 + $0x8] sm:$0xff]
        %v236 = vld [vmem:[%s2] sm:$0xff]
        %v237 = vld [vmem:[%s2 + $0x8] sm:$0xff]
        %v238 = vld [vmem:[%s3] sm:$0xff]
        %v239 = vld [vmem:[%s3 + $0x8] sm:$0xff]
        %v240 = vld [vmem:[%s3 + $0x10] sm:$0xff]
        %v241 = vld [vmem:[%s3 + $0x18] sm:$0xff]
        %v242 = vld [vmem:[%s4] sm:$0xff]
        %v243 = vld [vmem:[%s4 + $0x8] sm:$0xff]
        %v244 = vld [vmem:[%s4 + $0x10] sm:$0xff]
        %v245 = vld [vmem:[%s4 + $0x18] sm:$0xff]
        %vm246 = vcmask 64512
        %v248 = vsel %vm246, %v234, 0
        %v251 = vsel %vm246, %v235, 0
        %253 = vmatpush.msra.mxu0 0.0
        %254 = vmatpush.msra.mxu0 0.0
        %255 = vmatpush.msra.mxu0 0.0
        %256 = vmatpush.msra.mxu0 0.0
        %257 = vmatpush.msra.mxu0 0.0
        %258 = vmatpush.msra.mxu0 0.0
        %259 = vmatpush.msra.mxu0 0.0
        %260 = vmatpush.msra.mxu0 0.0
        %261 = vmatpush.msra.mxu0 0.0
        %262 = vmatpush.msra.mxu0 0.0
        %263 = vmatpush.msra.mxu0 0.0
        %264 = vmatpush.msra.mxu0 0.0
        %265 = vmatpush.msra.mxu0 0.0
        %266 = vmatpush.msra.mxu0 0.0
        %267 = vmatpush.msra.mxu0 0.0
        %268 = vmatpush.msra.mxu0 %v226
        %269 = vmatmul.f32.gmra.mxu0 %v248
        %v270 = vpop.f32.mrf.mxu0
        %v271 = vadd.f32 0.0, %v270
        %272 = vmatmul.f32.gmra.mxu0 %v251
        %v273 = vpop.f32.mrf.mxu0
        %v274 = vadd.f32 0.0, %v273
        %275 = vdwg.mxu0
        %276 = vmatpush.msra.mxu0 0.0
        %277 = vmatpush.msra.mxu0 0.0
        %278 = vmatpush.msra.mxu0 0.0
        %279 = vmatpush.msra.mxu0 0.0
        %280 = vmatpush.msra.mxu0 0.0
        %281 = vmatpush.msra.mxu0 0.0
        %282 = vmatpush.msra.mxu0 0.0
        %283 = vmatpush.msra.mxu0 0.0
        %284 = vmatpush.msra.mxu0 0.0
        %285 = vmatpush.msra.mxu0 0.0
        %286 = vmatpush.msra.mxu0 0.0
        %287 = vmatpush.msra.mxu0 0.0
        %288 = vmatpush.msra.mxu0 0.0
        %289 = vmatpush.msra.mxu0 0.0
        %290 = vmatpush.msra.mxu0 0.0
        %291 = vmatpush.msra.mxu0 %v227
        %292 = vmatmul.f32.gmra.mxu0 %v248
        %v293 = vpop.f32.mrf.mxu0
        %v294 = vadd.f32 0.0, %v293
        %295 = vmatmul.f32.gmra.mxu0 %v251
        %v296 = vpop.f32.mrf.mxu0
        %v297 = vadd.f32 0.0, %v296
        %298 = vdwg.mxu0
        %299 = vmatpush.msra.mxu0 0.0
        %300 = vmatpush.msra.mxu0 0.0
        %301 = vmatpush.msra.mxu0 0.0
        %302 = vmatpush.msra.mxu0 0.0
        %303 = vmatpush.msra.mxu0 0.0
        %304 = vmatpush.msra.mxu0 0.0
        %305 = vmatpush.msra.mxu0 0.0
        %306 = vmatpush.msra.mxu0 0.0
        %307 = vmatpush.msra.mxu0 0.0
        %308 = vmatpush.msra.mxu0 0.0
        %309 = vmatpush.msra.mxu0 0.0
        %310 = vmatpush.msra.mxu0 0.0
        %311 = vmatpush.msra.mxu0 0.0
        %312 = vmatpush.msra.mxu0 0.0
        %313 = vmatpush.msra.mxu0 0.0
        %314 = vmatpush.msra.mxu0 %v228
        %315 = vmatmul.f32.gmra.mxu0 %v248
        %v316 = vpop.f32.mrf.mxu0
        %v317 = vadd.f32 0.0, %v316
        %318 = vmatmul.f32.gmra.mxu0 %v251
        %v319 = vpop.f32.mrf.mxu0
        %v320 = vadd.f32 0.0, %v319
        %321 = vdwg.mxu0
        %322 = vmatpush.msra.mxu0 0.0
        %323 = vmatpush.msra.mxu0 0.0
        %324 = vmatpush.msra.mxu0 0.0
        %325 = vmatpush.msra.mxu0 0.0
        %326 = vmatpush.msra.mxu0 0.0
        %327 = vmatpush.msra.mxu0 0.0
        %328 = vmatpush.msra.mxu0 0.0
        %329 = vmatpush.msra.mxu0 0.0
        %330 = vmatpush.msra.mxu0 0.0
        %331 = vmatpush.msra.mxu0 0.0
        %332 = vmatpush.msra.mxu0 0.0
        %333 = vmatpush.msra.mxu0 0.0
        %334 = vmatpush.msra.mxu0 0.0
        %335 = vmatpush.msra.mxu0 0.0
        %336 = vmatpush.msra.mxu0 0.0
        %337 = vmatpush.msra.mxu0 %v229
        %338 = vmatmul.f32.gmra.mxu0 %v248
        %v339 = vpop.f32.mrf.mxu0
        %v340 = vadd.f32 0.0, %v339
        %341 = vmatmul.f32.gmra.mxu0 %v251
        %v342 = vpop.f32.mrf.mxu0
        %v343 = vadd.f32 0.0, %v342
        %344 = vdwg.mxu0
        %345 = vmatpush.msra.mxu0 0.0
        %346 = vmatpush.msra.mxu0 0.0
        %347 = vmatpush.msra.mxu0 0.0
        %348 = vmatpush.msra.mxu0 0.0
        %349 = vmatpush.msra.mxu0 0.0
        %350 = vmatpush.msra.mxu0 0.0
        %351 = vmatpush.msra.mxu0 0.0
        %352 = vmatpush.msra.mxu0 0.0
        %353 = vmatpush.msra.mxu0 0.0
        %354 = vmatpush.msra.mxu0 0.0
        %355 = vmatpush.msra.mxu0 0.0
        %356 = vmatpush.msra.mxu0 0.0
        %357 = vmatpush.msra.mxu0 0.0
        %358 = vmatpush.msra.mxu0 0.0
        %359 = vmatpush.msra.mxu0 0.0
        %360 = vmatpush.msra.mxu0 %v230
        %361 = vmatmul.f32.gmra.mxu0 %v248
        %v362 = vpop.f32.mrf.mxu0
        %v363 = vadd.f32 0.0, %v362
        %364 = vmatmul.f32.gmra.mxu0 %v251
        %v365 = vpop.f32.mrf.mxu0
        %v366 = vadd.f32 0.0, %v365
        %367 = vdwg.mxu0
        %368 = vmatpush.msra.mxu0 0.0
        %369 = vmatpush.msra.mxu0 0.0
        %370 = vmatpush.msra.mxu0 0.0
        %371 = vmatpush.msra.mxu0 0.0
        %372 = vmatpush.msra.mxu0 0.0
        %373 = vmatpush.msra.mxu0 0.0
        %374 = vmatpush.msra.mxu0 0.0
        %375 = vmatpush.msra.mxu0 0.0
        %376 = vmatpush.msra.mxu0 0.0
        %377 = vmatpush.msra.mxu0 0.0
        %378 = vmatpush.msra.mxu0 0.0
        %379 = vmatpush.msra.mxu0 0.0
        %380 = vmatpush.msra.mxu0 0.0
        %381 = vmatpush.msra.mxu0 0.0
        %382 = vmatpush.msra.mxu0 0.0
        %383 = vmatpush.msra.mxu0 %v231
        %384 = vmatmul.f32.gmra.mxu0 %v248
        %v385 = vpop.f32.mrf.mxu0
        %v386 = vadd.f32 0.0, %v385
        %387 = vmatmul.f32.gmra.mxu0 %v251
        %v388 = vpop.f32.mrf.mxu0
        %v389 = vadd.f32 0.0, %v388
        %390 = vdwg.mxu0
        %391 = vmatpush.msra.mxu0 0.0
        %392 = vmatpush.msra.mxu0 0.0
        %393 = vmatpush.msra.mxu0 0.0
        %394 = vmatpush.msra.mxu0 0.0
        %395 = vmatpush.msra.mxu0 0.0
        %396 = vmatpush.msra.mxu0 0.0
        %397 = vmatpush.msra.mxu0 0.0
        %398 = vmatpush.msra.mxu0 0.0
        %399 = vmatpush.msra.mxu0 0.0
        %400 = vmatpush.msra.mxu0 0.0
        %401 = vmatpush.msra.mxu0 0.0
        %402 = vmatpush.msra.mxu0 0.0
        %403 = vmatpush.msra.mxu0 0.0
        %404 = vmatpush.msra.mxu0 0.0
        %405 = vmatpush.msra.mxu0 0.0
        %406 = vmatpush.msra.mxu0 %v232
        %407 = vmatmul.f32.gmra.mxu0 %v248
        %v408 = vpop.f32.mrf.mxu0
        %v409 = vadd.f32 0.0, %v408
        %410 = vmatmul.f32.gmra.mxu0 %v251
        %v411 = vpop.f32.mrf.mxu0
        %v412 = vadd.f32 0.0, %v411
        %413 = vdwg.mxu0
        %414 = vmatpush.msra.mxu0 0.0
        %415 = vmatpush.msra.mxu0 0.0
        %416 = vmatpush.msra.mxu0 0.0
        %417 = vmatpush.msra.mxu0 0.0
        %418 = vmatpush.msra.mxu0 0.0
        %419 = vmatpush.msra.mxu0 0.0
        %420 = vmatpush.msra.mxu0 0.0
        %421 = vmatpush.msra.mxu0 0.0
        %422 = vmatpush.msra.mxu0 0.0
        %423 = vmatpush.msra.mxu0 0.0
        %424 = vmatpush.msra.mxu0 0.0
        %425 = vmatpush.msra.mxu0 0.0
        %426 = vmatpush.msra.mxu0 0.0
        %427 = vmatpush.msra.mxu0 0.0
        %428 = vmatpush.msra.mxu0 0.0
        %429 = vmatpush.msra.mxu0 %v233
        %430 = vmatmul.f32.gmra.mxu0 %v248
        %v431 = vpop.f32.mrf.mxu0
        %v432 = vadd.f32 0.0, %v431
        %433 = vmatmul.f32.gmra.mxu0 %v251
        %v434 = vpop.f32.mrf.mxu0
        %v435 = vadd.f32 0.0, %v434
        %436 = vdwg.mxu0
        %v438 = vsel %vm246, %v271, 0
        %v441 = vsel %vm246, %v274, 0
        %v444 = vsel %vm246, %v236, 0
        %v447 = vsel %vm246, %v237, 0
        %449 = vmatpush.xpose.msra.mxu0 0.0
        %450 = vmatpush.xpose.msra.mxu0 0.0
        %451 = vmatpush.xpose.msra.mxu0 0.0
        %452 = vmatpush.xpose.msra.mxu0 0.0
        %453 = vmatpush.xpose.msra.mxu0 0.0
        %454 = vmatpush.xpose.msra.mxu0 0.0
        %455 = vmatpush.xpose.msra.mxu0 0.0
        %456 = vmatpush.xpose.msra.mxu0 0.0
        %457 = vmatpush.xpose.msra.mxu0 0.0
        %458 = vmatpush.xpose.msra.mxu0 0.0
        %459 = vmatpush.xpose.msra.mxu0 0.0
        %460 = vmatpush.xpose.msra.mxu0 0.0
        %461 = vmatpush.xpose.msra.mxu0 0.0
        %462 = vmatpush.xpose.msra.mxu0 0.0
        %463 = vmatpush.xpose.msra.mxu0 %v447
        %464 = vmatpush.xpose.msra.mxu0 %v444
        %465 = vmatmul.f32.gmra.mxu0 %v438
        %v466 = vpop.f32.mrf.mxu0
        %v467 = vadd.f32 0.0, %v466
        %468 = vmatmul.f32.gmra.mxu0 %v441
        %v469 = vpop.f32.mrf.mxu0
        %v470 = vadd.f32 0.0, %v469
        %471 = vdwg.mxu0
        %v473 = vsel %vm246, %v294, 0
        %v476 = vsel %vm246, %v297, 0
        %478 = vmatpush.xpose.msra.mxu0 0.0
        %479 = vmatpush.xpose.msra.mxu0 0.0
        %480 = vmatpush.xpose.msra.mxu0 0.0
        %481 = vmatpush.xpose.msra.mxu0 0.0
        %482 = vmatpush.xpose.msra.mxu0 0.0
        %483 = vmatpush.xpose.msra.mxu0 0.0
        %484 = vmatpush.xpose.msra.mxu0 0.0
        %485 = vmatpush.xpose.msra.mxu0 0.0
        %486 = vmatpush.xpose.msra.mxu0 0.0
        %487 = vmatpush.xpose.msra.mxu0 0.0
        %488 = vmatpush.xpose.msra.mxu0 0.0
        %489 = vmatpush.xpose.msra.mxu0 0.0
        %490 = vmatpush.xpose.msra.mxu0 0.0
        %491 = vmatpush.xpose.msra.mxu0 0.0
        %492 = vmatpush.xpose.msra.mxu0 %v447
        %493 = vmatpush.xpose.msra.mxu0 %v444
        %494 = vmatmul.f32.gmra.mxu0 %v473
        %v495 = vpop.f32.mrf.mxu0
        %v496 = vadd.f32 0.0, %v495
        %497 = vmatmul.f32.gmra.mxu0 %v476
        %v498 = vpop.f32.mrf.mxu0
        %v499 = vadd.f32 0.0, %v498
        %500 = vdwg.mxu0
        %v502 = vsel %vm246, %v317, 0
        %v505 = vsel %vm246, %v320, 0
        %507 = vmatpush.xpose.msra.mxu0 0.0
        %508 = vmatpush.xpose.msra.mxu0 0.0
        %509 = vmatpush.xpose.msra.mxu0 0.0
        %510 = vmatpush.xpose.msra.mxu0 0.0
        %511 = vmatpush.xpose.msra.mxu0 0.0
        %512 = vmatpush.xpose.msra.mxu0 0.0
        %513 = vmatpush.xpose.msra.mxu0 0.0
        %514 = vmatpush.xpose.msra.mxu0 0.0
        %515 = vmatpush.xpose.msra.mxu0 0.0
        %516 = vmatpush.xpose.msra.mxu0 0.0
        %517 = vmatpush.xpose.msra.mxu0 0.0
        %518 = vmatpush.xpose.msra.mxu0 0.0
        %519 = vmatpush.xpose.msra.mxu0 0.0
        %520 = vmatpush.xpose.msra.mxu0 0.0
        %521 = vmatpush.xpose.msra.mxu0 %v447
        %522 = vmatpush.xpose.msra.mxu0 %v444
        %523 = vmatmul.f32.gmra.mxu0 %v502
        %v524 = vpop.f32.mrf.mxu0
        %v525 = vadd.f32 0.0, %v524
        %526 = vmatmul.f32.gmra.mxu0 %v505
        %v527 = vpop.f32.mrf.mxu0
        %v528 = vadd.f32 0.0, %v527
        %529 = vdwg.mxu0
        %v531 = vsel %vm246, %v340, 0
        %v534 = vsel %vm246, %v343, 0
        %536 = vmatpush.xpose.msra.mxu0 0.0
        %537 = vmatpush.xpose.msra.mxu0 0.0
        %538 = vmatpush.xpose.msra.mxu0 0.0
        %539 = vmatpush.xpose.msra.mxu0 0.0
        %540 = vmatpush.xpose.msra.mxu0 0.0
        %541 = vmatpush.xpose.msra.mxu0 0.0
        %542 = vmatpush.xpose.msra.mxu0 0.0
        %543 = vmatpush.xpose.msra.mxu0 0.0
        %544 = vmatpush.xpose.msra.mxu0 0.0
        %545 = vmatpush.xpose.msra.mxu0 0.0
        %546 = vmatpush.xpose.msra.mxu0 0.0
        %547 = vmatpush.xpose.msra.mxu0 0.0
        %548 = vmatpush.xpose.msra.mxu0 0.0
        %549 = vmatpush.xpose.msra.mxu0 0.0
        %550 = vmatpush.xpose.msra.mxu0 %v447
        %551 = vmatpush.xpose.msra.mxu0 %v444
        %552 = vmatmul.f32.gmra.mxu0 %v531
        %v553 = vpop.f32.mrf.mxu0
        %v554 = vadd.f32 0.0, %v553
        %555 = vmatmul.f32.gmra.mxu0 %v534
        %v556 = vpop.f32.mrf.mxu0
        %v557 = vadd.f32 0.0, %v556
        %558 = vdwg.mxu0
        %v560 = vsel %vm246, %v363, 0
        %v563 = vsel %vm246, %v366, 0
        %565 = vmatpush.xpose.msra.mxu0 0.0
        %566 = vmatpush.xpose.msra.mxu0 0.0
        %567 = vmatpush.xpose.msra.mxu0 0.0
        %568 = vmatpush.xpose.msra.mxu0 0.0
        %569 = vmatpush.xpose.msra.mxu0 0.0
        %570 = vmatpush.xpose.msra.mxu0 0.0
        %571 = vmatpush.xpose.msra.mxu0 0.0
        %572 = vmatpush.xpose.msra.mxu0 0.0
        %573 = vmatpush.xpose.msra.mxu0 0.0
        %574 = vmatpush.xpose.msra.mxu0 0.0
        %575 = vmatpush.xpose.msra.mxu0 0.0
        %576 = vmatpush.xpose.msra.mxu0 0.0
        %577 = vmatpush.xpose.msra.mxu0 0.0
        %578 = vmatpush.xpose.msra.mxu0 0.0
        %579 = vmatpush.xpose.msra.mxu0 %v447
        %580 = vmatpush.xpose.msra.mxu0 %v444
        %581 = vmatmul.f32.gmra.mxu0 %v560
        %v582 = vpop.f32.mrf.mxu0
        %v583 = vadd.f32 0.0, %v582
        %584 = vmatmul.f32.gmra.mxu0 %v563
        %v585 = vpop.f32.mrf.mxu0
        %v586 = vadd.f32 0.0, %v585
        %587 = vdwg.mxu0
        %v589 = vsel %vm246, %v386, 0
        %v592 = vsel %vm246, %v389, 0
        %594 = vmatpush.xpose.msra.mxu0 0.0
        %595 = vmatpush.xpose.msra.mxu0 0.0
        %596 = vmatpush.xpose.msra.mxu0 0.0
        %597 = vmatpush.xpose.msra.mxu0 0.0
        %598 = vmatpush.xpose.msra.mxu0 0.0
        %599 = vmatpush.xpose.msra.mxu0 0.0
        %600 = vmatpush.xpose.msra.mxu0 0.0
        %601 = vmatpush.xpose.msra.mxu0 0.0
        %602 = vmatpush.xpose.msra.mxu0 0.0
        %603 = vmatpush.xpose.msra.mxu0 0.0
        %604 = vmatpush.xpose.msra.mxu0 0.0
        %605 = vmatpush.xpose.msra.mxu0 0.0
        %606 = vmatpush.xpose.msra.mxu0 0.0
        %607 = vmatpush.xpose.msra.mxu0 0.0
        %608 = vmatpush.xpose.msra.mxu0 %v447
        %609 = vmatpush.xpose.msra.mxu0 %v444
        %610 = vmatmul.f32.gmra.mxu0 %v589
        %v611 = vpop.f32.mrf.mxu0
        %v612 = vadd.f32 0.0, %v611
        %613 = vmatmul.f32.gmra.mxu0 %v592
        %v614 = vpop.f32.mrf.mxu0
        %v615 = vadd.f32 0.0, %v614
        %616 = vdwg.mxu0
        %v618 = vsel %vm246, %v409, 0
        %v621 = vsel %vm246, %v412, 0
        %623 = vmatpush.xpose.msra.mxu0 0.0
        %624 = vmatpush.xpose.msra.mxu0 0.0
        %625 = vmatpush.xpose.msra.mxu0 0.0
        %626 = vmatpush.xpose.msra.mxu0 0.0
        %627 = vmatpush.xpose.msra.mxu0 0.0
        %628 = vmatpush.xpose.msra.mxu0 0.0
        %629 = vmatpush.xpose.msra.mxu0 0.0
        %630 = vmatpush.xpose.msra.mxu0 0.0
        %631 = vmatpush.xpose.msra.mxu0 0.0
        %632 = vmatpush.xpose.msra.mxu0 0.0
        %633 = vmatpush.xpose.msra.mxu0 0.0
        %634 = vmatpush.xpose.msra.mxu0 0.0
        %635 = vmatpush.xpose.msra.mxu0 0.0
        %636 = vmatpush.xpose.msra.mxu0 0.0
        %637 = vmatpush.xpose.msra.mxu0 %v447
        %638 = vmatpush.xpose.msra.mxu0 %v444
        %639 = vmatmul.f32.gmra.mxu0 %v618
        %v640 = vpop.f32.mrf.mxu0
        %v641 = vadd.f32 0.0, %v640
        %642 = vmatmul.f32.gmra.mxu0 %v621
        %v643 = vpop.f32.mrf.mxu0
        %v644 = vadd.f32 0.0, %v643
        %645 = vdwg.mxu0
        %v647 = vsel %vm246, %v432, 0
        %v650 = vsel %vm246, %v435, 0
        %652 = vmatpush.xpose.msra.mxu0 0.0
        %653 = vmatpush.xpose.msra.mxu0 0.0
        %654 = vmatpush.xpose.msra.mxu0 0.0
        %655 = vmatpush.xpose.msra.mxu0 0.0
        %656 = vmatpush.xpose.msra.mxu0 0.0
        %657 = vmatpush.xpose.msra.mxu0 0.0
        %658 = vmatpush.xpose.msra.mxu0 0.0
        %659 = vmatpush.xpose.msra.mxu0 0.0
        %660 = vmatpush.xpose.msra.mxu0 0.0
        %661 = vmatpush.xpose.msra.mxu0 0.0
        %662 = vmatpush.xpose.msra.mxu0 0.0
        %663 = vmatpush.xpose.msra.mxu0 0.0
        %664 = vmatpush.xpose.msra.mxu0 0.0
        %665 = vmatpush.xpose.msra.mxu0 0.0
        %666 = vmatpush.xpose.msra.mxu0 %v447
        %667 = vmatpush.xpose.msra.mxu0 %v444
        %668 = vmatmul.f32.gmra.mxu0 %v647
        %v669 = vpop.f32.mrf.mxu0
        %v670 = vadd.f32 0.0, %v669
        %671 = vmatmul.f32.gmra.mxu0 %v650
        %v672 = vpop.f32.mrf.mxu0
        %v673 = vadd.f32 0.0, %v672
        %674 = vdwg.mxu0
        %v675 = vmax.f32 %v467, 0.0
        %v676 = vmax.f32 %v470, 0.0
        %v677 = vmax.f32 %v496, 0.0
        %v678 = vmax.f32 %v499, 0.0
        %v679 = vmax.f32 %v525, 0.0
        %v680 = vmax.f32 %v528, 0.0
        %v681 = vmax.f32 %v554, 0.0
        %v682 = vmax.f32 %v557, 0.0
        %v683 = vmax.f32 %v583, 0.0
        %v684 = vmax.f32 %v586, 0.0
        %v685 = vmax.f32 %v612, 0.0
        %v686 = vmax.f32 %v615, 0.0
        %v687 = vmax.f32 %v641, 0.0
        %v688 = vmax.f32 %v644, 0.0
        %v689 = vmax.f32 %v670, 0.0
        %v690 = vmax.f32 %v673, 0.0
        %vm691 = vcmask 130048
        %v693 = vsel %vm691, %v238, 0
        %v696 = vsel %vm691, %v239, 0
        %v699 = vsel %vm691, %v240, 0
        %v702 = vsel %vm691, %v241, 0
        %704 = vmatpush.msra.mxu0 0.0
        %705 = vmatpush.msra.mxu0 0.0
        %706 = vmatpush.msra.mxu0 0.0
        %707 = vmatpush.msra.mxu0 0.0
        %708 = vmatpush.msra.mxu0 0.0
        %709 = vmatpush.msra.mxu0 0.0
        %710 = vmatpush.msra.mxu0 0.0
        %711 = vmatpush.msra.mxu0 0.0
        %712 = vmatpush.msra.mxu0 0.0
        %713 = vmatpush.msra.mxu0 0.0
        %714 = vmatpush.msra.mxu0 0.0
        %715 = vmatpush.msra.mxu0 0.0
        %716 = vmatpush.msra.mxu0 0.0
        %717 = vmatpush.msra.mxu0 0.0
        %718 = vmatpush.msra.mxu0 %v676
        %719 = vmatpush.msra.mxu0 %v675
        %720 = vmatmul.f32.gmra.mxu0 %v693
        %v721 = vpop.f32.mrf.mxu0
        %v722 = vadd.f32 0.0, %v721
        %723 = vmatmul.f32.gmra.mxu0 %v696
        %v724 = vpop.f32.mrf.mxu0
        %v725 = vadd.f32 0.0, %v724
        %726 = vmatmul.f32.gmra.mxu0 %v699
        %v727 = vpop.f32.mrf.mxu0
        %v728 = vadd.f32 0.0, %v727
        %729 = vmatmul.f32.gmra.mxu0 %v702
        %v730 = vpop.f32.mrf.mxu0
        %v731 = vadd.f32 0.0, %v730
        %732 = vdwg.mxu0
        %733 = vmatpush.msra.mxu0 0.0
        %734 = vmatpush.msra.mxu0 0.0
        %735 = vmatpush.msra.mxu0 0.0
        %736 = vmatpush.msra.mxu0 0.0
        %737 = vmatpush.msra.mxu0 0.0
        %738 = vmatpush.msra.mxu0 0.0
        %739 = vmatpush.msra.mxu0 0.0
        %740 = vmatpush.msra.mxu0 0.0
        %741 = vmatpush.msra.mxu0 0.0
        %742 = vmatpush.msra.mxu0 0.0
        %743 = vmatpush.msra.mxu0 0.0
        %744 = vmatpush.msra.mxu0 0.0
        %745 = vmatpush.msra.mxu0 0.0
        %746 = vmatpush.msra.mxu0 0.0
        %747 = vmatpush.msra.mxu0 %v678
        %748 = vmatpush.msra.mxu0 %v677
        %749 = vmatmul.f32.gmra.mxu0 %v693
        %v750 = vpop.f32.mrf.mxu0
        %v751 = vadd.f32 0.0, %v750
        %752 = vmatmul.f32.gmra.mxu0 %v696
        %v753 = vpop.f32.mrf.mxu0
        %v754 = vadd.f32 0.0, %v753
        %755 = vmatmul.f32.gmra.mxu0 %v699
        %v756 = vpop.f32.mrf.mxu0
        %v757 = vadd.f32 0.0, %v756
        %758 = vmatmul.f32.gmra.mxu0 %v702
        %v759 = vpop.f32.mrf.mxu0
        %v760 = vadd.f32 0.0, %v759
        %761 = vdwg.mxu0
        %762 = vmatpush.msra.mxu0 0.0
        %763 = vmatpush.msra.mxu0 0.0
        %764 = vmatpush.msra.mxu0 0.0
        %765 = vmatpush.msra.mxu0 0.0
        %766 = vmatpush.msra.mxu0 0.0
        %767 = vmatpush.msra.mxu0 0.0
        %768 = vmatpush.msra.mxu0 0.0
        %769 = vmatpush.msra.mxu0 0.0
        %770 = vmatpush.msra.mxu0 0.0
        %771 = vmatpush.msra.mxu0 0.0
        %772 = vmatpush.msra.mxu0 0.0
        %773 = vmatpush.msra.mxu0 0.0
        %774 = vmatpush.msra.mxu0 0.0
        %775 = vmatpush.msra.mxu0 0.0
        %776 = vmatpush.msra.mxu0 %v680
        %777 = vmatpush.msra.mxu0 %v679
        %778 = vmatmul.f32.gmra.mxu0 %v693
        %v779 = vpop.f32.mrf.mxu0
        %v780 = vadd.f32 0.0, %v779
        %781 = vmatmul.f32.gmra.mxu0 %v696
        %v782 = vpop.f32.mrf.mxu0
        %v783 = vadd.f32 0.0, %v782
        %784 = vmatmul.f32.gmra.mxu0 %v699
        %v785 = vpop.f32.mrf.mxu0
        %v786 = vadd.f32 0.0, %v785
        %787 = vmatmul.f32.gmra.mxu0 %v702
        %v788 = vpop.f32.mrf.mxu0
        %v789 = vadd.f32 0.0, %v788
        %790 = vdwg.mxu0
        %791 = vmatpush.msra.mxu0 0.0
        %792 = vmatpush.msra.mxu0 0.0
        %793 = vmatpush.msra.mxu0 0.0
        %794 = vmatpush.msra.mxu0 0.0
        %795 = vmatpush.msra.mxu0 0.0
        %796 = vmatpush.msra.mxu0 0.0
        %797 = vmatpush.msra.mxu0 0.0
        %798 = vmatpush.msra.mxu0 0.0
        %799 = vmatpush.msra.mxu0 0.0
        %800 = vmatpush.msra.mxu0 0.0
        %801 = vmatpush.msra.mxu0 0.0
        %802 = vmatpush.msra.mxu0 0.0
        %803 = vmatpush.msra.mxu0 0.0
        %804 = vmatpush.msra.mxu0 0.0
        %805 = vmatpush.msra.mxu0 %v682
        %806 = vmatpush.msra.mxu0 %v681
        %807 = vmatmul.f32.gmra.mxu0 %v693
        %v808 = vpop.f32.mrf.mxu0
        %v809 = vadd.f32 0.0, %v808
        %810 = vmatmul.f32.gmra.mxu0 %v696
        %v811 = vpop.f32.mrf.mxu0
        %v812 = vadd.f32 0.0, %v811
        %813 = vmatmul.f32.gmra.mxu0 %v699
        %v814 = vpop.f32.mrf.mxu0
        %v815 = vadd.f32 0.0, %v814
        %816 = vmatmul.f32.gmra.mxu0 %v702
        %v817 = vpop.f32.mrf.mxu0
        %v818 = vadd.f32 0.0, %v817
        %819 = vdwg.mxu0
        %820 = vmatpush.msra.mxu0 0.0
        %821 = vmatpush.msra.mxu0 0.0
        %822 = vmatpush.msra.mxu0 0.0
        %823 = vmatpush.msra.mxu0 0.0
        %824 = vmatpush.msra.mxu0 0.0
        %825 = vmatpush.msra.mxu0 0.0
        %826 = vmatpush.msra.mxu0 0.0
        %827 = vmatpush.msra.mxu0 0.0
        %828 = vmatpush.msra.mxu0 0.0
        %829 = vmatpush.msra.mxu0 0.0
        %830 = vmatpush.msra.mxu0 0.0
        %831 = vmatpush.msra.mxu0 0.0
        %832 = vmatpush.msra.mxu0 0.0
        %833 = vmatpush.msra.mxu0 0.0
        %834 = vmatpush.msra.mxu0 %v684
        %835 = vmatpush.msra.mxu0 %v683
        %836 = vmatmul.f32.gmra.mxu0 %v693
        %v837 = vpop.f32.mrf.mxu0
        %v838 = vadd.f32 0.0, %v837
        %839 = vmatmul.f32.gmra.mxu0 %v696
        %v840 = vpop.f32.mrf.mxu0
        %v841 = vadd.f32 0.0, %v840
        %842 = vmatmul.f32.gmra.mxu0 %v699
        %v843 = vpop.f32.mrf.mxu0
        %v844 = vadd.f32 0.0, %v843
        %845 = vmatmul.f32.gmra.mxu0 %v702
        %v846 = vpop.f32.mrf.mxu0
        %v847 = vadd.f32 0.0, %v846
        %848 = vdwg.mxu0
        %849 = vmatpush.msra.mxu0 0.0
        %850 = vmatpush.msra.mxu0 0.0
        %851 = vmatpush.msra.mxu0 0.0
        %852 = vmatpush.msra.mxu0 0.0
        %853 = vmatpush.msra.mxu0 0.0
        %854 = vmatpush.msra.mxu0 0.0
        %855 = vmatpush.msra.mxu0 0.0
        %856 = vmatpush.msra.mxu0 0.0
        %857 = vmatpush.msra.mxu0 0.0
        %858 = vmatpush.msra.mxu0 0.0
        %859 = vmatpush.msra.mxu0 0.0
        %860 = vmatpush.msra.mxu0 0.0
        %861 = vmatpush.msra.mxu0 0.0
        %862 = vmatpush.msra.mxu0 0.0
        %863 = vmatpush.msra.mxu0 %v686
        %864 = vmatpush.msra.mxu0 %v685
        %865 = vmatmul.f32.gmra.mxu0 %v693
        %v866 = vpop.f32.mrf.mxu0
        %v867 = vadd.f32 0.0, %v866
        %868 = vmatmul.f32.gmra.mxu0 %v696
        %v869 = vpop.f32.mrf.mxu0
        %v870 = vadd.f32 0.0, %v869
        %871 = vmatmul.f32.gmra.mxu0 %v699
        %v872 = vpop.f32.mrf.mxu0
        %v873 = vadd.f32 0.0, %v872
        %874 = vmatmul.f32.gmra.mxu0 %v702
        %v875 = vpop.f32.mrf.mxu0
        %v876 = vadd.f32 0.0, %v875
        %877 = vdwg.mxu0
        %878 = vmatpush.msra.mxu0 0.0
        %879 = vmatpush.msra.mxu0 0.0
        %880 = vmatpush.msra.mxu0 0.0
        %881 = vmatpush.msra.mxu0 0.0
        %882 = vmatpush.msra.mxu0 0.0
        %883 = vmatpush.msra.mxu0 0.0
        %884 = vmatpush.msra.mxu0 0.0
        %885 = vmatpush.msra.mxu0 0.0
        %886 = vmatpush.msra.mxu0 0.0
        %887 = vmatpush.msra.mxu0 0.0
        %888 = vmatpush.msra.mxu0 0.0
        %889 = vmatpush.msra.mxu0 0.0
        %890 = vmatpush.msra.mxu0 0.0
        %891 = vmatpush.msra.mxu0 0.0
        %892 = vmatpush.msra.mxu0 %v688
        %893 = vmatpush.msra.mxu0 %v687
        %894 = vmatmul.f32.gmra.mxu0 %v693
        %v895 = vpop.f32.mrf.mxu0
        %v896 = vadd.f32 0.0, %v895
        %897 = vmatmul.f32.gmra.mxu0 %v696
        %v898 = vpop.f32.mrf.mxu0
        %v899 = vadd.f32 0.0, %v898
        %900 = vmatmul.f32.gmra.mxu0 %v699
        %v901 = vpop.f32.mrf.mxu0
        %v902 = vadd.f32 0.0, %v901
        %903 = vmatmul.f32.gmra.mxu0 %v702
        %v904 = vpop.f32.mrf.mxu0
        %v905 = vadd.f32 0.0, %v904
        %906 = vdwg.mxu0
        %907 = vmatpush.msra.mxu0 0.0
        %908 = vmatpush.msra.mxu0 0.0
        %909 = vmatpush.msra.mxu0 0.0
        %910 = vmatpush.msra.mxu0 0.0
        %911 = vmatpush.msra.mxu0 0.0
        %912 = vmatpush.msra.mxu0 0.0
        %913 = vmatpush.msra.mxu0 0.0
        %914 = vmatpush.msra.mxu0 0.0
        %915 = vmatpush.msra.mxu0 0.0
        %916 = vmatpush.msra.mxu0 0.0
        %917 = vmatpush.msra.mxu0 0.0
        %918 = vmatpush.msra.mxu0 0.0
        %919 = vmatpush.msra.mxu0 0.0
        %920 = vmatpush.msra.mxu0 0.0
        %921 = vmatpush.msra.mxu0 %v690
        %922 = vmatpush.msra.mxu0 %v689
        %923 = vmatmul.f32.gmra.mxu0 %v693
        %v924 = vpop.f32.mrf.mxu0
        %v925 = vadd.f32 0.0, %v924
        %926 = vmatmul.f32.gmra.mxu0 %v696
        %v927 = vpop.f32.mrf.mxu0
        %v928 = vadd.f32 0.0, %v927
        %929 = vmatmul.f32.gmra.mxu0 %v699
        %v930 = vpop.f32.mrf.mxu0
        %v931 = vadd.f32 0.0, %v930
        %932 = vmatmul.f32.gmra.mxu0 %v702
        %v933 = vpop.f32.mrf.mxu0
        %v934 = vadd.f32 0.0, %v933
        %935 = vdwg.mxu0
        %v937 = vsel %vm691, %v722, 0
        %v940 = vsel %vm691, %v725, 0
        %v943 = vsel %vm691, %v728, 0
        %v946 = vsel %vm691, %v731, 0
        %v949 = vsel %vm691, %v242, 0
        %v952 = vsel %vm691, %v243, 0
        %v955 = vsel %vm691, %v244, 0
        %v958 = vsel %vm691, %v245, 0
        %960 = vmatpush.xpose.msra.mxu0 0.0
        %961 = vmatpush.xpose.msra.mxu0 0.0
        %962 = vmatpush.xpose.msra.mxu0 0.0
        %963 = vmatpush.xpose.msra.mxu0 0.0
        %964 = vmatpush.xpose.msra.mxu0 0.0
        %965 = vmatpush.xpose.msra.mxu0 0.0
        %966 = vmatpush.xpose.msra.mxu0 0.0
        %967 = vmatpush.xpose.msra.mxu0 0.0
        %968 = vmatpush.xpose.msra.mxu0 0.0
        %969 = vmatpush.xpose.msra.mxu0 0.0
        %970 = vmatpush.xpose.msra.mxu0 0.0
        %971 = vmatpush.xpose.msra.mxu0 0.0
        %972 = vmatpush.xpose.msra.mxu0 %v958
        %973 = vmatpush.xpose.msra.mxu0 %v955
        %974 = vmatpush.xpose.msra.mxu0 %v952
        %975 = vmatpush.xpose.msra.mxu0 %v949
        %976 = vmatmul.f32.gmra.mxu0 %v937
        %v977 = vpop.f32.mrf.mxu0
        %v978 = vadd.f32 0.0, %v977
        %979 = vmatmul.f32.gmra.mxu0 %v940
        %v980 = vpop.f32.mrf.mxu0
        %v981 = vadd.f32 0.0, %v980
        %982 = vmatmul.f32.gmra.mxu0 %v943
        %v983 = vpop.f32.mrf.mxu0
        %v984 = vadd.f32 0.0, %v983
        %985 = vmatmul.f32.gmra.mxu0 %v946
        %v986 = vpop.f32.mrf.mxu0
        %v987 = vadd.f32 0.0, %v986
        %988 = vdwg.mxu0
        %v990 = vsel %vm691, %v751, 0
        %v993 = vsel %vm691, %v754, 0
        %v996 = vsel %vm691, %v757, 0
        %v999 = vsel %vm691, %v760, 0
        %1001 = vmatpush.xpose.msra.mxu0 0.0
        %1002 = vmatpush.xpose.msra.mxu0 0.0
        %1003 = vmatpush.xpose.msra.mxu0 0.0
        %1004 = vmatpush.xpose.msra.mxu0 0.0
        %1005 = vmatpush.xpose.msra.mxu0 0.0
        %1006 = vmatpush.xpose.msra.mxu0 0.0
        %1007 = vmatpush.xpose.msra.mxu0 0.0
        %1008 = vmatpush.xpose.msra.mxu0 0.0
        %1009 = vmatpush.xpose.msra.mxu0 0.0
        %1010 = vmatpush.xpose.msra.mxu0 0.0
        %1011 = vmatpush.xpose.msra.mxu0 0.0
        %1012 = vmatpush.xpose.msra.mxu0 0.0
        %1013 = vmatpush.xpose.msra.mxu0 %v958
        %1014 = vmatpush.xpose.msra.mxu0 %v955
        %1015 = vmatpush.xpose.msra.mxu0 %v952
        %1016 = vmatpush.xpose.msra.mxu0 %v949
        %1017 = vmatmul.f32.gmra.mxu0 %v990
        %v1018 = vpop.f32.mrf.mxu0
        %v1019 = vadd.f32 0.0, %v1018
        %1020 = vmatmul.f32.gmra.mxu0 %v993
        %v1021 = vpop.f32.mrf.mxu0
        %v1022 = vadd.f32 0.0, %v1021
        %1023 = vmatmul.f32.gmra.mxu0 %v996
        %v1024 = vpop.f32.mrf.mxu0
        %v1025 = vadd.f32 0.0, %v1024
        %1026 = vmatmul.f32.gmra.mxu0 %v999
        %v1027 = vpop.f32.mrf.mxu0
        %v1028 = vadd.f32 0.0, %v1027
        %1029 = vdwg.mxu0
        %v1031 = vsel %vm691, %v780, 0
        %v1034 = vsel %vm691, %v783, 0
        %v1037 = vsel %vm691, %v786, 0
        %v1040 = vsel %vm691, %v789, 0
        %1042 = vmatpush.xpose.msra.mxu0 0.0
        %1043 = vmatpush.xpose.msra.mxu0 0.0
        %1044 = vmatpush.xpose.msra.mxu0 0.0
        %1045 = vmatpush.xpose.msra.mxu0 0.0
        %1046 = vmatpush.xpose.msra.mxu0 0.0
        %1047 = vmatpush.xpose.msra.mxu0 0.0
        %1048 = vmatpush.xpose.msra.mxu0 0.0
        %1049 = vmatpush.xpose.msra.mxu0 0.0
        %1050 = vmatpush.xpose.msra.mxu0 0.0
        %1051 = vmatpush.xpose.msra.mxu0 0.0
        %1052 = vmatpush.xpose.msra.mxu0 0.0
        %1053 = vmatpush.xpose.msra.mxu0 0.0
        %1054 = vmatpush.xpose.msra.mxu0 %v958
        %1055 = vmatpush.xpose.msra.mxu0 %v955
        %1056 = vmatpush.xpose.msra.mxu0 %v952
        %1057 = vmatpush.xpose.msra.mxu0 %v949
        %1058 = vmatmul.f32.gmra.mxu0 %v1031
        %v1059 = vpop.f32.mrf.mxu0
        %v1060 = vadd.f32 0.0, %v1059
        %1061 = vmatmul.f32.gmra.mxu0 %v1034
        %v1062 = vpop.f32.mrf.mxu0
        %v1063 = vadd.f32 0.0, %v1062
        %1064 = vmatmul.f32.gmra.mxu0 %v1037
        %v1065 = vpop.f32.mrf.mxu0
        %v1066 = vadd.f32 0.0, %v1065
        %1067 = vmatmul.f32.gmra.mxu0 %v1040
        %v1068 = vpop.f32.mrf.mxu0
        %v1069 = vadd.f32 0.0, %v1068
        %1070 = vdwg.mxu0
        %v1072 = vsel %vm691, %v809, 0
        %v1075 = vsel %vm691, %v812, 0
        %v1078 = vsel %vm691, %v815, 0
        %v1081 = vsel %vm691, %v818, 0
        %1083 = vmatpush.xpose.msra.mxu0 0.0
        %1084 = vmatpush.xpose.msra.mxu0 0.0
        %1085 = vmatpush.xpose.msra.mxu0 0.0
        %1086 = vmatpush.xpose.msra.mxu0 0.0
        %1087 = vmatpush.xpose.msra.mxu0 0.0
        %1088 = vmatpush.xpose.msra.mxu0 0.0
        %1089 = vmatpush.xpose.msra.mxu0 0.0
        %1090 = vmatpush.xpose.msra.mxu0 0.0
        %1091 = vmatpush.xpose.msra.mxu0 0.0
        %1092 = vmatpush.xpose.msra.mxu0 0.0
        %1093 = vmatpush.xpose.msra.mxu0 0.0
        %1094 = vmatpush.xpose.msra.mxu0 0.0
        %1095 = vmatpush.xpose.msra.mxu0 %v958
        %1096 = vmatpush.xpose.msra.mxu0 %v955
        %1097 = vmatpush.xpose.msra.mxu0 %v952
        %1098 = vmatpush.xpose.msra.mxu0 %v949
        %1099 = vmatmul.f32.gmra.mxu0 %v1072
        %v1100 = vpop.f32.mrf.mxu0
        %v1101 = vadd.f32 0.0, %v1100
        %1102 = vmatmul.f32.gmra.mxu0 %v1075
        %v1103 = vpop.f32.mrf.mxu0
        %v1104 = vadd.f32 0.0, %v1103
        %1105 = vmatmul.f32.gmra.mxu0 %v1078
        %v1106 = vpop.f32.mrf.mxu0
        %v1107 = vadd.f32 0.0, %v1106
        %1108 = vmatmul.f32.gmra.mxu0 %v1081
        %v1109 = vpop.f32.mrf.mxu0
        %v1110 = vadd.f32 0.0, %v1109
        %1111 = vdwg.mxu0
        %v1113 = vsel %vm691, %v838, 0
        %v1116 = vsel %vm691, %v841, 0
        %v1119 = vsel %vm691, %v844, 0
        %v1122 = vsel %vm691, %v847, 0
        %1124 = vmatpush.xpose.msra.mxu0 0.0
        %1125 = vmatpush.xpose.msra.mxu0 0.0
        %1126 = vmatpush.xpose.msra.mxu0 0.0
        %1127 = vmatpush.xpose.msra.mxu0 0.0
        %1128 = vmatpush.xpose.msra.mxu0 0.0
        %1129 = vmatpush.xpose.msra.mxu0 0.0
        %1130 = vmatpush.xpose.msra.mxu0 0.0
        %1131 = vmatpush.xpose.msra.mxu0 0.0
        %1132 = vmatpush.xpose.msra.mxu0 0.0
        %1133 = vmatpush.xpose.msra.mxu0 0.0
        %1134 = vmatpush.xpose.msra.mxu0 0.0
        %1135 = vmatpush.xpose.msra.mxu0 0.0
        %1136 = vmatpush.xpose.msra.mxu0 %v958
        %1137 = vmatpush.xpose.msra.mxu0 %v955
        %1138 = vmatpush.xpose.msra.mxu0 %v952
        %1139 = vmatpush.xpose.msra.mxu0 %v949
        %1140 = vmatmul.f32.gmra.mxu0 %v1113
        %v1141 = vpop.f32.mrf.mxu0
        %v1142 = vadd.f32 0.0, %v1141
        %1143 = vmatmul.f32.gmra.mxu0 %v1116
        %v1144 = vpop.f32.mrf.mxu0
        %v1145 = vadd.f32 0.0, %v1144
        %1146 = vmatmul.f32.gmra.mxu0 %v1119
        %v1147 = vpop.f32.mrf.mxu0
        %v1148 = vadd.f32 0.0, %v1147
        %1149 = vmatmul.f32.gmra.mxu0 %v1122
        %v1150 = vpop.f32.mrf.mxu0
        %v1151 = vadd.f32 0.0, %v1150
        %1152 = vdwg.mxu0
        %v1154 = vsel %vm691, %v867, 0
        %v1157 = vsel %vm691, %v870, 0
        %v1160 = vsel %vm691, %v873, 0
        %v1163 = vsel %vm691, %v876, 0
        %1165 = vmatpush.xpose.msra.mxu0 0.0
        %1166 = vmatpush.xpose.msra.mxu0 0.0
        %1167 = vmatpush.xpose.msra.mxu0 0.0
        %1168 = vmatpush.xpose.msra.mxu0 0.0
        %1169 = vmatpush.xpose.msra.mxu0 0.0
        %1170 = vmatpush.xpose.msra.mxu0 0.0
        %1171 = vmatpush.xpose.msra.mxu0 0.0
        %1172 = vmatpush.xpose.msra.mxu0 0.0
        %1173 = vmatpush.xpose.msra.mxu0 0.0
        %1174 = vmatpush.xpose.msra.mxu0 0.0
        %1175 = vmatpush.xpose.msra.mxu0 0.0
        %1176 = vmatpush.xpose.msra.mxu0 0.0
        %1177 = vmatpush.xpose.msra.mxu0 %v958
        %1178 = vmatpush.xpose.msra.mxu0 %v955
        %1179 = vmatpush.xpose.msra.mxu0 %v952
        %1180 = vmatpush.xpose.msra.mxu0 %v949
        %1181 = vmatmul.f32.gmra.mxu0 %v1154
        %v1182 = vpop.f32.mrf.mxu0
        %v1183 = vadd.f32 0.0, %v1182
        %1184 = vmatmul.f32.gmra.mxu0 %v1157
        %v1185 = vpop.f32.mrf.mxu0
        %v1186 = vadd.f32 0.0, %v1185
        %1187 = vmatmul.f32.gmra.mxu0 %v1160
        %v1188 = vpop.f32.mrf.mxu0
        %v1189 = vadd.f32 0.0, %v1188
        %1190 = vmatmul.f32.gmra.mxu0 %v1163
        %v1191 = vpop.f32.mrf.mxu0
        %v1192 = vadd.f32 0.0, %v1191
        %1193 = vdwg.mxu0
        %v1195 = vsel %vm691, %v896, 0
        %v1198 = vsel %vm691, %v899, 0
        %v1201 = vsel %vm691, %v902, 0
        %v1204 = vsel %vm691, %v905, 0
        %1206 = vmatpush.xpose.msra.mxu0 0.0
        %1207 = vmatpush.xpose.msra.mxu0 0.0
        %1208 = vmatpush.xpose.msra.mxu0 0.0
        %1209 = vmatpush.xpose.msra.mxu0 0.0
        %1210 = vmatpush.xpose.msra.mxu0 0.0
        %1211 = vmatpush.xpose.msra.mxu0 0.0
        %1212 = vmatpush.xpose.msra.mxu0 0.0
        %1213 = vmatpush.xpose.msra.mxu0 0.0
        %1214 = vmatpush.xpose.msra.mxu0 0.0
        %1215 = vmatpush.xpose.msra.mxu0 0.0
        %1216 = vmatpush.xpose.msra.mxu0 0.0
        %1217 = vmatpush.xpose.msra.mxu0 0.0
        %1218 = vmatpush.xpose.msra.mxu0 %v958
        %1219 = vmatpush.xpose.msra.mxu0 %v955
        %1220 = vmatpush.xpose.msra.mxu0 %v952
        %1221 = vmatpush.xpose.msra.mxu0 %v949
        %1222 = vmatmul.f32.gmra.mxu0 %v1195
        %v1223 = vpop.f32.mrf.mxu0
        %v1224 = vadd.f32 0.0, %v1223
        %1225 = vmatmul.f32.gmra.mxu0 %v1198
        %v1226 = vpop.f32.mrf.mxu0
        %v1227 = vadd.f32 0.0, %v1226
        %1228 = vmatmul.f32.gmra.mxu0 %v1201
        %v1229 = vpop.f32.mrf.mxu0
        %v1230 = vadd.f32 0.0, %v1229
        %1231 = vmatmul.f32.gmra.mxu0 %v1204
        %v1232 = vpop.f32.mrf.mxu0
        %v1233 = vadd.f32 0.0, %v1232
        %1234 = vdwg.mxu0
        %v1236 = vsel %vm691, %v925, 0
        %v1239 = vsel %vm691, %v928, 0
        %v1242 = vsel %vm691, %v931, 0
        %v1245 = vsel %vm691, %v934, 0
        %1247 = vmatpush.xpose.msra.mxu0 0.0
        %1248 = vmatpush.xpose.msra.mxu0 0.0
        %1249 = vmatpush.xpose.msra.mxu0 0.0
        %1250 = vmatpush.xpose.msra.mxu0 0.0
        %1251 = vmatpush.xpose.msra.mxu0 0.0
        %1252 = vmatpush.xpose.msra.mxu0 0.0
        %1253 = vmatpush.xpose.msra.mxu0 0.0
        %1254 = vmatpush.xpose.msra.mxu0 0.0
        %1255 = vmatpush.xpose.msra.mxu0 0.0
        %1256 = vmatpush.xpose.msra.mxu0 0.0
        %1257 = vmatpush.xpose.msra.mxu0 0.0
        %1258 = vmatpush.xpose.msra.mxu0 0.0
        %1259 = vmatpush.xpose.msra.mxu0 %v958
        %1260 = vmatpush.xpose.msra.mxu0 %v955
        %1261 = vmatpush.xpose.msra.mxu0 %v952
        %1262 = vmatpush.xpose.msra.mxu0 %v949
        %1263 = vmatmul.f32.gmra.mxu0 %v1236
        %v1264 = vpop.f32.mrf.mxu0
        %v1265 = vadd.f32 0.0, %v1264
        %1266 = vmatmul.f32.gmra.mxu0 %v1239
        %v1267 = vpop.f32.mrf.mxu0
        %v1268 = vadd.f32 0.0, %v1267
        %1269 = vmatmul.f32.gmra.mxu0 %v1242
        %v1270 = vpop.f32.mrf.mxu0
        %v1271 = vadd.f32 0.0, %v1270
        %1272 = vmatmul.f32.gmra.mxu0 %v1245
        %v1273 = vpop.f32.mrf.mxu0
        %v1274 = vadd.f32 0.0, %v1273
        %1275 = vdwg.mxu0
        %v1276 = vmax.f32 %v978, 0.0
        %v1277 = vmax.f32 %v981, 0.0
        %v1278 = vmax.f32 %v984, 0.0
        %v1279 = vmax.f32 %v987, 0.0
        %v1280 = vmax.f32 %v1019, 0.0
        %v1281 = vmax.f32 %v1022, 0.0
        %v1282 = vmax.f32 %v1025, 0.0
        %v1283 = vmax.f32 %v1028, 0.0
        %v1284 = vmax.f32 %v1060, 0.0
        %v1285 = vmax.f32 %v1063, 0.0
        %v1286 = vmax.f32 %v1066, 0.0
        %v1287 = vmax.f32 %v1069, 0.0
        %v1288 = vmax.f32 %v1101, 0.0
        %v1289 = vmax.f32 %v1104, 0.0
        %v1290 = vmax.f32 %v1107, 0.0
        %v1291 = vmax.f32 %v1110, 0.0
        %v1292 = vmax.f32 %v1142, 0.0
        %v1293 = vmax.f32 %v1145, 0.0
        %v1294 = vmax.f32 %v1148, 0.0
        %v1295 = vmax.f32 %v1151, 0.0
        %v1296 = vmax.f32 %v1183, 0.0
        %v1297 = vmax.f32 %v1186, 0.0
        %v1298 = vmax.f32 %v1189, 0.0
        %v1299 = vmax.f32 %v1192, 0.0
        %v1300 = vmax.f32 %v1224, 0.0
        %v1301 = vmax.f32 %v1227, 0.0
        %v1302 = vmax.f32 %v1230, 0.0
        %v1303 = vmax.f32 %v1233, 0.0
        %v1304 = vmax.f32 %v1265, 0.0
        %v1305 = vmax.f32 %v1268, 0.0
        %v1306 = vmax.f32 %v1271, 0.0
        %v1307 = vmax.f32 %v1274, 0.0
        %vm1308 = vcmask 261120
        %1309 = vst.msk [vmem:[%s218] sm:$0xff] %vm1308, %v1276
        %1310 = vst.msk [vmem:[%s218 + $0x8] sm:$0xff] %vm1308, %v1277
        %1311 = vst.msk [vmem:[%s218 + $0x10] sm:$0xff] %vm1308, %v1278
        %1312 = vst.msk [vmem:[%s218 + $0x18] sm:$0xff] %vm1308, %v1279
        %1313 = vst.msk [vmem:[%s218 + $0x20] sm:$0xff] %vm1308, %v1280
        %1314 = vst.msk [vmem:[%s218 + $0x28] sm:$0xff] %vm1308, %v1281
        %1315 = vst.msk [vmem:[%s218 + $0x30] sm:$0xff] %vm1308, %v1282
        %1316 = vst.msk [vmem:[%s218 + $0x38] sm:$0xff] %vm1308, %v1283
        %1317 = vst.msk [vmem:[%s218 + $0x40] sm:$0xff] %vm1308, %v1284
        %1318 = vst.msk [vmem:[%s218 + $0x48] sm:$0xff] %vm1308, %v1285
        %1319 = vst.msk [vmem:[%s218 + $0x50] sm:$0xff] %vm1308, %v1286
        %1320 = vst.msk [vmem:[%s218 + $0x58] sm:$0xff] %vm1308, %v1287
        %1321 = vst.msk [vmem:[%s218 + $0x60] sm:$0xff] %vm1308, %v1288
        %1322 = vst.msk [vmem:[%s218 + $0x68] sm:$0xff] %vm1308, %v1289
        %1323 = vst.msk [vmem:[%s218 + $0x70] sm:$0xff] %vm1308, %v1290
        %1324 = vst.msk [vmem:[%s218 + $0x78] sm:$0xff] %vm1308, %v1291
        %1325 = vst.msk [vmem:[%s218 + $0x80] sm:$0xff] %vm1308, %v1292
        %1326 = vst.msk [vmem:[%s218 + $0x88] sm:$0xff] %vm1308, %v1293
        %1327 = vst.msk [vmem:[%s218 + $0x90] sm:$0xff] %vm1308, %v1294
        %1328 = vst.msk [vmem:[%s218 + $0x98] sm:$0xff] %vm1308, %v1295
        %1329 = vst.msk [vmem:[%s218 + $0xa0] sm:$0xff] %vm1308, %v1296
        %1330 = vst.msk [vmem:[%s218 + $0xa8] sm:$0xff] %vm1308, %v1297
        %1331 = vst.msk [vmem:[%s218 + $0xb0] sm:$0xff] %vm1308, %v1298
        %1332 = vst.msk [vmem:[%s218 + $0xb8] sm:$0xff] %vm1308, %v1299
        %1333 = vst.msk [vmem:[%s218 + $0xc0] sm:$0xff] %vm1308, %v1300
        %1334 = vst.msk [vmem:[%s218 + $0xc8] sm:$0xff] %vm1308, %v1301
        %1335 = vst.msk [vmem:[%s218 + $0xd0] sm:$0xff] %vm1308, %v1302
        %1336 = vst.msk [vmem:[%s218 + $0xd8] sm:$0xff] %vm1308, %v1303
        %1337 = vst.msk [vmem:[%s218 + $0xe0] sm:$0xff] %vm1308, %v1304
        %1338 = vst.msk [vmem:[%s218 + $0xe8] sm:$0xff] %vm1308, %v1305
        %1339 = vst.msk [vmem:[%s218 + $0xf0] sm:$0xff] %vm1308, %v1306
        %1340 = vst.msk [vmem:[%s218 + $0xf8] sm:$0xff] %vm1308, %v1307
        %s1341 = sand.u32 %s137, 1
        %s1342 = scalar_lea.sflag [#allocation3], %s1341
        %s1343 = sand.u32 %s137, 1
        %s1344 = smul.addr %s1343, 256
        %s1345 = scalar_lea.vmem [#allocation2], %s1344
        // Predicated region
        $region41: #{latent_decoder_forward.3} parent=39 // pred_check
          %p1346 = pneg %p147
        $region42: #{latent_decoder_forward.3} parent=39 // pred_check_branch
          %1348 = sbr.rel (%p1346) target = $region44
        $region43: #{latent_decoder_forward.3} parent=39 // pred_region
          %s1349 = smul.u32 8, %s19
          %1351 = vsyncadd %s1342, 0
          %s1352 = smul.addr %s1349, 4
          %s1353 = smul.addr %s1352, 8
          %s1354 = scalar_lea.hbm %s5, %s1353
          %s1355 = sshll.u32 %s1345, 4
          %s1356 = int_to_ptr.vmem [resolvable:$true] %s1355
          %s1357 = sshll.u32 %s1354, 4
          %s1358 = int_to_ptr.hbm [resolvable:$true] %s1357
          %1363 = dma.vmem_to_hbm [thread:$0]  %s1356, 4096, %s1358, %s1342, 128, 128, 8
        $region44: #{latent_decoder_forward.3} parent=39 // pred_fallthru
          _
      $region40: #{latent_decoder_forward.3} parent=5 // pred_fallthru
        _
      %p1364 = scmp.le.s32.totalorder 2, %s14
      // Predicated region
      $region45: #{latent_decoder_forward.3} parent=5 // pred_check
        %p1365 = pneg %p1364
      $region46: #{latent_decoder_forward.3} parent=5 // pred_check_branch
        %1367 = sbr.rel (%p1365) target = $region48
      $region47: #{latent_decoder_forward.3} parent=5 // pred_region
        %s1368 = ssub.s32 %s14, 2
        // Predicated region
        $region49: #{latent_decoder_forward.3} parent=47 // pred_check
          %p1369 = pneg %p153
        $region50: #{latent_decoder_forward.3} parent=47 // pred_check_branch
          %1371 = sbr.rel (%p1369) target = $region52
        $region51: #{latent_decoder_forward.3} parent=47 // pred_region
          %s1372 = sand.u32 %s138, 1
          %s1373 = scalar_lea.sflag [#allocation3], %s1372
          %s1374 = sand.u32 %s138, 1
          %s1375 = smul.addr %s1374, 256
          %s1376 = scalar_lea.vmem [#allocation2], %s1375
          %1378 = dma.done %s1373, 4096
        $region52: #{latent_decoder_forward.3} parent=47 // pred_fallthru
          _
      $region48: #{latent_decoder_forward.3} parent=5 // pred_fallthru
        _
    $region6: #{latent_decoder_forward.3} parent=1 // loop_footer
      %s18 = sadd.s32 1, %s14
    $region7: #{latent_decoder_forward.3} parent=1 // loop_footer_branch
      %13 = sbr.rel target = $region3
    $region8: #{latent_decoder_forward.3} parent=1 // loop_exit
      _
    %1379 = vsyncpa [#allocation3], 1
    %s1380 = scalar_lea.sflag [#allocation3], 1
    %1381 = vsyncpa %s1380, 1

// kernel: latent_decoder_forward.2
$region0: #{latent_decoder_forward.2}
  #allocation0 [shape = 'u32[]', space=smem, size = 0x4, offset = 0x4, fixed_abs, tag = 'smem constant byte address 0x4 - core index']
  #allocation1 [shape = 'u32[72,128]{1,0:T(1,128)}', space=vmem, size = 0x9000, scoped, tag = 'internal scratch']
  #allocation2 [shape = 'f32[2,10,10,4]{3,2,1,0:T(8,128)}', space=vmem, size = 0x28000, scoped, tag = 'scratch operand']
  #allocation3 [shape = 'f32[2,10,10,8]{3,2,1,0:T(8,128)}', space=vmem, size = 0x28000, scoped, tag = 'scratch operand']
  %s0 = inlined_call_operand.vmem [shape: f32[2,8,8,4], index: 0, kind: input, shape index: {}]
  %s1 = inlined_call_operand.vmem [shape: bf16[9,4,8], index: 1, kind: input, shape index: {}]
  %s2 = inlined_call_operand.vmem [shape: f32[1,8], index: 2, kind: input, shape index: {}]
  %s3 = inlined_call_operand.vmem [shape: f32[1,8], index: 3, kind: input, shape index: {}]
  %s4 = inlined_call_operand.vmem [shape: bf16[9,8,8], index: 4, kind: input, shape index: {}]
  %s5 = inlined_call_operand.vmem [shape: f32[1,8], index: 5, kind: input, shape index: {}]
  %s6 = inlined_call_operand.vmem [shape: f32[1,8], index: 6, kind: input, shape index: {}]
  %s7 = inlined_call_operand.vmem [shape: f32[2,8,64], index: 7, kind: output, shape index: {}]
  %s8 = sld [smem:[#allocation0]]
  $region38: #{latent_decoder_forward.2} parent=0
    _
  %s10 = ssub.s32 1, %s8
  %s11 = scalar_select 0, %s10, %s8
  // Predicated region
  $region2: #{latent_decoder_forward.2} parent=0 // pred_check
    _
  $region3: #{latent_decoder_forward.2} parent=0 // pred_check_branch
    %13 = sbr.rel (0) target = $region5
  $region4: #{latent_decoder_forward.2} parent=0 // pred_region
    _
  $region5: #{latent_decoder_forward.2} parent=0 // pred_fallthru
    _
  // Predicated region
  $region6: #{latent_decoder_forward.2} parent=0 // pred_check
    _
  $region7: #{latent_decoder_forward.2} parent=0 // pred_check_branch
    %15 = sbr.rel (0) target = $region9
  $region8: #{latent_decoder_forward.2} parent=0 // pred_region
    _
  $region9: #{latent_decoder_forward.2} parent=0 // pred_fallthru
    _
  // Predicated region
  $region10: #{latent_decoder_forward.2} parent=0 // pred_check
    _
  $region11: #{latent_decoder_forward.2} parent=0 // pred_check_branch
    %17 = sbr.rel (0) target = $region13
  $region12: #{latent_decoder_forward.2} parent=0 // pred_region
    _
  $region13: #{latent_decoder_forward.2} parent=0 // pred_fallthru
    _
  // Predicated region
  $region14: #{latent_decoder_forward.2} parent=0 // pred_check
    _
  $region15: #{latent_decoder_forward.2} parent=0 // pred_check_branch
    %19 = sbr.rel (0) target = $region17
  $region16: #{latent_decoder_forward.2} parent=0 // pred_region
    _
  $region17: #{latent_decoder_forward.2} parent=0 // pred_fallthru
    _
  // Predicated region
  $region18: #{latent_decoder_forward.2} parent=0 // pred_check
    _
  $region19: #{latent_decoder_forward.2} parent=0 // pred_check_branch
    %21 = sbr.rel (0) target = $region21
  $region20: #{latent_decoder_forward.2} parent=0 // pred_region
    _
  $region21: #{latent_decoder_forward.2} parent=0 // pred_fallthru
    _
  // Predicated region
  $region22: #{latent_decoder_forward.2} parent=0 // pred_check
    _
  $region23: #{latent_decoder_forward.2} parent=0 // pred_check_branch
    %23 = sbr.rel (0) target = $region25
  $region24: #{latent_decoder_forward.2} parent=0 // pred_region
    _
  $region25: #{latent_decoder_forward.2} parent=0 // pred_fallthru
    _
  // Predicated region
  $region26: #{latent_decoder_forward.2} parent=0 // pred_check
    _
  $region27: #{latent_decoder_forward.2} parent=0 // pred_check_branch
    %25 = sbr.rel (0) target = $region29
  $region28: #{latent_decoder_forward.2} parent=0 // pred_region
    _
  $region29: #{latent_decoder_forward.2} parent=0 // pred_fallthru
    _
  %vm27 = vcmask 31744
  %28 = vst.msk [vmem:[#allocation2] sm:$0xff] %vm27, 0.0
  %vm29 = vcmask 25600
  %30 = vst.msk [vmem:[#allocation2 + $0x8] sm:$0x3] %vm29, 0.0
  %31 = vst.msk [vmem:[#allocation2 + $0x10] sm:$0xff] %vm27, 0.0
  %32 = vst.msk [vmem:[#allocation2 + $0x18] sm:$0x3] %vm29, 0.0
  %33 = vst.msk [vmem:[#allocation2 + $0x20] sm:$0xff] %vm27, 0.0
  %34 = vst.msk [vmem:[#allocation2 + $0x28] sm:$0x3] %vm29, 0.0
  %35 = vst.msk [vmem:[#allocation2 + $0x30] sm:$0xff] %vm27, 0.0
  %36 = vst.msk [vmem:[#allocation2 + $0x38] sm:$0x3] %vm29, 0.0
  %37 = vst.msk [vmem:[#allocation2 + $0x40] sm:$0xff] %vm27, 0.0
  %38 = vst.msk [vmem:[#allocation2 + $0x48] sm:$0x3] %vm29, 0.0
  %39 = vst.msk [vmem:[#allocation2 + $0x50] sm:$0xff] %vm27, 0.0
  %40 = vst.msk [vmem:[#allocation2 + $0x58] sm:$0x3] %vm29, 0.0
  %41 = vst.msk [vmem:[#allocation2 + $0x60] sm:$0xff] %vm27, 0.0
  %42 = vst.msk [vmem:[#allocation2 + $0x68] sm:$0x3] %vm29, 0.0
  %43 = vst.msk [vmem:[#allocation2 + $0x70] sm:$0xff] %vm27, 0.0
  %44 = vst.msk [vmem:[#allocation2 + $0x78] sm:$0x3] %vm29, 0.0
  %45 = vst.msk [vmem:[#allocation2 + $0x80] sm:$0xff] %vm27, 0.0
  %46 = vst.msk [vmem:[#allocation2 + $0x88] sm:$0x3] %vm29, 0.0
  %47 = vst.msk [vmem:[#allocation2 + $0x90] sm:$0xff] %vm27, 0.0
  %48 = vst.msk [vmem:[#allocation2 + $0x98] sm:$0x3] %vm29, 0.0
  %49 = vst.msk [vmem:[#allocation2 + $0xa0] sm:$0xff] %vm27, 0.0
  %50 = vst.msk [vmem:[#allocation2 + $0xa8] sm:$0x3] %vm29, 0.0
  %51 = vst.msk [vmem:[#allocation2 + $0xb0] sm:$0xff] %vm27, 0.0
  %52 = vst.msk [vmem:[#allocation2 + $0xb8] sm:$0x3] %vm29, 0.0
  %53 = vst.msk [vmem:[#allocation2 + $0xc0] sm:$0xff] %vm27, 0.0
  %54 = vst.msk [vmem:[#allocation2 + $0xc8] sm:$0x3] %vm29, 0.0
  %55 = vst.msk [vmem:[#allocation2 + $0xd0] sm:$0xff] %vm27, 0.0
  %56 = vst.msk [vmem:[#allocation2 + $0xd8] sm:$0x3] %vm29, 0.0
  %57 = vst.msk [vmem:[#allocation2 + $0xe0] sm:$0xff] %vm27, 0.0
  %58 = vst.msk [vmem:[#allocation2 + $0xe8] sm:$0x3] %vm29, 0.0
  %59 = vst.msk [vmem:[#allocation2 + $0xf0] sm:$0xff] %vm27, 0.0
  %60 = vst.msk [vmem:[#allocation2 + $0xf8] sm:$0x3] %vm29, 0.0
  %61 = vst.msk [vmem:[#allocation2 + $0x100] sm:$0xff] %vm27, 0.0
  %62 = vst.msk [vmem:[#allocation2 + $0x108] sm:$0x3] %vm29, 0.0
  %63 = vst.msk [vmem:[#allocation2 + $0x110] sm:$0xff] %vm27, 0.0
  %64 = vst.msk [vmem:[#allocation2 + $0x118] sm:$0x3] %vm29, 0.0
  %65 = vst.msk [vmem:[#allocation2 + $0x120] sm:$0xff] %vm27, 0.0
  %66 = vst.msk [vmem:[#allocation2 + $0x128] sm:$0x3] %vm29, 0.0
  %67 = vst.msk [vmem:[#allocation2 + $0x130] sm:$0xff] %vm27, 0.0
  %68 = vst.msk [vmem:[#allocation2 + $0x138] sm:$0x3] %vm29, 0.0
  %v69 = vld [vmem:[%s0] sm:$0xff]
  %v70 = vld [vmem:[%s0 + $0x8] sm:$0xff]
  %v71 = vld [vmem:[%s0 + $0x10] sm:$0xff]
  %v72 = vld [vmem:[%s0 + $0x18] sm:$0xff]
  %v73 = vld [vmem:[%s0 + $0x20] sm:$0xff]
  %v74 = vld [vmem:[%s0 + $0x28] sm:$0xff]
  %v75 = vld [vmem:[%s0 + $0x30] sm:$0xff]
  %v76 = vld [vmem:[%s0 + $0x38] sm:$0xff]
  %v77 = vld [vmem:[%s0 + $0x40] sm:$0xff]
  %v78 = vld [vmem:[%s0 + $0x48] sm:$0xff]
  %v79 = vld [vmem:[%s0 + $0x50] sm:$0xff]
  %v80 = vld [vmem:[%s0 + $0x58] sm:$0xff]
  %v81 = vld [vmem:[%s0 + $0x60] sm:$0xff]
  %v82 = vld [vmem:[%s0 + $0x68] sm:$0xff]
  %v83 = vld [vmem:[%s0 + $0x70] sm:$0xff]
  %v84 = vld [vmem:[%s0 + $0x78] sm:$0xff]
  %s85 = scalar_lea.vmem [#allocation2], 16
  %86 = vst.msk [vmem:[%s85 + $0x1] sm:$0xff] %vm27, %v69
  %87 = vst.msk [vmem:[%s85 + $0x11] sm:$0xff] %vm27, %v70
  %88 = vst.msk [vmem:[%s85 + $0x21] sm:$0xff] %vm27, %v71
  %89 = vst.msk [vmem:[%s85 + $0x31] sm:$0xff] %vm27, %v72
  %90 = vst.msk [vmem:[%s85 + $0x41] sm:$0xff] %vm27, %v73
  %91 = vst.msk [vmem:[%s85 + $0x51] sm:$0xff] %vm27, %v74
  %92 = vst.msk [vmem:[%s85 + $0x61] sm:$0xff] %vm27, %v75
  %93 = vst.msk [vmem:[%s85 + $0x71] sm:$0xff] %vm27, %v76
  %94 = vst.msk [vmem:[%s85 + $0xa1] sm:$0xff] %vm27, %v77
  %95 = vst.msk [vmem:[%s85 + $0xb1] sm:$0xff] %vm27, %v78
  %96 = vst.msk [vmem:[%s85 + $0xc1] sm:$0xff] %vm27, %v79
  %97 = vst.msk [vmem:[%s85 + $0xd1] sm:$0xff] %vm27, %v80
  %98 = vst.msk [vmem:[%s85 + $0xe1] sm:$0xff] %vm27, %v81
  %99 = vst.msk [vmem:[%s85 + $0xf1] sm:$0xff] %vm27, %v82
  %100 = vst.msk [vmem:[%s85 + $0x101] sm:$0xff] %vm27, %v83
  %101 = vst.msk [vmem:[%s85 + $0x111] sm:$0xff] %vm27, %v84
  %v102 = vld [vmem:[#allocation2] sm:$0xff]
  %v103 = vld [vmem:[#allocation2 + $0x10] sm:$0xff]
  %v104 = vld [vmem:[#allocation2 + $0x20] sm:$0xff]
  %v105 = vld [vmem:[#allocation2 + $0x30] sm:$0xff]
  %v106 = vld [vmem:[#allocation2 + $0x40] sm:$0xff]
  %v107 = vld [vmem:[#allocation2 + $0x50] sm:$0xff]
  %v108 = vld [vmem:[#allocation2 + $0x60] sm:$0xff]
  %v109 = vld [vmem:[#allocation2 + $0x70] sm:$0xff]
  %v110 = vld [vmem:[#allocation2 + $0xa0] sm:$0xff]
  %v111 = vld [vmem:[#allocation2 + $0xb0] sm:$0xff]
  %v112 = vld [vmem:[#allocation2 + $0xc0] sm:$0xff]
  %v113 = vld [vmem:[#allocation2 + $0xd0] sm:$0xff]
  %v114 = vld [vmem:[#allocation2 + $0xe0] sm:$0xff]
  %v115 = vld [vmem:[#allocation2 + $0xf0] sm:$0xff]
  %v116 = vld [vmem:[#allocation2 + $0x100] sm:$0xff]
  %v117 = vld [vmem:[#allocation2 + $0x110] sm:$0xff]
  %v118 = vpack.c.bf16 %v103, %v102
  %v119 = vpack.c.bf16 %v105, %v104
  %v120 = vpack.c.bf16 %v107, %v106
  %v121 = vpack.c.bf16 %v109, %v108
  %v122 = vpack.c.bf16 %v111, %v110
  %v123 = vpack.c.bf16 %v113, %v112
  %v124 = vpack.c.bf16 %v115, %v114
  %v125 = vpack.c.bf16 %v117, %v116
  %v126 = vld [vmem:[%s1] sm:$0x3]
  %v127 = vld [vmem:[#allocation2 + $0x1] sm:$0xff]
  %v128 = vld [vmem:[#allocation2 + $0x11] sm:$0xff]
  %v129 = vld [vmem:[#allocation2 + $0x21] sm:$0xff]
  %v130 = vld [vmem:[#allocation2 + $0x31] sm:$0xff]
  %v131 = vld [vmem:[#allocation2 + $0x41] sm:$0xff]
  %v132 = vld [vmem:[#allocation2 + $0x51] sm:$0xff]
  %v133 = vld [vmem:[#allocation2 + $0x61] sm:$0xff]
  %v134 = vld [vmem:[#allocation2 + $0x71] sm:$0xff]
  %v135 = vld [vmem:[#allocation2 + $0xa1] sm:$0xff]
  %v136 = vld [vmem:[#allocation2 + $0xb1] sm:$0xff]
  %v137 = vld [vmem:[#allocation2 + $0xc1] sm:$0xff]
  %v138 = vld [vmem:[#allocation2 + $0xd1] sm:$0xff]
  %v139 = vld [vmem:[#allocation2 + $0xe1] sm:$0xff]
  %v140 = vld [vmem:[#allocation2 + $0xf1] sm:$0xff]
  %v141 = vld [vmem:[#allocation2 + $0x101] sm:$0xff]
  %v142 = vld [vmem:[#allocation2 + $0x111] sm:$0xff]
  %v143 = vpack.c.bf16 %v128, %v127
  %v144 = vpack.c.bf16 %v130, %v129
  %v145 = vpack.c.bf16 %v132, %v131
  %v146 = vpack.c.bf16 %v134, %v133
  %v147 = vpack.c.bf16 %v136, %v135
  %v148 = vpack.c.bf16 %v138, %v137
  %v149 = vpack.c.bf16 %v140, %v139
  %v150 = vpack.c.bf16 %v142, %v141
  %s151 = scalar_lea.vmem %s1, 2
  %v152 = vld [vmem:[%s151] sm:$0x3]
  %v154 = vsel %vm27, %v143, 0
  %v157 = vsel %vm27, %v144, 0
  %v160 = vsel %vm27, %v145, 0
  %v163 = vsel %vm27, %v146, 0
  %v166 = vsel %vm27, %v147, 0
  %v169 = vsel %vm27, %v148, 0
  %v172 = vsel %vm27, %v149, 0
  %v175 = vsel %vm27, %v150, 0
  %vm177 = vcmask 1041408
  %v179 = vsel %vm177, %v152, 0
  %181 = vmatpush.bf16.msra.mxu0 0
  %182 = vmatpush.bf16.msra.mxu0 0
  %183 = vmatpush.bf16.msra.mxu0 0
  %184 = vmatpush.bf16.msra.mxu0 0
  %185 = vmatpush.bf16.msra.mxu0 0
  %186 = vmatpush.bf16.msra.mxu0 0
  %187 = vmatpush.bf16.msra.mxu0 0
  %188 = vmatpush.bf16.msra.mxu0 %v179
  %189 = vmatmul.bf16.gmra.mxu0 %v154
  %v190 = vpop.f32.mrf.mxu0
  %v191 = vadd.f32 0.0, %v190
  %v192 = vpop.f32.mrf.mxu0
  %v193 = vadd.f32 0.0, %v192
  %194 = vmatmul.bf16.gmra.mxu0 %v157
  %v195 = vpop.f32.mrf.mxu0
  %v196 = vadd.f32 0.0, %v195
  %v197 = vpop.f32.mrf.mxu0
  %v198 = vadd.f32 0.0, %v197
  %199 = vmatmul.bf16.gmra.mxu0 %v160
  %v200 = vpop.f32.mrf.mxu0
  %v201 = vadd.f32 0.0, %v200
  %v202 = vpop.f32.mrf.mxu0
  %v203 = vadd.f32 0.0, %v202
  %204 = vmatmul.bf16.gmra.mxu0 %v163
  %v205 = vpop.f32.mrf.mxu0
  %v206 = vadd.f32 0.0, %v205
  %v207 = vpop.f32.mrf.mxu0
  %v208 = vadd.f32 0.0, %v207
  %209 = vmatmul.bf16.gmra.mxu0 %v166
  %v210 = vpop.f32.mrf.mxu0
  %v211 = vadd.f32 0.0, %v210
  %v212 = vpop.f32.mrf.mxu0
  %v213 = vadd.f32 0.0, %v212
  %214 = vmatmul.bf16.gmra.mxu0 %v169
  %v215 = vpop.f32.mrf.mxu0
  %v216 = vadd.f32 0.0, %v215
  %v217 = vpop.f32.mrf.mxu0
  %v218 = vadd.f32 0.0, %v217
  %219 = vmatmul.bf16.gmra.mxu0 %v172
  %v220 = vpop.f32.mrf.mxu0
  %v221 = vadd.f32 0.0, %v220
  %v222 = vpop.f32.mrf.mxu0
  %v223 = vadd.f32 0.0, %v222
  %224 = vmatmul.bf16.gmra.mxu0 %v175
  %v225 = vpop.f32.mrf.mxu0
  %v226 = vadd.f32 0.0, %v225
  %v227 = vpop.f32.mrf.mxu0
  %v228 = vadd.f32 0.0, %v227
  %229 = vdwg.mxu0
  %v231 = vsel %vm27, %v118, 0
  %v234 = vsel %vm27, %v119, 0
  %v237 = vsel %vm27, %v120, 0
  %v240 = vsel %vm27, %v121, 0
  %v243 = vsel %vm27, %v122, 0
  %v246 = vsel %vm27, %v123, 0
  %v249 = vsel %vm27, %v124, 0
  %v252 = vsel %vm27, %v125, 0
  %v255 = vsel %vm177, %v126, 0
  %257 = vmatpush.bf16.msra.mxu0 0
  %258 = vmatpush.bf16.msra.mxu0 0
  %259 = vmatpush.bf16.msra.mxu0 0
  %260 = vmatpush.bf16.msra.mxu0 0
  %261 = vmatpush.bf16.msra.mxu0 0
  %262 = vmatpush.bf16.msra.mxu0 0
  %263 = vmatpush.bf16.msra.mxu0 0
  %264 = vmatpush.bf16.msra.mxu0 %v255
  %265 = vmatmul.bf16.gmra.mxu0 %v231
  %v266 = vpop.f32.mrf.mxu0
  %v267 = vadd.f32 %v191, %v266
  %v268 = vpop.f32.mrf.mxu0
  %v269 = vadd.f32 %v193, %v268
  %270 = vmatmul.bf16.gmra.mxu0 %v234
  %v271 = vpop.f32.mrf.mxu0
  %v272 = vadd.f32 %v196, %v271
  %v273 = vpop.f32.mrf.mxu0
  %v274 = vadd.f32 %v198, %v273
  %275 = vmatmul.bf16.gmra.mxu0 %v237
  %v276 = vpop.f32.mrf.mxu0
  %v277 = vadd.f32 %v201, %v276
  %v278 = vpop.f32.mrf.mxu0
  %v279 = vadd.f32 %v203, %v278
  %280 = vmatmul.bf16.gmra.mxu0 %v240
  %v281 = vpop.f32.mrf.mxu0
  %v282 = vadd.f32 %v206, %v281
  %v283 = vpop.f32.mrf.mxu0
  %v284 = vadd.f32 %v208, %v283
  %285 = vmatmul.bf16.gmra.mxu0 %v243
  %v286 = vpop.f32.mrf.mxu0
  %v287 = vadd.f32 %v211, %v286
  %v288 = vpop.f32.mrf.mxu0
  %v289 = vadd.f32 %v213, %v288
  %290 = vmatmul.bf16.gmra.mxu0 %v246
  %v291 = vpop.f32.mrf.mxu0
  %v292 = vadd.f32 %v216, %v291
  %v293 = vpop.f32.mrf.mxu0
  %v294 = vadd.f32 %v218, %v293
  %295 = vmatmul.bf16.gmra.mxu0 %v249
  %v296 = vpop.f32.mrf.mxu0
  %v297 = vadd.f32 %v221, %v296
  %v298 = vpop.f32.mrf.mxu0
  %v299 = vadd.f32 %v223, %v298
  %300 = vmatmul.bf16.gmra.mxu0 %v252
  %v301 = vpop.f32.mrf.mxu0
  %v302 = vadd.f32 %v226, %v301
  %v303 = vpop.f32.mrf.mxu0
  %v304 = vadd.f32 %v228, %v303
  %305 = vdwg.mxu0
  %v306 = vld [vmem:[#allocation2 + $0x2] sm:$0xff]
  %v307 = vld [vmem:[#allocation2 + $0x12] sm:$0xff]
  %v308 = vld [vmem:[#allocation2 + $0x22] sm:$0xff]
  %v309 = vld [vmem:[#allocation2 + $0x32] sm:$0xff]
  %v310 = vld [vmem:[#allocation2 + $0x42] sm:$0xff]
  %v311 = vld [vmem:[#allocation2 + $0x52] sm:$0xff]
  %v312 = vld [vmem:[#allocation2 + $0x62] sm:$0xff]
  %v313 = vld [vmem:[#allocation2 + $0x72] sm:$0xff]
  %v314 = vld [vmem:[#allocation2 + $0xa2] sm:$0xff]
  %v315 = vld [vmem:[#allocation2 + $0xb2] sm:$0xff]
  %v316 = vld [vmem:[#allocation2 + $0xc2] sm:$0xff]
  %v317 = vld [vmem:[#allocation2 + $0xd2] sm:$0xff]
  %v318 = vld [vmem:[#allocation2 + $0xe2] sm:$0xff]
  %v319 = vld [vmem:[#allocation2 + $0xf2] sm:$0xff]
  %v320 = vld [vmem:[#allocation2 + $0x102] sm:$0xff]
  %v321 = vld [vmem:[#allocation2 + $0x112] sm:$0xff]
  %v322 = vpack.c.bf16 %v307, %v306
  %v323 = vpack.c.bf16 %v309, %v308
  %v324 = vpack.c.bf16 %v311, %v310
  %v325 = vpack.c.bf16 %v313, %v312
  %v326 = vpack.c.bf16 %v315, %v314
  %v327 = vpack.c.bf16 %v317, %v316
  %v328 = vpack.c.bf16 %v319, %v318
  %v329 = vpack.c.bf16 %v321, %v320
  %s330 = scalar_lea.vmem %s1, 4
  %v331 = vld [vmem:[%s330] sm:$0x3]
  %v333 = vsel %vm27, %v322, 0
  %v336 = vsel %vm27, %v323, 0
  %v339 = vsel %vm27, %v324, 0
  %v342 = vsel %vm27, %v325, 0
  %v345 = vsel %vm27, %v326, 0
  %v348 = vsel %vm27, %v327, 0
  %v351 = vsel %vm27, %v328, 0
  %v354 = vsel %vm27, %v329, 0
  %v357 = vsel %vm177, %v331, 0
  %359 = vmatpush.bf16.msra.mxu0 0
  %360 = vmatpush.bf16.msra.mxu0 0
  %361 = vmatpush.bf16.msra.mxu0 0
  %362 = vmatpush.bf16.msra.mxu0 0
  %363 = vmatpush.bf16.msra.mxu0 0
  %364 = vmatpush.bf16.msra.mxu0 0
  %365 = vmatpush.bf16.msra.mxu0 0
  %366 = vmatpush.bf16.msra.mxu0 %v357
  %367 = vmatmul.bf16.gmra.mxu0 %v333
  %v368 = vpop.f32.mrf.mxu0
  %v369 = vadd.f32 0.0, %v368
  %v370 = vpop.f32.mrf.mxu0
  %v371 = vadd.f32 0.0, %v370
  %372 = vmatmul.bf16.gmra.mxu0 %v336
  %v373 = vpop.f32.mrf.mxu0
  %v374 = vadd.f32 0.0, %v373
  %v375 = vpop.f32.mrf.mxu0
  %v376 = vadd.f32 0.0, %v375
  %377 = vmatmul.bf16.gmra.mxu0 %v339
  %v378 = vpop.f32.mrf.mxu0
  %v379 = vadd.f32 0.0, %v378
  %v380 = vpop.f32.mrf.mxu0
  %v381 = vadd.f32 0.0, %v380
  %382 = vmatmul.bf16.gmra.mxu0 %v342
  %v383 = vpop.f32.mrf.mxu0
  %v384 = vadd.f32 0.0, %v383
  %v385 = vpop.f32.mrf.mxu0
  %v386 = vadd.f32 0.0, %v385
  %387 = vmatmul.bf16.gmra.mxu0 %v345
  %v388 = vpop.f32.mrf.mxu0
  %v389 = vadd.f32 0.0, %v388
  %v390 = vpop.f32.mrf.mxu0
  %v391 = vadd.f32 0.0, %v390
  %392 = vmatmul.bf16.gmra.mxu0 %v348
  %v393 = vpop.f32.mrf.mxu0
  %v394 = vadd.f32 0.0, %v393
  %v395 = vpop.f32.mrf.mxu0
  %v396 = vadd.f32 0.0, %v395
  %397 = vmatmul.bf16.gmra.mxu0 %v351
  %v398 = vpop.f32.mrf.mxu0
  %v399 = vadd.f32 0.0, %v398
  %v400 = vpop.f32.mrf.mxu0
  %v401 = vadd.f32 0.0, %v400
  %402 = vmatmul.bf16.gmra.mxu0 %v354
  %v403 = vpop.f32.mrf.mxu0
  %v404 = vadd.f32 0.0, %v403
  %v405 = vpop.f32.mrf.mxu0
  %v406 = vadd.f32 0.0, %v405
  %407 = vdwg.mxu0
  %v408 = vadd.f32 %v267, %v369
  %v409 = vadd.f32 %v269, %v371
  %v410 = vadd.f32 %v272, %v374
  %v411 = vadd.f32 %v274, %v376
  %v412 = vadd.f32 %v277, %v379
  %v413 = vadd.f32 %v279, %v381
  %v414 = vadd.f32 %v282, %v384
  %v415 = vadd.f32 %v284, %v386
  %v416 = vadd.f32 %v287, %v389
  %v417 = vadd.f32 %v289, %v391
  %v418 = vadd.f32 %v292, %v394
  %v419 = vadd.f32 %v294, %v396
  %v420 = vadd.f32 %v297, %v399
  %v421 = vadd.f32 %v299, %v401
  %v422 = vadd.f32 %v302, %v404
  %v423 = vadd.f32 %v304, %v406
  %v424 = vld [vmem:[%s85] sm:$0xff]
  %v425 = vld [vmem:[%s85 + $0x10] sm:$0xff]
  %v426 = vld [vmem:[%s85 + $0x20] sm:$0xff]
  %v427 = vld [vmem:[%s85 + $0x30] sm:$0xff]
  %v428 = vld [vmem:[%s85 + $0x40] sm:$0xff]
  %v429 = vld [vmem:[%s85 + $0x50] sm:$0xff]
  %v430 = vld [vmem:[%s85 + $0x60] sm:$0xff]
  %v431 = vld [vmem:[%s85 + $0x70] sm:$0xff]
  %v432 = vld [vmem:[%s85 + $0xa0] sm:$0xff]
  %v433 = vld [vmem:[%s85 + $0xb0] sm:$0xff]
  %v434 = vld [vmem:[%s85 + $0xc0] sm:$0xff]
  %v435 = vld [vmem:[%s85 + $0xd0] sm:$0xff]
  %v436 = vld [vmem:[%s85 + $0xe0] sm:$0xff]
  %v437 = vld [vmem:[%s85 + $0xf0] sm:$0xff]
  %v438 = vld [vmem:[%s85 + $0x100] sm:$0xff]
  %v439 = vld [vmem:[%s85 + $0x110] sm:$0xff]
  %v440 = vpack.c.bf16 %v425, %v424
  %v441 = vpack.c.bf16 %v427, %v426
  %v442 = vpack.c.bf16 %v429, %v428
  %v443 = vpack.c.bf16 %v431, %v430
  %v444 = vpack.c.bf16 %v433, %v432
  %v445 = vpack.c.bf16 %v435, %v434
  %v446 = vpack.c.bf16 %v437, %v436
  %v447 = vpack.c.bf16 %v439, %v438
  %s448 = scalar_lea.vmem %s1, 6
  %v449 = vld [vmem:[%s448] sm:$0x3]
  %v451 = vsel %vm27, %v440, 0
  %v454 = vsel %vm27, %v441, 0
  %v457 = vsel %vm27, %v442, 0
  %v460 = vsel %vm27, %v443, 0
  %v463 = vsel %vm27, %v444, 0
  %v466 = vsel %vm27, %v445, 0
  %v469 = vsel %vm27, %v446, 0
  %v472 = vsel %vm27, %v447, 0
  %v475 = vsel %vm177, %v449, 0
  %477 = vmatpush.bf16.msra.mxu0 0
  %478 = vmatpush.bf16.msra.mxu0 0
  %479 = vmatpush.bf16.msra.mxu0 0
  %480 = vmatpush.bf16.msra.mxu0 0
  %481 = vmatpush.bf16.msra.mxu0 0
  %482 = vmatpush.bf16.msra.mxu0 0
  %483 = vmatpush.bf16.msra.mxu0 0
  %484 = vmatpush.bf16.msra.mxu0 %v475
  %485 = vmatmul.bf16.gmra.mxu0 %v451
  %v486 = vpop.f32.mrf.mxu0
  %v487 = vadd.f32 0.0, %v486
  %v488 = vpop.f32.mrf.mxu0
  %v489 = vadd.f32 0.0, %v488
  %490 = vmatmul.bf16.gmra.mxu0 %v454
  %v491 = vpop.f32.mrf.mxu0
  %v492 = vadd.f32 0.0, %v491
  %v493 = vpop.f32.mrf.mxu0
  %v494 = vadd.f32 0.0, %v493
  %495 = vmatmul.bf16.gmra.mxu0 %v457
  %v496 = vpop.f32.mrf.mxu0
  %v497 = vadd.f32 0.0, %v496
  %v498 = vpop.f32.mrf.mxu0
  %v499 = vadd.f32 0.0, %v498
  %500 = vmatmul.bf16.gmra.mxu0 %v460
  %v501 = vpop.f32.mrf.mxu0
  %v502 = vadd.f32 0.0, %v501
  %v503 = vpop.f32.mrf.mxu0
  %v504 = vadd.f32 0.0, %v503
  %505 = vmatmul.bf16.gmra.mxu0 %v463
  %v506 = vpop.f32.mrf.mxu0
  %v507 = vadd.f32 0.0, %v506
  %v508 = vpop.f32.mrf.mxu0
  %v509 = vadd.f32 0.0, %v508
  %510 = vmatmul.bf16.gmra.mxu0 %v466
  %v511 = vpop.f32.mrf.mxu0
  %v512 = vadd.f32 0.0, %v511
  %v513 = vpop.f32.mrf.mxu0
  %v514 = vadd.f32 0.0, %v513
  %515 = vmatmul.bf16.gmra.mxu0 %v469
  %v516 = vpop.f32.mrf.mxu0
  %v517 = vadd.f32 0.0, %v516
  %v518 = vpop.f32.mrf.mxu0
  %v519 = vadd.f32 0.0, %v518
  %520 = vmatmul.bf16.gmra.mxu0 %v472
  %v521 = vpop.f32.mrf.mxu0
  %v522 = vadd.f32 0.0, %v521
  %v523 = vpop.f32.mrf.mxu0
  %v524 = vadd.f32 0.0, %v523
  %525 = vdwg.mxu0
  %v526 = vadd.f32 %v408, %v487
  %v527 = vadd.f32 %v409, %v489
  %v528 = vadd.f32 %v410, %v492
  %v529 = vadd.f32 %v411, %v494
  %v530 = vadd.f32 %v412, %v497
  %v531 = vadd.f32 %v413, %v499
  %v532 = vadd.f32 %v414, %v502
  %v533 = vadd.f32 %v415, %v504
  %v534 = vadd.f32 %v416, %v507
  %v535 = vadd.f32 %v417, %v509
  %v536 = vadd.f32 %v418, %v512
  %v537 = vadd.f32 %v419, %v514
  %v538 = vadd.f32 %v420, %v517
  %v539 = vadd.f32 %v421, %v519
  %v540 = vadd.f32 %v422, %v522
  %v541 = vadd.f32 %v423, %v524
  %v542 = vld [vmem:[%s85 + $0x1] sm:$0xff]
  %v543 = vld [vmem:[%s85 + $0x11] sm:$0xff]
  %v544 = vld [vmem:[%s85 + $0x21] sm:$0xff]
  %v545 = vld [vmem:[%s85 + $0x31] sm:$0xff]
  %v546 = vld [vmem:[%s85 + $0x41] sm:$0xff]
  %v547 = vld [vmem:[%s85 + $0x51] sm:$0xff]
  %v548 = vld [vmem:[%s85 + $0x61] sm:$0xff]
  %v549 = vld [vmem:[%s85 + $0x71] sm:$0xff]
  %v550 = vld [vmem:[%s85 + $0xa1] sm:$0xff]
  %v551 = vld [vmem:[%s85 + $0xb1] sm:$0xff]
  %v552 = vld [vmem:[%s85 + $0xc1] sm:$0xff]
  %v553 = vld [vmem:[%s85 + $0xd1] sm:$0xff]
  %v554 = vld [vmem:[%s85 + $0xe1] sm:$0xff]
  %v555 = vld [vmem:[%s85 + $0xf1] sm:$0xff]
  %v556 = vld [vmem:[%s85 + $0x101] sm:$0xff]
  %v557 = vld [vmem:[%s85 + $0x111] sm:$0xff]
  %v558 = vpack.c.bf16 %v543, %v542
  %v559 = vpack.c.bf16 %v545, %v544
  %v560 = vpack.c.bf16 %v547, %v546
  %v561 = vpack.c.bf16 %v549, %v548
  %v562 = vpack.c.bf16 %v551, %v550
  %v563 = vpack.c.bf16 %v553, %v552
  %v564 = vpack.c.bf16 %v555, %v554
  %v565 = vpack.c.bf16 %v557, %v556
  %s566 = scalar_lea.vmem %s1, 8
  %v567 = vld [vmem:[%s566] sm:$0x3]
  %v569 = vsel %vm27, %v558, 0
  %v572 = vsel %vm27, %v559, 0
  %v575 = vsel %vm27, %v560, 0
  %v578 = vsel %vm27, %v561, 0
  %v581 = vsel %vm27, %v562, 0
  %v584 = vsel %vm27, %v563, 0
  %v587 = vsel %vm27, %v564, 0
  %v590 = vsel %vm27, %v565, 0
  %v593 = vsel %vm177, %v567, 0
  %595 = vmatpush.bf16.msra.mxu0 0
  %596 = vmatpush.bf16.msra.mxu0 0
  %597 = vmatpush.bf16.msra.mxu0 0
  %598 = vmatpush.bf16.msra.mxu0 0
  %599 = vmatpush.bf16.msra.mxu0 0
  %600 = vmatpush.bf16.msra.mxu0 0
  %601 = vmatpush.bf16.msra.mxu0 0
  %602 = vmatpush.bf16.msra.mxu0 %v593
  %603 = vmatmul.bf16.gmra.mxu0 %v569
  %v604 = vpop.f32.mrf.mxu0
  %v605 = vadd.f32 0.0, %v604
  %v606 = vpop.f32.mrf.mxu0
  %v607 = vadd.f32 0.0, %v606
  %608 = vmatmul.bf16.gmra.mxu0 %v572
  %v609 = vpop.f32.mrf.mxu0
  %v610 = vadd.f32 0.0, %v609
  %v611 = vpop.f32.mrf.mxu0
  %v612 = vadd.f32 0.0, %v611
  %613 = vmatmul.bf16.gmra.mxu0 %v575
  %v614 = vpop.f32.mrf.mxu0
  %v615 = vadd.f32 0.0, %v614
  %v616 = vpop.f32.mrf.mxu0
  %v617 = vadd.f32 0.0, %v616
  %618 = vmatmul.bf16.gmra.mxu0 %v578
  %v619 = vpop.f32.mrf.mxu0
  %v620 = vadd.f32 0.0, %v619
  %v621 = vpop.f32.mrf.mxu0
  %v622 = vadd.f32 0.0, %v621
  %623 = vmatmul.bf16.gmra.mxu0 %v581
  %v624 = vpop.f32.mrf.mxu0
  %v625 = vadd.f32 0.0, %v624
  %v626 = vpop.f32.mrf.mxu0
  %v627 = vadd.f32 0.0, %v626
  %628 = vmatmul.bf16.gmra.mxu0 %v584
  %v629 = vpop.f32.mrf.mxu0
  %v630 = vadd.f32 0.0, %v629
  %v631 = vpop.f32.mrf.mxu0
  %v632 = vadd.f32 0.0, %v631
  %633 = vmatmul.bf16.gmra.mxu0 %v587
  %v634 = vpop.f32.mrf.mxu0
  %v635 = vadd.f32 0.0, %v634
  %v636 = vpop.f32.mrf.mxu0
  %v637 = vadd.f32 0.0, %v636
  %638 = vmatmul.bf16.gmra.mxu0 %v590
  %v639 = vpop.f32.mrf.mxu0
  %v640 = vadd.f32 0.0, %v639
  %v641 = vpop.f32.mrf.mxu0
  %v642 = vadd.f32 0.0, %v641
  %643 = vdwg.mxu0
  %v644 = vadd.f32 %v526, %v605
  %v645 = vadd.f32 %v527, %v607
  %v646 = vadd.f32 %v528, %v610
  %v647 = vadd.f32 %v529, %v612
  %v648 = vadd.f32 %v530, %v615
  %v649 = vadd.f32 %v531, %v617
  %v650 = vadd.f32 %v532, %v620
  %v651 = vadd.f32 %v533, %v622
  %v652 = vadd.f32 %v534, %v625
  %v653 = vadd.f32 %v535, %v627
  %v654 = vadd.f32 %v536, %v630
  %v655 = vadd.f32 %v537, %v632
  %v656 = vadd.f32 %v538, %v635
  %v657 = vadd.f32 %v539, %v637
  %v658 = vadd.f32 %v540, %v640
  %v659 = vadd.f32 %v541, %v642
  %v660 = vld [vmem:[%s85 + $0x2] sm:$0xff]
  %v661 = vld [vmem:[%s85 + $0x12] sm:$0xff]
  %v662 = vld [vmem:[%s85 + $0x22] sm:$0xff]
  %v663 = vld [vmem:[%s85 + $0x32] sm:$0xff]
  %v664 = vld [vmem:[%s85 + $0x42] sm:$0xff]
  %v665 = vld [vmem:[%s85 + $0x52] sm:$0xff]
  %v666 = vld [vmem:[%s85 + $0x62] sm:$0xff]
  %v667 = vld [vmem:[%s85 + $0x72] sm:$0xff]
  %v668 = vld [vmem:[%s85 + $0xa2] sm:$0xff]
  %v669 = vld [vmem:[%s85 + $0xb2] sm:$0xff]
  %v670 = vld [vmem:[%s85 + $0xc2] sm:$0xff]
  %v671 = vld [vmem:[%s85 + $0xd2] sm:$0xff]
  %v672 = vld [vmem:[%s85 + $0xe2] sm:$0xff]
  %v673 = vld [vmem:[%s85 + $0xf2] sm:$0xff]
  %v674 = vld [vmem:[%s85 + $0x102] sm:$0xff]
  %v675 = vld [vmem:[%s85 + $0x112] sm:$0xff]
  %v676 = vpack.c.bf16 %v661, %v660
  %v677 = vpack.c.bf16 %v663, %v662
  %v678 = vpack.c.bf16 %v665, %v664
  %v679 = vpack.c.bf16 %v667, %v666
  %v680 = vpack.c.bf16 %v669, %v668
  %v681 = vpack.c.bf16 %v671, %v670
  %v682 = vpack.c.bf16 %v673, %v672
  %v683 = vpack.c.bf16 %v675, %v674
  %s684 = scalar_lea.vmem %s1, 10
  %v685 = vld [vmem:[%s684] sm:$0x3]
  %v687 = vsel %vm27, %v676, 0
  %v690 = vsel %vm27, %v677, 0
  %v693 = vsel %vm27, %v678, 0
  %v696 = vsel %vm27, %v679, 0
  %v699 = vsel %vm27, %v680, 0
  %v702 = vsel %vm27, %v681, 0
  %v705 = vsel %vm27, %v682, 0
  %v708 = vsel %vm27, %v683, 0
  %v711 = vsel %vm177, %v685, 0
  %713 = vmatpush.bf16.msra.mxu0 0
  %714 = vmatpush.bf16.msra.mxu0 0
  %715 = vmatpush.bf16.msra.mxu0 0
  %716 = vmatpush.bf16.msra.mxu0 0
  %717 = vmatpush.bf16.msra.mxu0 0
  %718 = vmatpush.bf16.msra.mxu0 0
  %719 = vmatpush.bf16.msra.mxu0 0
  %720 = vmatpush.bf16.msra.mxu0 %v711
  %721 = vmatmul.bf16.gmra.mxu0 %v687
  %v722 = vpop.f32.mrf.mxu0
  %v723 = vadd.f32 0.0, %v722
  %v724 = vpop.f32.mrf.mxu0
  %v725 = vadd.f32 0.0, %v724
  %726 = vmatmul.bf16.gmra.mxu0 %v690
  %v727 = vpop.f32.mrf.mxu0
  %v728 = vadd.f32 0.0, %v727
  %v729 = vpop.f32.mrf.mxu0
  %v730 = vadd.f32 0.0, %v729
  %731 = vmatmul.bf16.gmra.mxu0 %v693
  %v732 = vpop.f32.mrf.mxu0
  %v733 = vadd.f32 0.0, %v732
  %v734 = vpop.f32.mrf.mxu0
  %v735 = vadd.f32 0.0, %v734
  %736 = vmatmul.bf16.gmra.mxu0 %v696
  %v737 = vpop.f32.mrf.mxu0
  %v738 = vadd.f32 0.0, %v737
  %v739 = vpop.f32.mrf.mxu0
  %v740 = vadd.f32 0.0, %v739
  %741 = vmatmul.bf16.gmra.mxu0 %v699
  %v742 = vpop.f32.mrf.mxu0
  %v743 = vadd.f32 0.0, %v742
  %v744 = vpop.f32.mrf.mxu0
  %v745 = vadd.f32 0.0, %v744
  %746 = vmatmul.bf16.gmra.mxu0 %v702
  %v747 = vpop.f32.mrf.mxu0
  %v748 = vadd.f32 0.0, %v747
  %v749 = vpop.f32.mrf.mxu0
  %v750 = vadd.f32 0.0, %v749
  %751 = vmatmul.bf16.gmra.mxu0 %v705
  %v752 = vpop.f32.mrf.mxu0
  %v753 = vadd.f32 0.0, %v752
  %v754 = vpop.f32.mrf.mxu0
  %v755 = vadd.f32 0.0, %v754
  %756 = vmatmul.bf16.gmra.mxu0 %v708
  %v757 = vpop.f32.mrf.mxu0
  %v758 = vadd.f32 0.0, %v757
  %v759 = vpop.f32.mrf.mxu0
  %v760 = vadd.f32 0.0, %v759
  %761 = vdwg.mxu0
  %v762 = vadd.f32 %v644, %v723
  %v763 = vadd.f32 %v645, %v725
  %v764 = vadd.f32 %v646, %v728
  %v765 = vadd.f32 %v647, %v730
  %v766 = vadd.f32 %v648, %v733
  %v767 = vadd.f32 %v649, %v735
  %v768 = vadd.f32 %v650, %v738
  %v769 = vadd.f32 %v651, %v740
  %v770 = vadd.f32 %v652, %v743
  %v771 = vadd.f32 %v653, %v745
  %v772 = vadd.f32 %v654, %v748
  %v773 = vadd.f32 %v655, %v750
  %v774 = vadd.f32 %v656, %v753
  %v775 = vadd.f32 %v657, %v755
  %v776 = vadd.f32 %v658, %v758
  %v777 = vadd.f32 %v659, %v760
  %s778 = scalar_lea.vmem [#allocation2], 32
  %v779 = vld [vmem:[%s778] sm:$0xff]
  %v780 = vld [vmem:[%s778 + $0x10] sm:$0xff]
  %v781 = vld [vmem:[%s778 + $0x20] sm:$0xff]
  %v782 = vld [vmem:[%s778 + $0x30] sm:$0xff]
  %v783 = vld [vmem:[%s778 + $0x40] sm:$0xff]
  %v784 = vld [vmem:[%s778 + $0x50] sm:$0xff]
  %v785 = vld [vmem:[%s778 + $0x60] sm:$0xff]
  %v786 = vld [vmem:[%s778 + $0x70] sm:$0xff]
  %v787 = vld [vmem:[%s778 + $0xa0] sm:$0xff]
  %v788 = vld [vmem:[%s778 + $0xb0] sm:$0xff]
  %v789 = vld [vmem:[%s778 + $0xc0] sm:$0xff]
  %v790 = vld [vmem:[%s778 + $0xd0] sm:$0xff]
  %v791 = vld [vmem:[%s778 + $0xe0] sm:$0xff]
  %v792 = vld [vmem:[%s778 + $0xf0] sm:$0xff]
  %v793 = vld [vmem:[%s778 + $0x100] sm:$0xff]
  %v794 = vld [vmem:[%s778 + $0x110] sm:$0xff]
  %v795 = vpack.c.bf16 %v780, %v779
  %v796 = vpack.c.bf16 %v782, %v781
  %v797 = vpack.c.bf16 %v784, %v783
  %v798 = vpack.c.bf16 %v786, %v785
  %v799 = vpack.c.bf16 %v788, %v787
  %v800 = vpack.c.bf16 %v790, %v789
  %v801 = vpack.c.bf16 %v792, %v791
  %v802 = vpack.c.bf16 %v794, %v793
  %s803 = scalar_lea.vmem %s1, 12
  %v804 = vld [vmem:[%s803] sm:$0x3]
  %v806 = vsel %vm27, %v795, 0
  %v809 = vsel %vm27, %v796, 0
  %v812 = vsel %vm27, %v797, 0
  %v815 = vsel %vm27, %v798, 0
  %v818 = vsel %vm27, %v799, 0
  %v821 = vsel %vm27, %v800, 0
  %v824 = vsel %vm27, %v801, 0
  %v827 = vsel %vm27, %v802, 0
  %v830 = vsel %vm177, %v804, 0
  %832 = vmatpush.bf16.msra.mxu0 0
  %833 = vmatpush.bf16.msra.mxu0 0
  %834 = vmatpush.bf16.msra.mxu0 0
  %835 = vmatpush.bf16.msra.mxu0 0
  %836 = vmatpush.bf16.msra.mxu0 0
  %837 = vmatpush.bf16.msra.mxu0 0
  %838 = vmatpush.bf16.msra.mxu0 0
  %839 = vmatpush.bf16.msra.mxu0 %v830
  %840 = vmatmul.bf16.gmra.mxu0 %v806
  %v841 = vpop.f32.mrf.mxu0
  %v842 = vadd.f32 0.0, %v841
  %v843 = vpop.f32.mrf.mxu0
  %v844 = vadd.f32 0.0, %v843
  %845 = vmatmul.bf16.gmra.mxu0 %v809
  %v846 = vpop.f32.mrf.mxu0
  %v847 = vadd.f32 0.0, %v846
  %v848 = vpop.f32.mrf.mxu0
  %v849 = vadd.f32 0.0, %v848
  %850 = vmatmul.bf16.gmra.mxu0 %v812
  %v851 = vpop.f32.mrf.mxu0
  %v852 = vadd.f32 0.0, %v851
  %v853 = vpop.f32.mrf.mxu0
  %v854 = vadd.f32 0.0, %v853
  %855 = vmatmul.bf16.gmra.mxu0 %v815
  %v856 = vpop.f32.mrf.mxu0
  %v857 = vadd.f32 0.0, %v856
  %v858 = vpop.f32.mrf.mxu0
  %v859 = vadd.f32 0.0, %v858
  %860 = vmatmul.bf16.gmra.mxu0 %v818
  %v861 = vpop.f32.mrf.mxu0
  %v862 = vadd.f32 0.0, %v861
  %v863 = vpop.f32.mrf.mxu0
  %v864 = vadd.f32 0.0, %v863
  %865 = vmatmul.bf16.gmra.mxu0 %v821
  %v866 = vpop.f32.mrf.mxu0
  %v867 = vadd.f32 0.0, %v866
  %v868 = vpop.f32.mrf.mxu0
  %v869 = vadd.f32 0.0, %v868
  %870 = vmatmul.bf16.gmra.mxu0 %v824
  %v871 = vpop.f32.mrf.mxu0
  %v872 = vadd.f32 0.0, %v871
  %v873 = vpop.f32.mrf.mxu0
  %v874 = vadd.f32 0.0, %v873
  %875 = vmatmul.bf16.gmra.mxu0 %v827
  %v876 = vpop.f32.mrf.mxu0
  %v877 = vadd.f32 0.0, %v876
  %v878 = vpop.f32.mrf.mxu0
  %v879 = vadd.f32 0.0, %v878
  %880 = vdwg.mxu0
  %v881 = vadd.f32 %v762, %v842
  %v882 = vadd.f32 %v763, %v844
  %v883 = vadd.f32 %v764, %v847
  %v884 = vadd.f32 %v765, %v849
  %v885 = vadd.f32 %v766, %v852
  %v886 = vadd.f32 %v767, %v854
  %v887 = vadd.f32 %v768, %v857
  %v888 = vadd.f32 %v769, %v859
  %v889 = vadd.f32 %v770, %v862
  %v890 = vadd.f32 %v771, %v864
  %v891 = vadd.f32 %v772, %v867
  %v892 = vadd.f32 %v773, %v869
  %v893 = vadd.f32 %v774, %v872
  %v894 = vadd.f32 %v775, %v874
  %v895 = vadd.f32 %v776, %v877
  %v896 = vadd.f32 %v777, %v879
  %v897 = vld [vmem:[%s778 + $0x1] sm:$0xff]
  %v898 = vld [vmem:[%s778 + $0x11] sm:$0xff]
  %v899 = vld [vmem:[%s778 + $0x21] sm:$0xff]
  %v900 = vld [vmem:[%s778 + $0x31] sm:$0xff]
  %v901 = vld [vmem:[%s778 + $0x41] sm:$0xff]
  %v902 = vld [vmem:[%s778 + $0x51] sm:$0xff]
  %v903 = vld [vmem:[%s778 + $0x61] sm:$0xff]
  %v904 = vld [vmem:[%s778 + $0x71] sm:$0xff]
  %v905 = vld [vmem:[%s778 + $0xa1] sm:$0xff]
  %v906 = vld [vmem:[%s778 + $0xb1] sm:$0xff]
  %v907 = vld [vmem:[%s778 + $0xc1] sm:$0xff]
  %v908 = vld [vmem:[%s778 + $0xd1] sm:$0xff]
  %v909 = vld [vmem:[%s778 + $0xe1] sm:$0xff]
  %v910 = vld [vmem:[%s778 + $0xf1] sm:$0xff]
  %v911 = vld [vmem:[%s778 + $0x101] sm:$0xff]
  %v912 = vld [vmem:[%s778 + $0x111] sm:$0xff]
  %v913 = vpack.c.bf16 %v898, %v897
  %v914 = vpack.c.bf16 %v900, %v899
  %v915 = vpack.c.bf16 %v902, %v901
  %v916 = vpack.c.bf16 %v904, %v903
  %v917 = vpack.c.bf16 %v906, %v905
  %v918 = vpack.c.bf16 %v908, %v907
  %v919 = vpack.c.bf16 %v910, %v909
  %v920 = vpack.c.bf16 %v912, %v911
  %s921 = scalar_lea.vmem %s1, 14
  %v922 = vld [vmem:[%s921] sm:$0x3]
  %v924 = vsel %vm27, %v913, 0
  %v927 = vsel %vm27, %v914, 0
  %v930 = vsel %vm27, %v915, 0
  %v933 = vsel %vm27, %v916, 0
  %v936 = vsel %vm27, %v917, 0
  %v939 = vsel %vm27, %v918, 0
  %v942 = vsel %vm27, %v919, 0
  %v945 = vsel %vm27, %v920, 0
  %v948 = vsel %vm177, %v922, 0
  %950 = vmatpush.bf16.msra.mxu0 0
  %951 = vmatpush.bf16.msra.mxu0 0
  %952 = vmatpush.bf16.msra.mxu0 0
  %953 = vmatpush.bf16.msra.mxu0 0
  %954 = vmatpush.bf16.msra.mxu0 0
  %955 = vmatpush.bf16.msra.mxu0 0
  %956 = vmatpush.bf16.msra.mxu0 0
  %957 = vmatpush.bf16.msra.mxu0 %v948
  %958 = vmatmul.bf16.gmra.mxu0 %v924
  %v959 = vpop.f32.mrf.mxu0
  %v960 = vadd.f32 0.0, %v959
  %v961 = vpop.f32.mrf.mxu0
  %v962 = vadd.f32 0.0, %v961
  %963 = vmatmul.bf16.gmra.mxu0 %v927
  %v964 = vpop.f32.mrf.mxu0
  %v965 = vadd.f32 0.0, %v964
  %v966 = vpop.f32.mrf.mxu0
  %v967 = vadd.f32 0.0, %v966
  %968 = vmatmul.bf16.gmra.mxu0 %v930
  %v969 = vpop.f32.mrf.mxu0
  %v970 = vadd.f32 0.0, %v969
  %v971 = vpop.f32.mrf.mxu0
  %v972 = vadd.f32 0.0, %v971
  %973 = vmatmul.bf16.gmra.mxu0 %v933
  %v974 = vpop.f32.mrf.mxu0
  %v975 = vadd.f32 0.0, %v974
  %v976 = vpop.f32.mrf.mxu0
  %v977 = vadd.f32 0.0, %v976
  %978 = vmatmul.bf16.gmra.mxu0 %v936
  %v979 = vpop.f32.mrf.mxu0
  %v980 = vadd.f32 0.0, %v979
  %v981 = vpop.f32.mrf.mxu0
  %v982 = vadd.f32 0.0, %v981
  %983 = vmatmul.bf16.gmra.mxu0 %v939
  %v984 = vpop.f32.mrf.mxu0
  %v985 = vadd.f32 0.0, %v984
  %v986 = vpop.f32.mrf.mxu0
  %v987 = vadd.f32 0.0, %v986
  %988 = vmatmul.bf16.gmra.mxu0 %v942
  %v989 = vpop.f32.mrf.mxu0
  %v990 = vadd.f32 0.0, %v989
  %v991 = vpop.f32.mrf.mxu0
  %v992 = vadd.f32 0.0, %v991
  %993 = vmatmul.bf16.gmra.mxu0 %v945
  %v994 = vpop.f32.mrf.mxu0
  %v995 = vadd.f32 0.0, %v994
  %v996 = vpop.f32.mrf.mxu0
  %v997 = vadd.f32 0.0, %v996
  %998 = vdwg.mxu0
  %v999 = vadd.f32 %v881, %v960
  %v1000 = vadd.f32 %v882, %v962
  %v1001 = vadd.f32 %v883, %v965
  %v1002 = vadd.f32 %v884, %v967
  %v1003 = vadd.f32 %v885, %v970
  %v1004 = vadd.f32 %v886, %v972
  %v1005 = vadd.f32 %v887, %v975
  %v1006 = vadd.f32 %v888, %v977
  %v1007 = vadd.f32 %v889, %v980
  %v1008 = vadd.f32 %v890, %v982
  %v1009 = vadd.f32 %v891, %v985
  %v1010 = vadd.f32 %v892, %v987
  %v1011 = vadd.f32 %v893, %v990
  %v1012 = vadd.f32 %v894, %v992
  %v1013 = vadd.f32 %v895, %v995
  %v1014 = vadd.f32 %v896, %v997
  %v1015 = vld [vmem:[%s778 + $0x2] sm:$0xff]
  %v1016 = vld [vmem:[%s778 + $0x12] sm:$0xff]
  %v1017 = vld [vmem:[%s778 + $0x22] sm:$0xff]
  %v1018 = vld [vmem:[%s778 + $0x32] sm:$0xff]
  %v1019 = vld [vmem:[%s778 + $0x42] sm:$0xff]
  %v1020 = vld [vmem:[%s778 + $0x52] sm:$0xff]
  %v1021 = vld [vmem:[%s778 + $0x62] sm:$0xff]
  %v1022 = vld [vmem:[%s778 + $0x72] sm:$0xff]
  %v1023 = vld [vmem:[%s778 + $0xa2] sm:$0xff]
  %v1024 = vld [vmem:[%s778 + $0xb2] sm:$0xff]
  %v1025 = vld [vmem:[%s778 + $0xc2] sm:$0xff]
  %v1026 = vld [vmem:[%s778 + $0xd2] sm:$0xff]
  %v1027 = vld [vmem:[%s778 + $0xe2] sm:$0xff]
  %v1028 = vld [vmem:[%s778 + $0xf2] sm:$0xff]
  %v1029 = vld [vmem:[%s778 + $0x102] sm:$0xff]
  %v1030 = vld [vmem:[%s778 + $0x112] sm:$0xff]
  %v1031 = vpack.c.bf16 %v1016, %v1015
  %v1032 = vpack.c.bf16 %v1018, %v1017
  %v1033 = vpack.c.bf16 %v1020, %v1019
  %v1034 = vpack.c.bf16 %v1022, %v1021
  %v1035 = vpack.c.bf16 %v1024, %v1023
  %v1036 = vpack.c.bf16 %v1026, %v1025
  %v1037 = vpack.c.bf16 %v1028, %v1027
  %v1038 = vpack.c.bf16 %v1030, %v1029
  %s1039 = scalar_lea.vmem %s1, 16
  %v1040 = vld [vmem:[%s1039] sm:$0x3]
  %v1042 = vsel %vm27, %v1031, 0
  %v1045 = vsel %vm27, %v1032, 0
  %v1048 = vsel %vm27, %v1033, 0
  %v1051 = vsel %vm27, %v1034, 0
  %v1054 = vsel %vm27, %v1035, 0
  %v1057 = vsel %vm27, %v1036, 0
  %v1060 = vsel %vm27, %v1037, 0
  %v1063 = vsel %vm27, %v1038, 0
  %v1066 = vsel %vm177, %v1040, 0
  %1068 = vmatpush.bf16.msra.mxu0 0
  %1069 = vmatpush.bf16.msra.mxu0 0
  %1070 = vmatpush.bf16.msra.mxu0 0
  %1071 = vmatpush.bf16.msra.mxu0 0
  %1072 = vmatpush.bf16.msra.mxu0 0
  %1073 = vmatpush.bf16.msra.mxu0 0
  %1074 = vmatpush.bf16.msra.mxu0 0
  %1075 = vmatpush.bf16.msra.mxu0 %v1066
  %1076 = vmatmul.bf16.gmra.mxu0 %v1042
  %v1077 = vpop.f32.mrf.mxu0
  %v1078 = vadd.f32 0.0, %v1077
  %v1079 = vpop.f32.mrf.mxu0
  %v1080 = vadd.f32 0.0, %v1079
  %1081 = vmatmul.bf16.gmra.mxu0 %v1045
  %v1082 = vpop.f32.mrf.mxu0
  %v1083 = vadd.f32 0.0, %v1082
  %v1084 = vpop.f32.mrf.mxu0
  %v1085 = vadd.f32 0.0, %v1084
  %1086 = vmatmul.bf16.gmra.mxu0 %v1048
  %v1087 = vpop.f32.mrf.mxu0
  %v1088 = vadd.f32 0.0, %v1087
  %v1089 = vpop.f32.mrf.mxu0
  %v1090 = vadd.f32 0.0, %v1089
  %1091 = vmatmul.bf16.gmra.mxu0 %v1051
  %v1092 = vpop.f32.mrf.mxu0
  %v1093 = vadd.f32 0.0, %v1092
  %v1094 = vpop.f32.mrf.mxu0
  %v1095 = vadd.f32 0.0, %v1094
  %1096 = vmatmul.bf16.gmra.mxu0 %v1054
  %v1097 = vpop.f32.mrf.mxu0
  %v1098 = vadd.f32 0.0, %v1097
  %v1099 = vpop.f32.mrf.mxu0
  %v1100 = vadd.f32 0.0, %v1099
  %1101 = vmatmul.bf16.gmra.mxu0 %v1057
  %v1102 = vpop.f32.mrf.mxu0
  %v1103 = vadd.f32 0.0, %v1102
  %v1104 = vpop.f32.mrf.mxu0
  %v1105 = vadd.f32 0.0, %v1104
  %1106 = vmatmul.bf16.gmra.mxu0 %v1060
  %v1107 = vpop.f32.mrf.mxu0
  %v1108 = vadd.f32 0.0, %v1107
  %v1109 = vpop.f32.mrf.mxu0
  %v1110 = vadd.f32 0.0, %v1109
  %1111 = vmatmul.bf16.gmra.mxu0 %v1063
  %v1112 = vpop.f32.mrf.mxu0
  %v1113 = vadd.f32 0.0, %v1112
  %v1114 = vpop.f32.mrf.mxu0
  %v1115 = vadd.f32 0.0, %v1114
  %1116 = vdwg.mxu0
  %v1117 = vadd.f32 %v999, %v1078
  %v1118 = vadd.f32 %v1000, %v1080
  %v1119 = vadd.f32 %v1001, %v1083
  %v1120 = vadd.f32 %v1002, %v1085
  %v1121 = vadd.f32 %v1003, %v1088
  %v1122 = vadd.f32 %v1004, %v1090
  %v1123 = vadd.f32 %v1005, %v1093
  %v1124 = vadd.f32 %v1006, %v1095
  %v1125 = vadd.f32 %v1007, %v1098
  %v1126 = vadd.f32 %v1008, %v1100
  %v1127 = vadd.f32 %v1009, %v1103
  %v1128 = vadd.f32 %v1010, %v1105
  %v1129 = vadd.f32 %v1011, %v1108
  %v1130 = vadd.f32 %v1012, %v1110
  %v1131 = vadd.f32 %v1013, %v1113
  %v1132 = vadd.f32 %v1014, %v1115
  %vm1133 = vcmask 64512
  %v1134 = vsel %vm1133, %v1117, 0.0
  %v1135 = vsel %vm1133, %v1118, 0.0
  %v1136 = vadd.f32 %v1134, %v1135
  %v1137 = vsel %vm1133, %v1119, 0.0
  %v1138 = vadd.f32 %v1136, %v1137
  %v1139 = vsel %vm1133, %v1120, 0.0
  %v1140 = vadd.f32 %v1138, %v1139
  %v1141 = vsel %vm1133, %v1121, 0.0
  %v1142 = vadd.f32 %v1140, %v1141
  %v1143 = vsel %vm1133, %v1122, 0.0
  %v1144 = vadd.f32 %v1142, %v1143
  %v1145 = vsel %vm1133, %v1123, 0.0
  %v1146 = vadd.f32 %v1144, %v1145
  %v1147 = vsel %vm1133, %v1124, 0.0
  %v1148 = vadd.f32 %v1146, %v1147
  %v1149 = vsel %vm1133, %v1125, 0.0
  %v1150 = vadd.f32 %v1148, %v1149
  %v1151 = vsel %vm1133, %v1126, 0.0
  %v1152 = vadd.f32 %v1150, %v1151
  %v1153 = vsel %vm1133, %v1127, 0.0
  %v1154 = vadd.f32 %v1152, %v1153
  %v1155 = vsel %vm1133, %v1128, 0.0
  %v1156 = vadd.f32 %v1154, %v1155
  %v1157 = vsel %vm1133, %v1129, 0.0
  %v1158 = vadd.f32 %v1156, %v1157
  %v1159 = vsel %vm1133, %v1130, 0.0
  %v1160 = vadd.f32 %v1158, %v1159
  %v1161 = vsel %vm1133, %v1131, 0.0
  %v1162 = vadd.f32 %v1160, %v1161
  %v1163 = vsel %vm1133, %v1132, 0.0
  %v1164 = vadd.f32 %v1162, %v1163
  %v1165 = vrot.slane %v1164, 4
  %v1166 = vadd.f32 %v1164, %v1165
  %v1167 = vrot.slane %v1166, 2
  %v1168 = vadd.f32 %v1166, %v1167
  %v1169 = vrot.slane %v1168, 1
  %v1170 = vadd.f32 %v1168, %v1169
  %v1171 = vrcp.pop 128.0
  %v1172 = vmul.f32 128.0, %v1171
  %v1173 = vsub.f32 1.0, %v1172
  %v1174 = vmul.f32 %v1171, %v1173
  %v1175 = vadd.f32 %v1171, %v1174
  %vm1176 = vweird.f32 %v1171
  %v1177 = vsel %vm1176, %v1171, %v1175
  %v1178 = vmul.f32 %v1170, %v1177
  %v1179 = vsub.f32 %v1117, %v1178
  %v1180 = vsub.f32 %v1118, %v1178
  %v1181 = vsub.f32 %v1119, %v1178
  %v1182 = vsub.f32 %v1120, %v1178
  %v1183 = vsub.f32 %v1121, %v1178
  %v1184 = vsub.f32 %v1122, %v1178
  %v1185 = vsub.f32 %v1123, %v1178
  %v1186 = vsub.f32 %v1124, %v1178
  %v1187 = vsub.f32 %v1125, %v1178
  %v1188 = vsub.f32 %v1126, %v1178
  %v1189 = vsub.f32 %v1127, %v1178
  %v1190 = vsub.f32 %v1128, %v1178
  %v1191 = vsub.f32 %v1129, %v1178
  %v1192 = vsub.f32 %v1130, %v1178
  %v1193 = vsub.f32 %v1131, %v1178
  %v1194 = vsub.f32 %v1132, %v1178
  %v1195 = vmul.f32 %v1179, %v1179
  %v1196 = vmul.f32 %v1180, %v1180
  %v1197 = vmul.f32 %v1181, %v1181
  %v1198 = vmul.f32 %v1182, %v1182
  %v1199 = vmul.f32 %v1183, %v1183
  %v1200 = vmul.f32 %v1184, %v1184
  %v1201 = vmul.f32 %v1185, %v1185
  %v1202 = vmul.f32 %v1186, %v1186
  %v1203 = vmul.f32 %v1187, %v1187
  %v1204 = vmul.f32 %v1188, %v1188
  %v1205 = vmul.f32 %v1189, %v1189
  %v1206 = vmul.f32 %v1190, %v1190
  %v1207 = vmul.f32 %v1191, %v1191
  %v1208 = vmul.f32 %v1192, %v1192
  %v1209 = vmul.f32 %v1193, %v1193
  %v1210 = vmul.f32 %v1194, %v1194
  %v1211 = vsel %vm1133, %v1195, 0.0
  %v1212 = vsel %vm1133, %v1196, 0.0
  %v1213 = vadd.f32 %v1211, %v1212
  %v1214 = vsel %vm1133, %v1197, 0.0
  %v1215 = vadd.f32 %v1213, %v1214
  %v1216 = vsel %vm1133, %v1198, 0.0
  %v1217 = vadd.f32 %v1215, %v1216
  %v1218 = vsel %vm1133, %v1199, 0.0
  %v1219 = vadd.f32 %v1217, %v1218
  %v1220 = vsel %vm1133, %v1200, 0.0
  %v1221 = vadd.f32 %v1219, %v1220
  %v1222 = vsel %vm1133, %v1201, 0.0
  %v1223 = vadd.f32 %v1221, %v1222
  %v1224 = vsel %vm1133, %v1202, 0.0
  %v1225 = vadd.f32 %v1223, %v1224
  %v1226 = vsel %vm1133, %v1203, 0.0
  %v1227 = vadd.f32 %v1225, %v1226
  %v1228 = vsel %vm1133, %v1204, 0.0
  %v1229 = vadd.f32 %v1227, %v1228
  %v1230 = vsel %vm1133, %v1205, 0.0
  %v1231 = vadd.f32 %v1229, %v1230
  %v1232 = vsel %vm1133, %v1206, 0.0
  %v1233 = vadd.f32 %v1231, %v1232
  %v1234 = vsel %vm1133, %v1207, 0.0
  %v1235 = vadd.f32 %v1233, %v1234
  %v1236 = vsel %vm1133, %v1208, 0.0
  %v1237 = vadd.f32 %v1235, %v1236
  %v1238 = vsel %vm1133, %v1209, 0.0
  %v1239 = vadd.f32 %v1237, %v1238
  %v1240 = vsel %vm1133, %v1210, 0.0
  %v1241 = vadd.f32 %v1239, %v1240
  %v1242 = vrot.slane %v1241, 4
  %v1243 = vadd.f32 %v1241, %v1242
  %v1244 = vrot.slane %v1243, 2
  %v1245 = vadd.f32 %v1243, %v1244
  %v1246 = vrot.slane %v1245, 1
  %v1247 = vadd.f32 %v1245, %v1246
  %v1248 = vmul.f32 %v1247, %v1177
  %v1249 = vadd.f32 %v1248, 1e-05
  %v1250 = vrsqrt.pop %v1249
  %v1251 = vmul.f32 %v1250, %v1249
  %v1252 = vmul.f32 %v1251, %v1250
  %v1253 = vmul.f32 0.5, %v1252
  %v1254 = vsub.f32 1.5, %v1253
  %v1255 = vmul.f32 %v1250, %v1254
  %vm1256 = vweird.f32 %v1249
  %vm1257 = vweird.f32 %v1250
  %vm1258 = vmor %vm1256, %vm1257
  %v1259 = vsel %vm1258, %v1250, %v1255
  %v1260 = vmul.f32 %v1179, %v1259
  %v1261 = vmul.f32 %v1180, %v1259
  %v1262 = vmul.f32 %v1181, %v1259
  %v1263 = vmul.f32 %v1182, %v1259
  %v1264 = vmul.f32 %v1183, %v1259
  %v1265 = vmul.f32 %v1184, %v1259
  %v1266 = vmul.f32 %v1185, %v1259
  %v1267 = vmul.f32 %v1186, %v1259
  %v1268 = vmul.f32 %v1187, %v1259
  %v1269 = vmul.f32 %v1188, %v1259
  %v1270 = vmul.f32 %v1189, %v1259
  %v1271 = vmul.f32 %v1190, %v1259
  %v1272 = vmul.f32 %v1191, %v1259
  %v1273 = vmul.f32 %v1192, %v1259
  %v1274 = vmul.f32 %v1193, %v1259
  %v1275 = vmul.f32 %v1194, %v1259
  %v1276 = vld [vmem:[%s2] sm:$0x1]
  %v1278 = vperm.slane %v1276, 0
  %v1280 = vmul.f32 %v1260, %v1278
  %v1281 = vmul.f32 %v1261, %v1278
  %v1282 = vmul.f32 %v1262, %v1278
  %v1283 = vmul.f32 %v1263, %v1278
  %v1284 = vmul.f32 %v1264, %v1278
  %v1285 = vmul.f32 %v1265, %v1278
  %v1286 = vmul.f32 %v1266, %v1278
  %v1287 = vmul.f32 %v1267, %v1278
  %v1288 = vmul.f32 %v1268, %v1278
  %v1289 = vmul.f32 %v1269, %v1278
  %v1290 = vmul.f32 %v1270, %v1278
  %v1291 = vmul.f32 %v1271, %v1278
  %v1292 = vmul.f32 %v1272, %v1278
  %v1293 = vmul.f32 %v1273, %v1278
  %v1294 = vmul.f32 %v1274, %v1278
  %v1295 = vmul.f32 %v1275, %v1278
  %v1296 = vld [vmem:[%s3] sm:$0x1]
  %v1298 = vperm.slane %v1296, 0
  %v1300 = vadd.f32 %v1280, %v1298
  %v1301 = vadd.f32 %v1281, %v1298
  %v1302 = vadd.f32 %v1282, %v1298
  %v1303 = vadd.f32 %v1283, %v1298
  %v1304 = vadd.f32 %v1284, %v1298
  %v1305 = vadd.f32 %v1285, %v1298
  %v1306 = vadd.f32 %v1286, %v1298
  %v1307 = vadd.f32 %v1287, %v1298
  %v1308 = vadd.f32 %v1288, %v1298
  %v1309 = vadd.f32 %v1289, %v1298
  %v1310 = vadd.f32 %v1290, %v1298
  %v1311 = vadd.f32 %v1291, %v1298
  %v1312 = vadd.f32 %v1292, %v1298
  %v1313 = vadd.f32 %v1293, %v1298
  %v1314 = vadd.f32 %v1294, %v1298
  %v1315 = vadd.f32 %v1295, %v1298
  %v1316 = vmax.f32 %v1300, 0.0
  %v1317 = vmax.f32 %v1301, 0.0
  %v1318 = vmax.f32 %v1302, 0.0
  %v1319 = vmax.f32 %v1303, 0.0
  %v1320 = vmax.f32 %v1304, 0.0
  %v1321 = vmax.f32 %v1305, 0.0
  %v1322 = vmax.f32 %v1306, 0.0
  %v1323 = vmax.f32 %v1307, 0.0
  %v1324 = vmax.f32 %v1308, 0.0
  %v1325 = vmax.f32 %v1309, 0.0
  %v1326 = vmax.f32 %v1310, 0.0
  %v1327 = vmax.f32 %v1311, 0.0
  %v1328 = vmax.f32 %v1312, 0.0
  %v1329 = vmax.f32 %v1313, 0.0
  %v1330 = vmax.f32 %v1314, 0.0
  %v1331 = vmax.f32 %v1315, 0.0
  %1332 = vst.msk [vmem:[#allocation3] sm:$0xff] %vm1133, 0.0
  %vm1333 = vcmask 58368
  %1334 = vst.msk [vmem:[#allocation3 + $0x8] sm:$0x3] %vm1333, 0.0
  %1335 = vst.msk [vmem:[#allocation3 + $0x10] sm:$0xff] %vm1133, 0.0
  %1336 = vst.msk [vmem:[#allocation3 + $0x18] sm:$0x3] %vm1333, 0.0
  %1337 = vst.msk [vmem:[#allocation3 + $0x20] sm:$0xff] %vm1133, 0.0
  %1338 = vst.msk [vmem:[#allocation3 + $0x28] sm:$0x3] %vm1333, 0.0
  %1339 = vst.msk [vmem:[#allocation3 + $0x30] sm:$0xff] %vm1133, 0.0
  %1340 = vst.msk [vmem:[#allocation3 + $0x38] sm:$0x3] %vm1333, 0.0
  %1341 = vst.msk [vmem:[#allocation3 + $0x40] sm:$0xff] %vm1133, 0.0
  %1342 = vst.msk [vmem:[#allocation3 + $0x48] sm:$0x3] %vm1333, 0.0
  %1343 = vst.msk [vmem:[#allocation3 + $0x50] sm:$0xff] %vm1133, 0.0
  %1344 = vst.msk [vmem:[#allocation3 + $0x58] sm:$0x3] %vm1333, 0.0
  %1345 = vst.msk [vmem:[#allocation3 + $0x60] sm:$0xff] %vm1133, 0.0
  %1346 = vst.msk [vmem:[#allocation3 + $0x68] sm:$0x3] %vm1333, 0.0
  %1347 = vst.msk [vmem:[#allocation3 + $0x70] sm:$0xff] %vm1133, 0.0
  %1348 = vst.msk [vmem:[#allocation3 + $0x78] sm:$0x3] %vm1333, 0.0
  %1349 = vst.msk [vmem:[#allocation3 + $0x80] sm:$0xff] %vm1133, 0.0
  %1350 = vst.msk [vmem:[#allocation3 + $0x88] sm:$0x3] %vm1333, 0.0
  %1351 = vst.msk [vmem:[#allocation3 + $0x90] sm:$0xff] %vm1133, 0.0
  %1352 = vst.msk [vmem:[#allocation3 + $0x98] sm:$0x3] %vm1333, 0.0
  %1353 = vst.msk [vmem:[#allocation3 + $0xa0] sm:$0xff] %vm1133, 0.0
  %1354 = vst.msk [vmem:[#allocation3 + $0xa8] sm:$0x3] %vm1333, 0.0
  %1355 = vst.msk [vmem:[#allocation3 + $0xb0] sm:$0xff] %vm1133, 0.0
  %1356 = vst.msk [vmem:[#allocation3 + $0xb8] sm:$0x3] %vm1333, 0.0
  %1357 = vst.msk [vmem:[#allocation3 + $0xc0] sm:$0xff] %vm1133, 0.0
  %1358 = vst.msk [vmem:[#allocation3 + $0xc8] sm:$0x3] %vm1333, 0.0
  %1359 = vst.msk [vmem:[#allocation3 + $0xd0] sm:$0xff] %vm1133, 0.0
  %1360 = vst.msk [vmem:[#allocation3 + $0xd8] sm:$0x3] %vm1333, 0.0
  %1361 = vst.msk [vmem:[#allocation3 + $0xe0] sm:$0xff] %vm1133, 0.0
  %1362 = vst.msk [vmem:[#allocation3 + $0xe8] sm:$0x3] %vm1333, 0.0
  %1363 = vst.msk [vmem:[#allocation3 + $0xf0] sm:$0xff] %vm1133, 0.0
  %1364 = vst.msk [vmem:[#allocation3 + $0xf8] sm:$0x3] %vm1333, 0.0
  %1365 = vst.msk [vmem:[#allocation3 + $0x100] sm:$0xff] %vm1133, 0.0
  %1366 = vst.msk [vmem:[#allocation3 + $0x108] sm:$0x3] %vm1333, 0.0
  %1367 = vst.msk [vmem:[#allocation3 + $0x110] sm:$0xff] %vm1133, 0.0
  %1368 = vst.msk [vmem:[#allocation3 + $0x118] sm:$0x3] %vm1333, 0.0
  %1369 = vst.msk [vmem:[#allocation3 + $0x120] sm:$0xff] %vm1133, 0.0
  %1370 = vst.msk [vmem:[#allocation3 + $0x128] sm:$0x3] %vm1333, 0.0
  %1371 = vst.msk [vmem:[#allocation3 + $0x130] sm:$0xff] %vm1133, 0.0
  %1372 = vst.msk [vmem:[#allocation3 + $0x138] sm:$0x3] %vm1333, 0.0
  %s1373 = scalar_lea.vmem [#allocation3], 16
  %1374 = vst.msk [vmem:[%s1373 + $0x1] sm:$0xff] %vm1133, %v1316
  %1375 = vst.msk [vmem:[%s1373 + $0x11] sm:$0xff] %vm1133, %v1317
  %1376 = vst.msk [vmem:[%s1373 + $0x21] sm:$0xff] %vm1133, %v1318
  %1377 = vst.msk [vmem:[%s1373 + $0x31] sm:$0xff] %vm1133, %v1319
  %1378 = vst.msk [vmem:[%s1373 + $0x41] sm:$0xff] %vm1133, %v1320
  %1379 = vst.msk [vmem:[%s1373 + $0x51] sm:$0xff] %vm1133, %v1321
  %1380 = vst.msk [vmem:[%s1373 + $0x61] sm:$0xff] %vm1133, %v1322
  %1381 = vst.msk [vmem:[%s1373 + $0x71] sm:$0xff] %vm1133, %v1323
  %1382 = vst.msk [vmem:[%s1373 + $0xa1] sm:$0xff] %vm1133, %v1324
  %1383 = vst.msk [vmem:[%s1373 + $0xb1] sm:$0xff] %vm1133, %v1325
  %1384 = vst.msk [vmem:[%s1373 + $0xc1] sm:$0xff] %vm1133, %v1326
  %1385 = vst.msk [vmem:[%s1373 + $0xd1] sm:$0xff] %vm1133, %v1327
  %1386 = vst.msk [vmem:[%s1373 + $0xe1] sm:$0xff] %vm1133, %v1328
  %1387 = vst.msk [vmem:[%s1373 + $0xf1] sm:$0xff] %vm1133, %v1329
  %1388 = vst.msk [vmem:[%s1373 + $0x101] sm:$0xff] %vm1133, %v1330
  %1389 = vst.msk [vmem:[%s1373 + $0x111] sm:$0xff] %vm1133, %v1331
  %v1390 = vld [vmem:[#allocation3] sm:$0xff]
  %v1391 = vld [vmem:[#allocation3 + $0x10] sm:$0xff]
  %v1392 = vld [vmem:[#allocation3 + $0x20] sm:$0xff]
  %v1393 = vld [vmem:[#allocation3 + $0x30] sm:$0xff]
  %v1394 = vld [vmem:[#allocation3 + $0x40] sm:$0xff]
  %v1395 = vld [vmem:[#allocation3 + $0x50] sm:$0xff]
  %v1396 = vld [vmem:[#allocation3 + $0x60] sm:$0xff]
  %v1397 = vld [vmem:[#allocation3 + $0x70] sm:$0xff]
  %v1398 = vld [vmem:[#allocation3 + $0xa0] sm:$0xff]
  %v1399 = vld [vmem:[#allocation3 + $0xb0] sm:$0xff]
  %v1400 = vld [vmem:[#allocation3 + $0xc0] sm:$0xff]
  %v1401 = vld [vmem:[#allocation3 + $0xd0] sm:$0xff]
  %v1402 = vld [vmem:[#allocation3 + $0xe0] sm:$0xff]
  %v1403 = vld [vmem:[#allocation3 + $0xf0] sm:$0xff]
  %v1404 = vld [vmem:[#allocation3 + $0x100] sm:$0xff]
  %v1405 = vld [vmem:[#allocation3 + $0x110] sm:$0xff]
  %v1406 = vpack.c.bf16 %v1391, %v1390
  %v1407 = vpack.c.bf16 %v1393, %v1392
  %v1408 = vpack.c.bf16 %v1395, %v1394
  %v1409 = vpack.c.bf16 %v1397, %v1396
  %v1410 = vpack.c.bf16 %v1399, %v1398
  %v1411 = vpack.c.bf16 %v1401, %v1400
  %v1412 = vpack.c.bf16 %v1403, %v1402
  %v1413 = vpack.c.bf16 %v1405, %v1404
  %v1414 = vld [vmem:[%s4] sm:$0xf]
  %v1415 = vld [vmem:[#allocation3 + $0x1] sm:$0xff]
  %v1416 = vld [vmem:[#allocation3 + $0x11] sm:$0xff]
  %v1417 = vld [vmem:[#allocation3 + $0x21] sm:$0xff]
  %v1418 = vld [vmem:[#allocation3 + $0x31] sm:$0xff]
  %v1419 = vld [vmem:[#allocation3 + $0x41] sm:$0xff]
  %v1420 = vld [vmem:[#allocation3 + $0x51] sm:$0xff]
  %v1421 = vld [vmem:[#allocation3 + $0x61] sm:$0xff]
  %v1422 = vld [vmem:[#allocation3 + $0x71] sm:$0xff]
  %v1423 = vld [vmem:[#allocation3 + $0xa1] sm:$0xff]
  %v1424 = vld [vmem:[#allocation3 + $0xb1] sm:$0xff]
  %v1425 = vld [vmem:[#allocation3 + $0xc1] sm:$0xff]
  %v1426 = vld [vmem:[#allocation3 + $0xd1] sm:$0xff]
  %v1427 = vld [vmem:[#allocation3 + $0xe1] sm:$0xff]
  %v1428 = vld [vmem:[#allocation3 + $0xf1] sm:$0xff]
  %v1429 = vld [vmem:[#allocation3 + $0x101] sm:$0xff]
  %v1430 = vld [vmem:[#allocation3 + $0x111] sm:$0xff]
  %v1431 = vpack.c.bf16 %v1416, %v1415
  %v1432 = vpack.c.bf16 %v1418, %v1417
  %v1433 = vpack.c.bf16 %v1420, %v1419
  %v1434 = vpack.c.bf16 %v1422, %v1421
  %v1435 = vpack.c.bf16 %v1424, %v1423
  %v1436 = vpack.c.bf16 %v1426, %v1425
  %v1437 = vpack.c.bf16 %v1428, %v1427
  %v1438 = vpack.c.bf16 %v1430, %v1429
  %s1439 = scalar_lea.vmem %s4, 4
  %v1440 = vld [vmem:[%s1439] sm:$0xf]
  %v1442 = vsel %vm1133, %v1431, 0
  %v1445 = vsel %vm1133, %v1432, 0
  %v1448 = vsel %vm1133, %v1433, 0
  %v1451 = vsel %vm1133, %v1434, 0
  %v1454 = vsel %vm1133, %v1435, 0
  %v1457 = vsel %vm1133, %v1436, 0
  %v1460 = vsel %vm1133, %v1437, 0
  %v1463 = vsel %vm1133, %v1438, 0
  %vm1465 = vcmask 1043456
  %v1467 = vsel %vm1465, %v1440, 0
  %1469 = vmatpush.bf16.msra.mxu0 0
  %1470 = vmatpush.bf16.msra.mxu0 0
  %1471 = vmatpush.bf16.msra.mxu0 0
  %1472 = vmatpush.bf16.msra.mxu0 0
  %1473 = vmatpush.bf16.msra.mxu0 0
  %1474 = vmatpush.bf16.msra.mxu0 0
  %1475 = vmatpush.bf16.msra.mxu0 0
  %1476 = vmatpush.bf16.msra.mxu0 %v1467
  %1477 = vmatmul.bf16.gmra.mxu0 %v1442
  %v1478 = vpop.f32.mrf.mxu0
  %v1479 = vadd.f32 0.0, %v1478
  %v1480 = vpop.f32.mrf.mxu0
  %v1481 = vadd.f32 0.0, %v1480
  %1482 = vmatmul.bf16.gmra.mxu0 %v1445
  %v1483 = vpop.f32.mrf.mxu0
  %v1484 = vadd.f32 0.0, %v1483
  %v1485 = vpop.f32.mrf.mxu0
  %v1486 = vadd.f32 0.0, %v1485
  %1487 = vmatmul.bf16.gmra.mxu0 %v1448
  %v1488 = vpop.f32.mrf.mxu0
  %v1489 = vadd.f32 0.0, %v1488
  %v1490 = vpop.f32.mrf.mxu0
  %v1491 = vadd.f32 0.0, %v1490
  %1492 = vmatmul.bf16.gmra.mxu0 %v1451
  %v1493 = vpop.f32.mrf.mxu0
  %v1494 = vadd.f32 0.0, %v1493
  %v1495 = vpop.f32.mrf.mxu0
  %v1496 = vadd.f32 0.0, %v1495
  %1497 = vmatmul.bf16.gmra.mxu0 %v1454
  %v1498 = vpop.f32.mrf.mxu0
  %v1499 = vadd.f32 0.0, %v1498
  %v1500 = vpop.f32.mrf.mxu0
  %v1501 = vadd.f32 0.0, %v1500
  %1502 = vmatmul.bf16.gmra.mxu0 %v1457
  %v1503 = vpop.f32.mrf.mxu0
  %v1504 = vadd.f32 0.0, %v1503
  %v1505 = vpop.f32.mrf.mxu0
  %v1506 = vadd.f32 0.0, %v1505
  %1507 = vmatmul.bf16.gmra.mxu0 %v1460
  %v1508 = vpop.f32.mrf.mxu0
  %v1509 = vadd.f32 0.0, %v1508
  %v1510 = vpop.f32.mrf.mxu0
  %v1511 = vadd.f32 0.0, %v1510
  %1512 = vmatmul.bf16.gmra.mxu0 %v1463
  %v1513 = vpop.f32.mrf.mxu0
  %v1514 = vadd.f32 0.0, %v1513
  %v1515 = vpop.f32.mrf.mxu0
  %v1516 = vadd.f32 0.0, %v1515
  %1517 = vdwg.mxu0
  %v1519 = vsel %vm1133, %v1406, 0
  %v1522 = vsel %vm1133, %v1407, 0
  %v1525 = vsel %vm1133, %v1408, 0
  %v1528 = vsel %vm1133, %v1409, 0
  %v1531 = vsel %vm1133, %v1410, 0
  %v1534 = vsel %vm1133, %v1411, 0
  %v1537 = vsel %vm1133, %v1412, 0
  %v1540 = vsel %vm1133, %v1413, 0
  %v1543 = vsel %vm1465, %v1414, 0
  %1545 = vmatpush.bf16.msra.mxu0 0
  %1546 = vmatpush.bf16.msra.mxu0 0
  %1547 = vmatpush.bf16.msra.mxu0 0
  %1548 = vmatpush.bf16.msra.mxu0 0
  %1549 = vmatpush.bf16.msra.mxu0 0
  %1550 = vmatpush.bf16.msra.mxu0 0
  %1551 = vmatpush.bf16.msra.mxu0 0
  %1552 = vmatpush.bf16.msra.mxu0 %v1543
  %1553 = vmatmul.bf16.gmra.mxu0 %v1519
  %v1554 = vpop.f32.mrf.mxu0
  %v1555 = vadd.f32 %v1479, %v1554
  %v1556 = vpop.f32.mrf.mxu0
  %v1557 = vadd.f32 %v1481, %v1556
  %1558 = vmatmul.bf16.gmra.mxu0 %v1522
  %v1559 = vpop.f32.mrf.mxu0
  %v1560 = vadd.f32 %v1484, %v1559
  %v1561 = vpop.f32.mrf.mxu0
  %v1562 = vadd.f32 %v1486, %v1561
  %1563 = vmatmul.bf16.gmra.mxu0 %v1525
  %v1564 = vpop.f32.mrf.mxu0
  %v1565 = vadd.f32 %v1489, %v1564
  %v1566 = vpop.f32.mrf.mxu0
  %v1567 = vadd.f32 %v1491, %v1566
  %1568 = vmatmul.bf16.gmra.mxu0 %v1528
  %v1569 = vpop.f32.mrf.mxu0
  %v1570 = vadd.f32 %v1494, %v1569
  %v1571 = vpop.f32.mrf.mxu0
  %v1572 = vadd.f32 %v1496, %v1571
  %1573 = vmatmul.bf16.gmra.mxu0 %v1531
  %v1574 = vpop.f32.mrf.mxu0
  %v1575 = vadd.f32 %v1499, %v1574
  %v1576 = vpop.f32.mrf.mxu0
  %v1577 = vadd.f32 %v1501, %v1576
  %1578 = vmatmul.bf16.gmra.mxu0 %v1534
  %v1579 = vpop.f32.mrf.mxu0
  %v1580 = vadd.f32 %v1504, %v1579
  %v1581 = vpop.f32.mrf.mxu0
  %v1582 = vadd.f32 %v1506, %v1581
  %1583 = vmatmul.bf16.gmra.mxu0 %v1537
  %v1584 = vpop.f32.mrf.mxu0
  %v1585 = vadd.f32 %v1509, %v1584
  %v1586 = vpop.f32.mrf.mxu0
  %v1587 = vadd.f32 %v1511, %v1586
  %1588 = vmatmul.bf16.gmra.mxu0 %v1540
  %v1589 = vpop.f32.mrf.mxu0
  %v1590 = vadd.f32 %v1514, %v1589
  %v1591 = vpop.f32.mrf.mxu0
  %v1592 = vadd.f32 %v1516, %v1591
  %1593 = vdwg.mxu0
  %v1594 = vld [vmem:[#allocation3 + $0x2] sm:$0xff]
  %v1595 = vld [vmem:[#allocation3 + $0x12] sm:$0xff]
  %v1596 = vld [vmem:[#allocation3 + $0x22] sm:$0xff]
  %v1597 = vld [vmem:[#allocation3 + $0x32] sm:$0xff]
  %v1598 = vld [vmem:[#allocation3 + $0x42] sm:$0xff]
  %v1599 = vld [vmem:[#allocation3 + $0x52] sm:$0xff]
  %v1600 = vld [vmem:[#allocation3 + $0x62] sm:$0xff]
  %v1601 = vld [vmem:[#allocation3 + $0x72] sm:$0xff]
  %v1602 = vld [vmem:[#allocation3 + $0xa2] sm:$0xff]
  %v1603 = vld [vmem:[#allocation3 + $0xb2] sm:$0xff]
  %v1604 = vld [vmem:[#allocation3 + $0xc2] sm:$0xff]
  %v1605 = vld [vmem:[#allocation3 + $0xd2] sm:$0xff]
  %v1606 = vld [vmem:[#allocation3 + $0xe2] sm:$0xff]
  %v1607 = vld [vmem:[#allocation3 + $0xf2] sm:$0xff]
  %v1608 = vld [vmem:[#allocation3 + $0x102] sm:$0xff]
  %v1609 = vld [vmem:[#allocation3 + $0x112] sm:$0xff]
  %v1610 = vpack.c.bf16 %v1595, %v1594
  %v1611 = vpack.c.bf16 %v1597, %v1596
  %v1612 = vpack.c.bf16 %v1599, %v1598
  %v1613 = vpack.c.bf16 %v1601, %v1600
  %v1614 = vpack.c.bf16 %v1603, %v1602
  %v1615 = vpack.c.bf16 %v1605, %v1604
  %v1616 = vpack.c.bf16 %v1607, %v1606
  %v1617 = vpack.c.bf16 %v1609, %v1608
  %s1618 = scalar_lea.vmem %s4, 8
  %v1619 = vld [vmem:[%s1618] sm:$0xf]
  %v1621 = vsel %vm1133, %v1610, 0
  %v1624 = vsel %vm1133, %v1611, 0
  %v1627 = vsel %vm1133, %v1612, 0
  %v1630 = vsel %vm1133, %v1613, 0
  %v1633 = vsel %vm1133, %v1614, 0
  %v1636 = vsel %vm1133, %v1615, 0
  %v1639 = vsel %vm1133, %v1616, 0
  %v1642 = vsel %vm1133, %v1617, 0
  %v1645 = vsel %vm1465, %v1619, 0
  %1647 = vmatpush.bf16.msra.mxu0 0
  %1648 = vmatpush.bf16.msra.mxu0 0
  %1649 = vmatpush.bf16.msra.mxu0 0
  %1650 = vmatpush.bf16.msra.mxu0 0
  %1651 = vmatpush.bf16.msra.mxu0 0
  %1652 = vmatpush.bf16.msra.mxu0 0
  %1653 = vmatpush.bf16.msra.mxu0 0
  %1654 = vmatpush.bf16.msra.mxu0 %v1645
  %1655 = vmatmul.bf16.gmra.mxu0 %v1621
  %v1656 = vpop.f32.mrf.mxu0
  %v1657 = vadd.f32 0.0, %v1656
  %v1658 = vpop.f32.mrf.mxu0
  %v1659 = vadd.f32 0.0, %v1658
  %1660 = vmatmul.bf16.gmra.mxu0 %v1624
  %v1661 = vpop.f32.mrf.mxu0
  %v1662 = vadd.f32 0.0, %v1661
  %v1663 = vpop.f32.mrf.mxu0
  %v1664 = vadd.f32 0.0, %v1663
  %1665 = vmatmul.bf16.gmra.mxu0 %v1627
  %v1666 = vpop.f32.mrf.mxu0
  %v1667 = vadd.f32 0.0, %v1666
  %v1668 = vpop.f32.mrf.mxu0
  %v1669 = vadd.f32 0.0, %v1668
  %1670 = vmatmul.bf16.gmra.mxu0 %v1630
  %v1671 = vpop.f32.mrf.mxu0
  %v1672 = vadd.f32 0.0, %v1671
  %v1673 = vpop.f32.mrf.mxu0
  %v1674 = vadd.f32 0.0, %v1673
  %1675 = vmatmul.bf16.gmra.mxu0 %v1633
  %v1676 = vpop.f32.mrf.mxu0
  %v1677 = vadd.f32 0.0, %v1676
  %v1678 = vpop.f32.mrf.mxu0
  %v1679 = vadd.f32 0.0, %v1678
  %1680 = vmatmul.bf16.gmra.mxu0 %v1636
  %v1681 = vpop.f32.mrf.mxu0
  %v1682 = vadd.f32 0.0, %v1681
  %v1683 = vpop.f32.mrf.mxu0
  %v1684 = vadd.f32 0.0, %v1683
  %1685 = vmatmul.bf16.gmra.mxu0 %v1639
  %v1686 = vpop.f32.mrf.mxu0
  %v1687 = vadd.f32 0.0, %v1686
  %v1688 = vpop.f32.mrf.mxu0
  %v1689 = vadd.f32 0.0, %v1688
  %1690 = vmatmul.bf16.gmra.mxu0 %v1642
  %v1691 = vpop.f32.mrf.mxu0
  %v1692 = vadd.f32 0.0, %v1691
  %v1693 = vpop.f32.mrf.mxu0
  %v1694 = vadd.f32 0.0, %v1693
  %1695 = vdwg.mxu0
  %v1696 = vadd.f32 %v1555, %v1657
  %v1697 = vadd.f32 %v1557, %v1659
  %v1698 = vadd.f32 %v1560, %v1662
  %v1699 = vadd.f32 %v1562, %v1664
  %v1700 = vadd.f32 %v1565, %v1667
  %v1701 = vadd.f32 %v1567, %v1669
  %v1702 = vadd.f32 %v1570, %v1672
  %v1703 = vadd.f32 %v1572, %v1674
  %v1704 = vadd.f32 %v1575, %v1677
  %v1705 = vadd.f32 %v1577, %v1679
  %v1706 = vadd.f32 %v1580, %v1682
  %v1707 = vadd.f32 %v1582, %v1684
  %v1708 = vadd.f32 %v1585, %v1687
  %v1709 = vadd.f32 %v1587, %v1689
  %v1710 = vadd.f32 %v1590, %v1692
  %v1711 = vadd.f32 %v1592, %v1694
  %v1712 = vld [vmem:[%s1373] sm:$0xff]
  %v1713 = vld [vmem:[%s1373 + $0x10] sm:$0xff]
  %v1714 = vld [vmem:[%s1373 + $0x20] sm:$0xff]
  %v1715 = vld [vmem:[%s1373 + $0x30] sm:$0xff]
  %v1716 = vld [vmem:[%s1373 + $0x40] sm:$0xff]
  %v1717 = vld [vmem:[%s1373 + $0x50] sm:$0xff]
  %v1718 = vld [vmem:[%s1373 + $0x60] sm:$0xff]
  %v1719 = vld [vmem:[%s1373 + $0x70] sm:$0xff]
  %v1720 = vld [vmem:[%s1373 + $0xa0] sm:$0xff]
  %v1721 = vld [vmem:[%s1373 + $0xb0] sm:$0xff]
  %v1722 = vld [vmem:[%s1373 + $0xc0] sm:$0xff]
  %v1723 = vld [vmem:[%s1373 + $0xd0] sm:$0xff]
  %v1724 = vld [vmem:[%s1373 + $0xe0] sm:$0xff]
  %v1725 = vld [vmem:[%s1373 + $0xf0] sm:$0xff]
  %v1726 = vld [vmem:[%s1373 + $0x100] sm:$0xff]
  %v1727 = vld [vmem:[%s1373 + $0x110] sm:$0xff]
  %v1728 = vpack.c.bf16 %v1713, %v1712
  %v1729 = vpack.c.bf16 %v1715, %v1714
  %v1730 = vpack.c.bf16 %v1717, %v1716
  %v1731 = vpack.c.bf16 %v1719, %v1718
  %v1732 = vpack.c.bf16 %v1721, %v1720
  %v1733 = vpack.c.bf16 %v1723, %v1722
  %v1734 = vpack.c.bf16 %v1725, %v1724
  %v1735 = vpack.c.bf16 %v1727, %v1726
  %s1736 = scalar_lea.vmem %s4, 12
  %v1737 = vld [vmem:[%s1736] sm:$0xf]
  %v1739 = vsel %vm1133, %v1728, 0
  %v1742 = vsel %vm1133, %v1729, 0
  %v1745 = vsel %vm1133, %v1730, 0
  %v1748 = vsel %vm1133, %v1731, 0
  %v1751 = vsel %vm1133, %v1732, 0
  %v1754 = vsel %vm1133, %v1733, 0
  %v1757 = vsel %vm1133, %v1734, 0
  %v1760 = vsel %vm1133, %v1735, 0
  %v1763 = vsel %vm1465, %v1737, 0
  %1765 = vmatpush.bf16.msra.mxu0 0
  %1766 = vmatpush.bf16.msra.mxu0 0
  %1767 = vmatpush.bf16.msra.mxu0 0
  %1768 = vmatpush.bf16.msra.mxu0 0
  %1769 = vmatpush.bf16.msra.mxu0 0
  %1770 = vmatpush.bf16.msra.mxu0 0
  %1771 = vmatpush.bf16.msra.mxu0 0
  %1772 = vmatpush.bf16.msra.mxu0 %v1763
  %1773 = vmatmul.bf16.gmra.mxu0 %v1739
  %v1774 = vpop.f32.mrf.mxu0
  %v1775 = vadd.f32 0.0, %v1774
  %v1776 = vpop.f32.mrf.mxu0
  %v1777 = vadd.f32 0.0, %v1776
  %1778 = vmatmul.bf16.gmra.mxu0 %v1742
  %v1779 = vpop.f32.mrf.mxu0
  %v1780 = vadd.f32 0.0, %v1779
  %v1781 = vpop.f32.mrf.mxu0
  %v1782 = vadd.f32 0.0, %v1781
  %1783 = vmatmul.bf16.gmra.mxu0 %v1745
  %v1784 = vpop.f32.mrf.mxu0
  %v1785 = vadd.f32 0.0, %v1784
  %v1786 = vpop.f32.mrf.mxu0
  %v1787 = vadd.f32 0.0, %v1786
  %1788 = vmatmul.bf16.gmra.mxu0 %v1748
  %v1789 = vpop.f32.mrf.mxu0
  %v1790 = vadd.f32 0.0, %v1789
  %v1791 = vpop.f32.mrf.mxu0
  %v1792 = vadd.f32 0.0, %v1791
  %1793 = vmatmul.bf16.gmra.mxu0 %v1751
  %v1794 = vpop.f32.mrf.mxu0
  %v1795 = vadd.f32 0.0, %v1794
  %v1796 = vpop.f32.mrf.mxu0
  %v1797 = vadd.f32 0.0, %v1796
  %1798 = vmatmul.bf16.gmra.mxu0 %v1754
  %v1799 = vpop.f32.mrf.mxu0
  %v1800 = vadd.f32 0.0, %v1799
  %v1801 = vpop.f32.mrf.mxu0
  %v1802 = vadd.f32 0.0, %v1801
  %1803 = vmatmul.bf16.gmra.mxu0 %v1757
  %v1804 = vpop.f32.mrf.mxu0
  %v1805 = vadd.f32 0.0, %v1804
  %v1806 = vpop.f32.mrf.mxu0
  %v1807 = vadd.f32 0.0, %v1806
  %1808 = vmatmul.bf16.gmra.mxu0 %v1760
  %v1809 = vpop.f32.mrf.mxu0
  %v1810 = vadd.f32 0.0, %v1809
  %v1811 = vpop.f32.mrf.mxu0
  %v1812 = vadd.f32 0.0, %v1811
  %1813 = vdwg.mxu0
  %v1814 = vadd.f32 %v1696, %v1775
  %v1815 = vadd.f32 %v1697, %v1777
  %v1816 = vadd.f32 %v1698, %v1780
  %v1817 = vadd.f32 %v1699, %v1782
  %v1818 = vadd.f32 %v1700, %v1785
  %v1819 = vadd.f32 %v1701, %v1787
  %v1820 = vadd.f32 %v1702, %v1790
  %v1821 = vadd.f32 %v1703, %v1792
  %v1822 = vadd.f32 %v1704, %v1795
  %v1823 = vadd.f32 %v1705, %v1797
  %v1824 = vadd.f32 %v1706, %v1800
  %v1825 = vadd.f32 %v1707, %v1802
  %v1826 = vadd.f32 %v1708, %v1805
  %v1827 = vadd.f32 %v1709, %v1807
  %v1828 = vadd.f32 %v1710, %v1810
  %v1829 = vadd.f32 %v1711, %v1812
  %v1830 = vld [vmem:[%s1373 + $0x1] sm:$0xff]
  %v1831 = vld [vmem:[%s1373 + $0x11] sm:$0xff]
  %v1832 = vld [vmem:[%s1373 + $0x21] sm:$0xff]
  %v1833 = vld [vmem:[%s1373 + $0x31] sm:$0xff]
  %v1834 = vld [vmem:[%s1373 + $0x41] sm:$0xff]
  %v1835 = vld [vmem:[%s1373 + $0x51] sm:$0xff]
  %v1836 = vld [vmem:[%s1373 + $0x61] sm:$0xff]
  %v1837 = vld [vmem:[%s1373 + $0x71] sm:$0xff]
  %v1838 = vld [vmem:[%s1373 + $0xa1] sm:$0xff]
  %v1839 = vld [vmem:[%s1373 + $0xb1] sm:$0xff]
  %v1840 = vld [vmem:[%s1373 + $0xc1] sm:$0xff]
  %v1841 = vld [vmem:[%s1373 + $0xd1] sm:$0xff]
  %v1842 = vld [vmem:[%s1373 + $0xe1] sm:$0xff]
  %v1843 = vld [vmem:[%s1373 + $0xf1] sm:$0xff]
  %v1844 = vld [vmem:[%s1373 + $0x101] sm:$0xff]
  %v1845 = vld [vmem:[%s1373 + $0x111] sm:$0xff]
  %v1846 = vpack.c.bf16 %v1831, %v1830
  %v1847 = vpack.c.bf16 %v1833, %v1832
  %v1848 = vpack.c.bf16 %v1835, %v1834
  %v1849 = vpack.c.bf16 %v1837, %v1836
  %v1850 = vpack.c.bf16 %v1839, %v1838
  %v1851 = vpack.c.bf16 %v1841, %v1840
  %v1852 = vpack.c.bf16 %v1843, %v1842
  %v1853 = vpack.c.bf16 %v1845, %v1844
  %s1854 = scalar_lea.vmem %s4, 16
  %v1855 = vld [vmem:[%s1854] sm:$0xf]
  %v1857 = vsel %vm1133, %v1846, 0
  %v1860 = vsel %vm1133, %v1847, 0
  %v1863 = vsel %vm1133, %v1848, 0
  %v1866 = vsel %vm1133, %v1849, 0
  %v1869 = vsel %vm1133, %v1850, 0
  %v1872 = vsel %vm1133, %v1851, 0
  %v1875 = vsel %vm1133, %v1852, 0
  %v1878 = vsel %vm1133, %v1853, 0
  %v1881 = vsel %vm1465, %v1855, 0
  %1883 = vmatpush.bf16.msra.mxu0 0
  %1884 = vmatpush.bf16.msra.mxu0 0
  %1885 = vmatpush.bf16.msra.mxu0 0
  %1886 = vmatpush.bf16.msra.mxu0 0
  %1887 = vmatpush.bf16.msra.mxu0 0
  %1888 = vmatpush.bf16.msra.mxu0 0
  %1889 = vmatpush.bf16.msra.mxu0 0
  %1890 = vmatpush.bf16.msra.mxu0 %v1881
  %1891 = vmatmul.bf16.gmra.mxu0 %v1857
  %v1892 = vpop.f32.mrf.mxu0
  %v1893 = vadd.f32 0.0, %v1892
  %v1894 = vpop.f32.mrf.mxu0
  %v1895 = vadd.f32 0.0, %v1894
  %1896 = vmatmul.bf16.gmra.mxu0 %v1860
  %v1897 = vpop.f32.mrf.mxu0
  %v1898 = vadd.f32 0.0, %v1897
  %v1899 = vpop.f32.mrf.mxu0
  %v1900 = vadd.f32 0.0, %v1899
  %1901 = vmatmul.bf16.gmra.mxu0 %v1863
  %v1902 = vpop.f32.mrf.mxu0
  %v1903 = vadd.f32 0.0, %v1902
  %v1904 = vpop.f32.mrf.mxu0
  %v1905 = vadd.f32 0.0, %v1904
  %1906 = vmatmul.bf16.gmra.mxu0 %v1866
  %v1907 = vpop.f32.mrf.mxu0
  %v1908 = vadd.f32 0.0, %v1907
  %v1909 = vpop.f32.mrf.mxu0
  %v1910 = vadd.f32 0.0, %v1909
  %1911 = vmatmul.bf16.gmra.mxu0 %v1869
  %v1912 = vpop.f32.mrf.mxu0
  %v1913 = vadd.f32 0.0, %v1912
  %v1914 = vpop.f32.mrf.mxu0
  %v1915 = vadd.f32 0.0, %v1914
  %1916 = vmatmul.bf16.gmra.mxu0 %v1872
  %v1917 = vpop.f32.mrf.mxu0
  %v1918 = vadd.f32 0.0, %v1917
  %v1919 = vpop.f32.mrf.mxu0
  %v1920 = vadd.f32 0.0, %v1919
  %1921 = vmatmul.bf16.gmra.mxu0 %v1875
  %v1922 = vpop.f32.mrf.mxu0
  %v1923 = vadd.f32 0.0, %v1922
  %v1924 = vpop.f32.mrf.mxu0
  %v1925 = vadd.f32 0.0, %v1924
  %1926 = vmatmul.bf16.gmra.mxu0 %v1878
  %v1927 = vpop.f32.mrf.mxu0
  %v1928 = vadd.f32 0.0, %v1927
  %v1929 = vpop.f32.mrf.mxu0
  %v1930 = vadd.f32 0.0, %v1929
  %1931 = vdwg.mxu0
  %v1932 = vadd.f32 %v1814, %v1893
  %v1933 = vadd.f32 %v1815, %v1895
  %v1934 = vadd.f32 %v1816, %v1898
  %v1935 = vadd.f32 %v1817, %v1900
  %v1936 = vadd.f32 %v1818, %v1903
  %v1937 = vadd.f32 %v1819, %v1905
  %v1938 = vadd.f32 %v1820, %v1908
  %v1939 = vadd.f32 %v1821, %v1910
  %v1940 = vadd.f32 %v1822, %v1913
  %v1941 = vadd.f32 %v1823, %v1915
  %v1942 = vadd.f32 %v1824, %v1918
  %v1943 = vadd.f32 %v1825, %v1920
  %v1944 = vadd.f32 %v1826, %v1923
  %v1945 = vadd.f32 %v1827, %v1925
  %v1946 = vadd.f32 %v1828, %v1928
  %v1947 = vadd.f32 %v1829, %v1930
  %v1948 = vld [vmem:[%s1373 + $0x2] sm:$0xff]
  %v1949 = vld [vmem:[%s1373 + $0x12] sm:$0xff]
  %v1950 = vld [vmem:[%s1373 + $0x22] sm:$0xff]
  %v1951 = vld [vmem:[%s1373 + $0x32] sm:$0xff]
  %v1952 = vld [vmem:[%s1373 + $0x42] sm:$0xff]
  %v1953 = vld [vmem:[%s1373 + $0x52] sm:$0xff]
  %v1954 = vld [vmem:[%s1373 + $0x62] sm:$0xff]
  %v1955 = vld [vmem:[%s1373 + $0x72] sm:$0xff]
  %v1956 = vld [vmem:[%s1373 + $0xa2] sm:$0xff]
  %v1957 = vld [vmem:[%s1373 + $0xb2] sm:$0xff]
  %v1958 = vld [vmem:[%s1373 + $0xc2] sm:$0xff]
  %v1959 = vld [vmem:[%s1373 + $0xd2] sm:$0xff]
  %v1960 = vld [vmem:[%s1373 + $0xe2] sm:$0xff]
  %v1961 = vld [vmem:[%s1373 + $0xf2] sm:$0xff]
  %v1962 = vld [vmem:[%s1373 + $0x102] sm:$0xff]
  %v1963 = vld [vmem:[%s1373 + $0x112] sm:$0xff]
  %v1964 = vpack.c.bf16 %v1949, %v1948
  %v1965 = vpack.c.bf16 %v1951, %v1950
  %v1966 = vpack.c.bf16 %v1953, %v1952
  %v1967 = vpack.c.bf16 %v1955, %v1954
  %v1968 = vpack.c.bf16 %v1957, %v1956
  %v1969 = vpack.c.bf16 %v1959, %v1958
  %v1970 = vpack.c.bf16 %v1961, %v1960
  %v1971 = vpack.c.bf16 %v1963, %v1962
  %s1972 = scalar_lea.vmem %s4, 20
  %v1973 = vld [vmem:[%s1972] sm:$0xf]
  %v1975 = vsel %vm1133, %v1964, 0
  %v1978 = vsel %vm1133, %v1965, 0
  %v1981 = vsel %vm1133, %v1966, 0
  %v1984 = vsel %vm1133, %v1967, 0
  %v1987 = vsel %vm1133, %v1968, 0
  %v1990 = vsel %vm1133, %v1969, 0
  %v1993 = vsel %vm1133, %v1970, 0
  %v1996 = vsel %vm1133, %v1971, 0
  %v1999 = vsel %vm1465, %v1973, 0
  %2001 = vmatpush.bf16.msra.mxu0 0
  %2002 = vmatpush.bf16.msra.mxu0 0
  %2003 = vmatpush.bf16.msra.mxu0 0
  %2004 = vmatpush.bf16.msra.mxu0 0
  %2005 = vmatpush.bf16.msra.mxu0 0
  %2006 = vmatpush.bf16.msra.mxu0 0
  %2007 = vmatpush.bf16.msra.mxu0 0
  %2008 = vmatpush.bf16.msra.mxu0 %v1999
  %2009 = vmatmul.bf16.gmra.mxu0 %v1975
  %v2010 = vpop.f32.mrf.mxu0
  %v2011 = vadd.f32 0.0, %v2010
  %v2012 = vpop.f32.mrf.mxu0
  %v2013 = vadd.f32 0.0, %v2012
  %2014 = vmatmul.bf16.gmra.mxu0 %v1978
  %v2015 = vpop.f32.mrf.mxu0
  %v2016 = vadd.f32 0.0, %v2015
  %v2017 = vpop.f32.mrf.mxu0
  %v2018 = vadd.f32 0.0, %v2017
  %2019 = vmatmul.bf16.gmra.mxu0 %v1981
  %v2020 = vpop.f32.mrf.mxu0
  %v2021 = vadd.f32 0.0, %v2020
  %v2022 = vpop.f32.mrf.mxu0
  %v2023 = vadd.f32 0.0, %v2022
  %2024 = vmatmul.bf16.gmra.mxu0 %v1984
  %v2025 = vpop.f32.mrf.mxu0
  %v2026 = vadd.f32 0.0, %v2025
  %v2027 = vpop.f32.mrf.mxu0
  %v2028 = vadd.f32 0.0, %v2027
  %2029 = vmatmul.bf16.gmra.mxu0 %v1987
  %v2030 = vpop.f32.mrf.mxu0
  %v2031 = vadd.f32 0.0, %v2030
  %v2032 = vpop.f32.mrf.mxu0
  %v2033 = vadd.f32 0.0, %v2032
  %2034 = vmatmul.bf16.gmra.mxu0 %v1990
  %v2035 = vpop.f32.mrf.mxu0
  %v2036 = vadd.f32 0.0, %v2035
  %v2037 = vpop.f32.mrf.mxu0
  %v2038 = vadd.f32 0.0, %v2037
  %2039 = vmatmul.bf16.gmra.mxu0 %v1993
  %v2040 = vpop.f32.mrf.mxu0
  %v2041 = vadd.f32 0.0, %v2040
  %v2042 = vpop.f32.mrf.mxu0
  %v2043 = vadd.f32 0.0, %v2042
  %2044 = vmatmul.bf16.gmra.mxu0 %v1996
  %v2045 = vpop.f32.mrf.mxu0
  %v2046 = vadd.f32 0.0, %v2045
  %v2047 = vpop.f32.mrf.mxu0
  %v2048 = vadd.f32 0.0, %v2047
  %2049 = vdwg.mxu0
  %v2050 = vadd.f32 %v1932, %v2011
  %v2051 = vadd.f32 %v1933, %v2013
  %v2052 = vadd.f32 %v1934, %v2016
  %v2053 = vadd.f32 %v1935, %v2018
  %v2054 = vadd.f32 %v1936, %v2021
  %v2055 = vadd.f32 %v1937, %v2023
  %v2056 = vadd.f32 %v1938, %v2026
  %v2057 = vadd.f32 %v1939, %v2028
  %v2058 = vadd.f32 %v1940, %v2031
  %v2059 = vadd.f32 %v1941, %v2033
  %v2060 = vadd.f32 %v1942, %v2036
  %v2061 = vadd.f32 %v1943, %v2038
  %v2062 = vadd.f32 %v1944, %v2041
  %v2063 = vadd.f32 %v1945, %v2043
  %v2064 = vadd.f32 %v1946, %v2046
  %v2065 = vadd.f32 %v1947, %v2048
  %s2066 = scalar_lea.vmem [#allocation3], 32
  %v2067 = vld [vmem:[%s2066] sm:$0xff]
  %v2068 = vld [vmem:[%s2066 + $0x10] sm:$0xff]
  %v2069 = vld [vmem:[%s2066 + $0x20] sm:$0xff]
  %v2070 = vld [vmem:[%s2066 + $0x30] sm:$0xff]
  %v2071 = vld [vmem:[%s2066 + $0x40] sm:$0xff]
  %v2072 = vld [vmem:[%s2066 + $0x50] sm:$0xff]
  %v2073 = vld [vmem:[%s2066 + $0x60] sm:$0xff]
  %v2074 = vld [vmem:[%s2066 + $0x70] sm:$0xff]
  %v2075 = vld [vmem:[%s2066 + $0xa0] sm:$0xff]
  %v2076 = vld [vmem:[%s2066 + $0xb0] sm:$0xff]
  %v2077 = vld [vmem:[%s2066 + $0xc0] sm:$0xff]
  %v2078 = vld [vmem:[%s2066 + $0xd0] sm:$0xff]
  %v2079 = vld [vmem:[%s2066 + $0xe0] sm:$0xff]
  %v2080 = vld [vmem:[%s2066 + $0xf0] sm:$0xff]
  %v2081 = vld [vmem:[%s2066 + $0x100] sm:$0xff]
  %v2082 = vld [vmem:[%s2066 + $0x110] sm:$0xff]
  %v2083 = vpack.c.bf16 %v2068, %v2067
  %v2084 = vpack.c.bf16 %v2070, %v2069
  %v2085 = vpack.c.bf16 %v2072, %v2071
  %v2086 = vpack.c.bf16 %v2074, %v2073
  %v2087 = vpack.c.bf16 %v2076, %v2075
  %v2088 = vpack.c.bf16 %v2078, %v2077
  %v2089 = vpack.c.bf16 %v2080, %v2079
  %v2090 = vpack.c.bf16 %v2082, %v2081
  %s2091 = scalar_lea.vmem %s4, 24
  %v2092 = vld [vmem:[%s2091] sm:$0xf]
  %v2094 = vsel %vm1133, %v2083, 0
  %v2097 = vsel %vm1133, %v2084, 0
  %v2100 = vsel %vm1133, %v2085, 0
  %v2103 = vsel %vm1133, %v2086, 0
  %v2106 = vsel %vm1133, %v2087, 0
  %v2109 = vsel %vm1133, %v2088, 0
  %v2112 = vsel %vm1133, %v2089, 0
  %v2115 = vsel %vm1133, %v2090, 0
  %v2118 = vsel %vm1465, %v2092, 0
  %2120 = vmatpush.bf16.msra.mxu0 0
  %2121 = vmatpush.bf16.msra.mxu0 0
  %2122 = vmatpush.bf16.msra.mxu0 0
  %2123 = vmatpush.bf16.msra.mxu0 0
  %2124 = vmatpush.bf16.msra.mxu0 0
  %2125 = vmatpush.bf16.msra.mxu0 0
  %2126 = vmatpush.bf16.msra.mxu0 0
  %2127 = vmatpush.bf16.msra.mxu0 %v2118
  %2128 = vmatmul.bf16.gmra.mxu0 %v2094
  %v2129 = vpop.f32.mrf.mxu0
  %v2130 = vadd.f32 0.0, %v2129
  %v2131 = vpop.f32.mrf.mxu0
  %v2132 = vadd.f32 0.0, %v2131
  %2133 = vmatmul.bf16.gmra.mxu0 %v2097
  %v2134 = vpop.f32.mrf.mxu0
  %v2135 = vadd.f32 0.0, %v2134
  %v2136 = vpop.f32.mrf.mxu0
  %v2137 = vadd.f32 0.0, %v2136
  %2138 = vmatmul.bf16.gmra.mxu0 %v2100
  %v2139 = vpop.f32.mrf.mxu0
  %v2140 = vadd.f32 0.0, %v2139
  %v2141 = vpop.f32.mrf.mxu0
  %v2142 = vadd.f32 0.0, %v2141
  %2143 = vmatmul.bf16.gmra.mxu0 %v2103
  %v2144 = vpop.f32.mrf.mxu0
  %v2145 = vadd.f32 0.0, %v2144
  %v2146 = vpop.f32.mrf.mxu0
  %v2147 = vadd.f32 0.0, %v2146
  %2148 = vmatmul.bf16.gmra.mxu0 %v2106
  %v2149 = vpop.f32.mrf.mxu0
  %v2150 = vadd.f32 0.0, %v2149
  %v2151 = vpop.f32.mrf.mxu0
  %v2152 = vadd.f32 0.0, %v2151
  %2153 = vmatmul.bf16.gmra.mxu0 %v2109
  %v2154 = vpop.f32.mrf.mxu0
  %v2155 = vadd.f32 0.0, %v2154
  %v2156 = vpop.f32.mrf.mxu0
  %v2157 = vadd.f32 0.0, %v2156
  %2158 = vmatmul.bf16.gmra.mxu0 %v2112
  %v2159 = vpop.f32.mrf.mxu0
  %v2160 = vadd.f32 0.0, %v2159
  %v2161 = vpop.f32.mrf.mxu0
  %v2162 = vadd.f32 0.0, %v2161
  %2163 = vmatmul.bf16.gmra.mxu0 %v2115
  %v2164 = vpop.f32.mrf.mxu0
  %v2165 = vadd.f32 0.0, %v2164
  %v2166 = vpop.f32.mrf.mxu0
  %v2167 = vadd.f32 0.0, %v2166
  %2168 = vdwg.mxu0
  %v2169 = vadd.f32 %v2050, %v2130
  %v2170 = vadd.f32 %v2051, %v2132
  %v2171 = vadd.f32 %v2052, %v2135
  %v2172 = vadd.f32 %v2053, %v2137
  %v2173 = vadd.f32 %v2054, %v2140
  %v2174 = vadd.f32 %v2055, %v2142
  %v2175 = vadd.f32 %v2056, %v2145
  %v2176 = vadd.f32 %v2057, %v2147
  %v2177 = vadd.f32 %v2058, %v2150
  %v2178 = vadd.f32 %v2059, %v2152
  %v2179 = vadd.f32 %v2060, %v2155
  %v2180 = vadd.f32 %v2061, %v2157
  %v2181 = vadd.f32 %v2062, %v2160
  %v2182 = vadd.f32 %v2063, %v2162
  %v2183 = vadd.f32 %v2064, %v2165
  %v2184 = vadd.f32 %v2065, %v2167
  %v2185 = vld [vmem:[%s2066 + $0x1] sm:$0xff]
  %v2186 = vld [vmem:[%s2066 + $0x11] sm:$0xff]
  %v2187 = vld [vmem:[%s2066 + $0x21] sm:$0xff]
  %v2188 = vld [vmem:[%s2066 + $0x31] sm:$0xff]
  %v2189 = vld [vmem:[%s2066 + $0x41] sm:$0xff]
  %v2190 = vld [vmem:[%s2066 + $0x51] sm:$0xff]
  %v2191 = vld [vmem:[%s2066 + $0x61] sm:$0xff]
  %v2192 = vld [vmem:[%s2066 + $0x71] sm:$0xff]
  %v2193 = vld [vmem:[%s2066 + $0xa1] sm:$0xff]
  %v2194 = vld [vmem:[%s2066 + $0xb1] sm:$0xff]
  %v2195 = vld [vmem:[%s2066 + $0xc1] sm:$0xff]
  %v2196 = vld [vmem:[%s2066 + $0xd1] sm:$0xff]
  %v2197 = vld [vmem:[%s2066 + $0xe1] sm:$0xff]
  %v2198 = vld [vmem:[%s2066 + $0xf1] sm:$0xff]
  %v2199 = vld [vmem:[%s2066 + $0x101] sm:$0xff]
  %v2200 = vld [vmem:[%s2066 + $0x111] sm:$0xff]
  %v2201 = vpack.c.bf16 %v2186, %v2185
  %v2202 = vpack.c.bf16 %v2188, %v2187
  %v2203 = vpack.c.bf16 %v2190, %v2189
  %v2204 = vpack.c.bf16 %v2192, %v2191
  %v2205 = vpack.c.bf16 %v2194, %v2193
  %v2206 = vpack.c.bf16 %v2196, %v2195
  %v2207 = vpack.c.bf16 %v2198, %v2197
  %v2208 = vpack.c.bf16 %v2200, %v2199
  %s2209 = scalar_lea.vmem %s4, 28
  %v2210 = vld [vmem:[%s2209] sm:$0xf]
  %v2212 = vsel %vm1133, %v2201, 0
  %v2215 = vsel %vm1133, %v2202, 0
  %v2218 = vsel %vm1133, %v2203, 0
  %v2221 = vsel %vm1133, %v2204, 0
  %v2224 = vsel %vm1133, %v2205, 0
  %v2227 = vsel %vm1133, %v2206, 0
  %v2230 = vsel %vm1133, %v2207, 0
  %v2233 = vsel %vm1133, %v2208, 0
  %v2236 = vsel %vm1465, %v2210, 0
  %2238 = vmatpush.bf16.msra.mxu0 0
  %2239 = vmatpush.bf16.msra.mxu0 0
  %2240 = vmatpush.bf16.msra.mxu0 0
  %2241 = vmatpush.bf16.msra.mxu0 0
  %2242 = vmatpush.bf16.msra.mxu0 0
  %2243 = vmatpush.bf16.msra.mxu0 0
  %2244 = vmatpush.bf16.msra.mxu0 0
  %2245 = vmatpush.bf16.msra.mxu0 %v2236
  %2246 = vmatmul.bf16.gmra.mxu0 %v2212
  %v2247 = vpop.f32.mrf.mxu0
  %v2248 = vadd.f32 0.0, %v2247
  %v2249 = vpop.f32.mrf.mxu0
  %v2250 = vadd.f32 0.0, %v2249
  %2251 = vmatmul.bf16.gmra.mxu0 %v2215
  %v2252 = vpop.f32.mrf.mxu0
  %v2253 = vadd.f32 0.0, %v2252
  %v2254 = vpop.f32.mrf.mxu0
  %v2255 = vadd.f32 0.0, %v2254
  %2256 = vmatmul.bf16.gmra.mxu0 %v2218
  %v2257 = vpop.f32.mrf.mxu0
  %v2258 = vadd.f32 0.0, %v2257
  %v2259 = vpop.f32.mrf.mxu0
  %v2260 = vadd.f32 0.0, %v2259
  %2261 = vmatmul.bf16.gmra.mxu0 %v2221
  %v2262 = vpop.f32.mrf.mxu0
  %v2263 = vadd.f32 0.0, %v2262
  %v2264 = vpop.f32.mrf.mxu0
  %v2265 = vadd.f32 0.0, %v2264
  %2266 = vmatmul.bf16.gmra.mxu0 %v2224
  %v2267 = vpop.f32.mrf.mxu0
  %v2268 = vadd.f32 0.0, %v2267
  %v2269 = vpop.f32.mrf.mxu0
  %v2270 = vadd.f32 0.0, %v2269
  %2271 = vmatmul.bf16.gmra.mxu0 %v2227
  %v2272 = vpop.f32.mrf.mxu0
  %v2273 = vadd.f32 0.0, %v2272
  %v2274 = vpop.f32.mrf.mxu0
  %v2275 = vadd.f32 0.0, %v2274
  %2276 = vmatmul.bf16.gmra.mxu0 %v2230
  %v2277 = vpop.f32.mrf.mxu0
  %v2278 = vadd.f32 0.0, %v2277
  %v2279 = vpop.f32.mrf.mxu0
  %v2280 = vadd.f32 0.0, %v2279
  %2281 = vmatmul.bf16.gmra.mxu0 %v2233
  %v2282 = vpop.f32.mrf.mxu0
  %v2283 = vadd.f32 0.0, %v2282
  %v2284 = vpop.f32.mrf.mxu0
  %v2285 = vadd.f32 0.0, %v2284
  %2286 = vdwg.mxu0
  %v2287 = vadd.f32 %v2169, %v2248
  %v2288 = vadd.f32 %v2170, %v2250
  %v2289 = vadd.f32 %v2171, %v2253
  %v2290 = vadd.f32 %v2172, %v2255
  %v2291 = vadd.f32 %v2173, %v2258
  %v2292 = vadd.f32 %v2174, %v2260
  %v2293 = vadd.f32 %v2175, %v2263
  %v2294 = vadd.f32 %v2176, %v2265
  %v2295 = vadd.f32 %v2177, %v2268
  %v2296 = vadd.f32 %v2178, %v2270
  %v2297 = vadd.f32 %v2179, %v2273
  %v2298 = vadd.f32 %v2180, %v2275
  %v2299 = vadd.f32 %v2181, %v2278
  %v2300 = vadd.f32 %v2182, %v2280
  %v2301 = vadd.f32 %v2183, %v2283
  %v2302 = vadd.f32 %v2184, %v2285
  %v2303 = vld [vmem:[%s2066 + $0x2] sm:$0xff]
  %v2304 = vld [vmem:[%s2066 + $0x12] sm:$0xff]
  %v2305 = vld [vmem:[%s2066 + $0x22] sm:$0xff]
  %v2306 = vld [vmem:[%s2066 + $0x32] sm:$0xff]
  %v2307 = vld [vmem:[%s2066 + $0x42] sm:$0xff]
  %v2308 = vld [vmem:[%s2066 + $0x52] sm:$0xff]
  %v2309 = vld [vmem:[%s2066 + $0x62] sm:$0xff]
  %v2310 = vld [vmem:[%s2066 + $0x72] sm:$0xff]
  %v2311 = vld [vmem:[%s2066 + $0xa2] sm:$0xff]
  %v2312 = vld [vmem:[%s2066 + $0xb2] sm:$0xff]
  %v2313 = vld [vmem:[%s2066 + $0xc2] sm:$0xff]
  %v2314 = vld [vmem:[%s2066 + $0xd2] sm:$0xff]
  %v2315 = vld [vmem:[%s2066 + $0xe2] sm:$0xff]
  %v2316 = vld [vmem:[%s2066 + $0xf2] sm:$0xff]
  %v2317 = vld [vmem:[%s2066 + $0x102] sm:$0xff]
  %v2318 = vld [vmem:[%s2066 + $0x112] sm:$0xff]
  %v2319 = vpack.c.bf16 %v2304, %v2303
  %v2320 = vpack.c.bf16 %v2306, %v2305
  %v2321 = vpack.c.bf16 %v2308, %v2307
  %v2322 = vpack.c.bf16 %v2310, %v2309
  %v2323 = vpack.c.bf16 %v2312, %v2311
  %v2324 = vpack.c.bf16 %v2314, %v2313
  %v2325 = vpack.c.bf16 %v2316, %v2315
  %v2326 = vpack.c.bf16 %v2318, %v2317
  %s2327 = scalar_lea.vmem %s4, 32
  %v2328 = vld [vmem:[%s2327] sm:$0xf]
  %v2330 = vsel %vm1133, %v2319, 0
  %v2333 = vsel %vm1133, %v2320, 0
  %v2336 = vsel %vm1133, %v2321, 0
  %v2339 = vsel %vm1133, %v2322, 0
  %v2342 = vsel %vm1133, %v2323, 0
  %v2345 = vsel %vm1133, %v2324, 0
  %v2348 = vsel %vm1133, %v2325, 0
  %v2351 = vsel %vm1133, %v2326, 0
  %v2354 = vsel %vm1465, %v2328, 0
  %2356 = vmatpush.bf16.msra.mxu0 0
  %2357 = vmatpush.bf16.msra.mxu0 0
  %2358 = vmatpush.bf16.msra.mxu0 0
  %2359 = vmatpush.bf16.msra.mxu0 0
  %2360 = vmatpush.bf16.msra.mxu0 0
  %2361 = vmatpush.bf16.msra.mxu0 0
  %2362 = vmatpush.bf16.msra.mxu0 0
  %2363 = vmatpush.bf16.msra.mxu0 %v2354
  %2364 = vmatmul.bf16.gmra.mxu0 %v2330
  %v2365 = vpop.f32.mrf.mxu0
  %v2366 = vadd.f32 0.0, %v2365
  %v2367 = vpop.f32.mrf.mxu0
  %v2368 = vadd.f32 0.0, %v2367
  %2369 = vmatmul.bf16.gmra.mxu0 %v2333
  %v2370 = vpop.f32.mrf.mxu0
  %v2371 = vadd.f32 0.0, %v2370
  %v2372 = vpop.f32.mrf.mxu0
  %v2373 = vadd.f32 0.0, %v2372
  %2374 = vmatmul.bf16.gmra.mxu0 %v2336
  %v2375 = vpop.f32.mrf.mxu0
  %v2376 = vadd.f32 0.0, %v2375
  %v2377 = vpop.f32.mrf.mxu0
  %v2378 = vadd.f32 0.0, %v2377
  %2379 = vmatmul.bf16.gmra.mxu0 %v2339
  %v2380 = vpop.f32.mrf.mxu0
  %v2381 = vadd.f32 0.0, %v2380
  %v2382 = vpop.f32.mrf.mxu0
  %v2383 = vadd.f32 0.0, %v2382
  %2384 = vmatmul.bf16.gmra.mxu0 %v2342
  %v2385 = vpop.f32.mrf.mxu0
  %v2386 = vadd.f32 0.0, %v2385
  %v2387 = vpop.f32.mrf.mxu0
  %v2388 = vadd.f32 0.0, %v2387
  %2389 = vmatmul.bf16.gmra.mxu0 %v2345
  %v2390 = vpop.f32.mrf.mxu0
  %v2391 = vadd.f32 0.0, %v2390
  %v2392 = vpop.f32.mrf.mxu0
  %v2393 = vadd.f32 0.0, %v2392
  %2394 = vmatmul.bf16.gmra.mxu0 %v2348
  %v2395 = vpop.f32.mrf.mxu0
  %v2396 = vadd.f32 0.0, %v2395
  %v2397 = vpop.f32.mrf.mxu0
  %v2398 = vadd.f32 0.0, %v2397
  %2399 = vmatmul.bf16.gmra.mxu0 %v2351
  %v2400 = vpop.f32.mrf.mxu0
  %v2401 = vadd.f32 0.0, %v2400
  %v2402 = vpop.f32.mrf.mxu0
  %v2403 = vadd.f32 0.0, %v2402
  %2404 = vdwg.mxu0
  %v2405 = vadd.f32 %v2287, %v2366
  %v2406 = vadd.f32 %v2288, %v2368
  %v2407 = vadd.f32 %v2289, %v2371
  %v2408 = vadd.f32 %v2290, %v2373
  %v2409 = vadd.f32 %v2291, %v2376
  %v2410 = vadd.f32 %v2292, %v2378
  %v2411 = vadd.f32 %v2293, %v2381
  %v2412 = vadd.f32 %v2294, %v2383
  %v2413 = vadd.f32 %v2295, %v2386
  %v2414 = vadd.f32 %v2296, %v2388
  %v2415 = vadd.f32 %v2297, %v2391
  %v2416 = vadd.f32 %v2298, %v2393
  %v2417 = vadd.f32 %v2299, %v2396
  %v2418 = vadd.f32 %v2300, %v2398
  %v2419 = vadd.f32 %v2301, %v2401
  %v2420 = vadd.f32 %v2302, %v2403
  %v2421 = vsel %vm1133, %v2405, 0.0
  %v2422 = vsel %vm1133, %v2406, 0.0
  %v2423 = vadd.f32 %v2421, %v2422
  %v2424 = vsel %vm1133, %v2407, 0.0
  %v2425 = vadd.f32 %v2423, %v2424
  %v2426 = vsel %vm1133, %v2408, 0.0
  %v2427 = vadd.f32 %v2425, %v2426
  %v2428 = vsel %vm1133, %v2409, 0.0
  %v2429 = vadd.f32 %v2427, %v2428
  %v2430 = vsel %vm1133, %v2410, 0.0
  %v2431 = vadd.f32 %v2429, %v2430
  %v2432 = vsel %vm1133, %v2411, 0.0
  %v2433 = vadd.f32 %v2431, %v2432
  %v2434 = vsel %vm1133, %v2412, 0.0
  %v2435 = vadd.f32 %v2433, %v2434
  %v2436 = vsel %vm1133, %v2413, 0.0
  %v2437 = vadd.f32 %v2435, %v2436
  %v2438 = vsel %vm1133, %v2414, 0.0
  %v2439 = vadd.f32 %v2437, %v2438
  %v2440 = vsel %vm1133, %v2415, 0.0
  %v2441 = vadd.f32 %v2439, %v2440
  %v2442 = vsel %vm1133, %v2416, 0.0
  %v2443 = vadd.f32 %v2441, %v2442
  %v2444 = vsel %vm1133, %v2417, 0.0
  %v2445 = vadd.f32 %v2443, %v2444
  %v2446 = vsel %vm1133, %v2418, 0.0
  %v2447 = vadd.f32 %v2445, %v2446
  %v2448 = vsel %vm1133, %v2419, 0.0
  %v2449 = vadd.f32 %v2447, %v2448
  %v2450 = vsel %vm1133, %v2420, 0.0
  %v2451 = vadd.f32 %v2449, %v2450
  %v2452 = vrot.slane %v2451, 4
  %v2453 = vadd.f32 %v2451, %v2452
  %v2454 = vrot.slane %v2453, 2
  %v2455 = vadd.f32 %v2453, %v2454
  %v2456 = vrot.slane %v2455, 1
  %v2457 = vadd.f32 %v2455, %v2456
  %v2458 = vmul.f32 %v2457, %v1177
  %v2459 = vsub.f32 %v2405, %v2458
  %v2460 = vsub.f32 %v2406, %v2458
  %v2461 = vsub.f32 %v2407, %v2458
  %v2462 = vsub.f32 %v2408, %v2458
  %v2463 = vsub.f32 %v2409, %v2458
  %v2464 = vsub.f32 %v2410, %v2458
  %v2465 = vsub.f32 %v2411, %v2458
  %v2466 = vsub.f32 %v2412, %v2458
  %v2467 = vsub.f32 %v2413, %v2458
  %v2468 = vsub.f32 %v2414, %v2458
  %v2469 = vsub.f32 %v2415, %v2458
  %v2470 = vsub.f32 %v2416, %v2458
  %v2471 = vsub.f32 %v2417, %v2458
  %v2472 = vsub.f32 %v2418, %v2458
  %v2473 = vsub.f32 %v2419, %v2458
  %v2474 = vsub.f32 %v2420, %v2458
  %v2475 = vmul.f32 %v2459, %v2459
  %v2476 = vmul.f32 %v2460, %v2460
  %v2477 = vmul.f32 %v2461, %v2461
  %v2478 = vmul.f32 %v2462, %v2462
  %v2479 = vmul.f32 %v2463, %v2463
  %v2480 = vmul.f32 %v2464, %v2464
  %v2481 = vmul.f32 %v2465, %v2465
  %v2482 = vmul.f32 %v2466, %v2466
  %v2483 = vmul.f32 %v2467, %v2467
  %v2484 = vmul.f32 %v2468, %v2468
  %v2485 = vmul.f32 %v2469, %v2469
  %v2486 = vmul.f32 %v2470, %v2470
  %v2487 = vmul.f32 %v2471, %v2471
  %v2488 = vmul.f32 %v2472, %v2472
  %v2489 = vmul.f32 %v2473, %v2473
  %v2490 = vmul.f32 %v2474, %v2474
  %v2491 = vsel %vm1133, %v2475, 0.0
  %v2492 = vsel %vm1133, %v2476, 0.0
  %v2493 = vadd.f32 %v2491, %v2492
  %v2494 = vsel %vm1133, %v2477, 0.0
  %v2495 = vadd.f32 %v2493, %v2494
  %v2496 = vsel %vm1133, %v2478, 0.0
  %v2497 = vadd.f32 %v2495, %v2496
  %v2498 = vsel %vm1133, %v2479, 0.0
  %v2499 = vadd.f32 %v2497, %v2498
  %v2500 = vsel %vm1133, %v2480, 0.0
  %v2501 = vadd.f32 %v2499, %v2500
  %v2502 = vsel %vm1133, %v2481, 0.0
  %v2503 = vadd.f32 %v2501, %v2502
  %v2504 = vsel %vm1133, %v2482, 0.0
  %v2505 = vadd.f32 %v2503, %v2504
  %v2506 = vsel %vm1133, %v2483, 0.0
  %v2507 = vadd.f32 %v2505, %v2506
  %v2508 = vsel %vm1133, %v2484, 0.0
  %v2509 = vadd.f32 %v2507, %v2508
  %v2510 = vsel %vm1133, %v2485, 0.0
  %v2511 = vadd.f32 %v2509, %v2510
  %v2512 = vsel %vm1133, %v2486, 0.0
  %v2513 = vadd.f32 %v2511, %v2512
  %v2514 = vsel %vm1133, %v2487, 0.0
  %v2515 = vadd.f32 %v2513, %v2514
  %v2516 = vsel %vm1133, %v2488, 0.0
  %v2517 = vadd.f32 %v2515, %v2516
  %v2518 = vsel %vm1133, %v2489, 0.0
  %v2519 = vadd.f32 %v2517, %v2518
  %v2520 = vsel %vm1133, %v2490, 0.0
  %v2521 = vadd.f32 %v2519, %v2520
  %v2522 = vrot.slane %v2521, 4
  %v2523 = vadd.f32 %v2521, %v2522
  %v2524 = vrot.slane %v2523, 2
  %v2525 = vadd.f32 %v2523, %v2524
  %v2526 = vrot.slane %v2525, 1
  %v2527 = vadd.f32 %v2525, %v2526
  %v2528 = vmul.f32 %v2527, %v1177
  %v2529 = vadd.f32 %v2528, 1e-05
  %v2530 = vrsqrt.pop %v2529
  %v2531 = vmul.f32 %v2530, %v2529
  %v2532 = vmul.f32 %v2531, %v2530
  %v2533 = vmul.f32 0.5, %v2532
  %v2534 = vsub.f32 1.5, %v2533
  %v2535 = vmul.f32 %v2530, %v2534
  %vm2536 = vweird.f32 %v2529
  %vm2537 = vweird.f32 %v2530
  %vm2538 = vmor %vm2536, %vm2537
  %v2539 = vsel %vm2538, %v2530, %v2535
  %v2540 = vmul.f32 %v2459, %v2539
  %v2541 = vmul.f32 %v2460, %v2539
  %v2542 = vmul.f32 %v2461, %v2539
  %v2543 = vmul.f32 %v2462, %v2539
  %v2544 = vmul.f32 %v2463, %v2539
  %v2545 = vmul.f32 %v2464, %v2539
  %v2546 = vmul.f32 %v2465, %v2539
  %v2547 = vmul.f32 %v2466, %v2539
  %v2548 = vmul.f32 %v2467, %v2539
  %v2549 = vmul.f32 %v2468, %v2539
  %v2550 = vmul.f32 %v2469, %v2539
  %v2551 = vmul.f32 %v2470, %v2539
  %v2552 = vmul.f32 %v2471, %v2539
  %v2553 = vmul.f32 %v2472, %v2539
  %v2554 = vmul.f32 %v2473, %v2539
  %v2555 = vmul.f32 %v2474, %v2539
  %v2556 = vld [vmem:[%s5] sm:$0x1]
  %v2558 = vperm.slane %v2556, 0
  %v2560 = vmul.f32 %v2540, %v2558
  %v2561 = vmul.f32 %v2541, %v2558
  %v2562 = vmul.f32 %v2542, %v2558
  %v2563 = vmul.f32 %v2543, %v2558
  %v2564 = vmul.f32 %v2544, %v2558
  %v2565 = vmul.f32 %v2545, %v2558
  %v2566 = vmul.f32 %v2546, %v2558
  %v2567 = vmul.f32 %v2547, %v2558
  %v2568 = vmul.f32 %v2548, %v2558
  %v2569 = vmul.f32 %v2549, %v2558
  %v2570 = vmul.f32 %v2550, %v2558
  %v2571 = vmul.f32 %v2551, %v2558
  %v2572 = vmul.f32 %v2552, %v2558
  %v2573 = vmul.f32 %v2553, %v2558
  %v2574 = vmul.f32 %v2554, %v2558
  %v2575 = vmul.f32 %v2555, %v2558
  %v2576 = vld [vmem:[%s6] sm:$0x1]
  %v2578 = vperm.slane %v2576, 0
  %v2580 = vadd.f32 %v2560, %v2578
  %v2581 = vadd.f32 %v2561, %v2578
  %v2582 = vadd.f32 %v2562, %v2578
  %v2583 = vadd.f32 %v2563, %v2578
  %v2584 = vadd.f32 %v2564, %v2578
  %v2585 = vadd.f32 %v2565, %v2578
  %v2586 = vadd.f32 %v2566, %v2578
  %v2587 = vadd.f32 %v2567, %v2578
  %v2588 = vadd.f32 %v2568, %v2578
  %v2589 = vadd.f32 %v2569, %v2578
  %v2590 = vadd.f32 %v2570, %v2578
  %v2591 = vadd.f32 %v2571, %v2578
  %v2592 = vadd.f32 %v2572, %v2578
  %v2593 = vadd.f32 %v2573, %v2578
  %v2594 = vadd.f32 %v2574, %v2578
  %v2595 = vadd.f32 %v2575, %v2578
  %v2596 = vmax.f32 %v2580, 0.0
  %v2597 = vmax.f32 %v2581, 0.0
  %v2598 = vmax.f32 %v2582, 0.0
  %v2599 = vmax.f32 %v2583, 0.0
  %v2600 = vmax.f32 %v2584, 0.0
  %v2601 = vmax.f32 %v2585, 0.0
  %v2602 = vmax.f32 %v2586, 0.0
  %v2603 = vmax.f32 %v2587, 0.0
  %v2604 = vmax.f32 %v2588, 0.0
  %v2605 = vmax.f32 %v2589, 0.0
  %v2606 = vmax.f32 %v2590, 0.0
  %v2607 = vmax.f32 %v2591, 0.0
  %v2608 = vmax.f32 %v2592, 0.0
  %v2609 = vmax.f32 %v2593, 0.0
  %v2610 = vmax.f32 %v2594, 0.0
  %v2611 = vmax.f32 %v2595, 0.0
  %2612 = vxpose.xlu0.b32.start [1/16] %v2596, 128
  %2613 = vxpose.xlu0.b32.cont [2/16] %v2597, 128
  %2614 = vxpose.xlu0.b32.cont [3/16] %v2598, 128
  %2615 = vxpose.xlu0.b32.cont [4/16] %v2599, 128
  %2616 = vxpose.xlu0.b32.cont [5/16] %v2600, 128
  %2617 = vxpose.xlu0.b32.cont [6/16] %v2601, 128
  %2618 = vxpose.xlu0.b32.cont [7/16] %v2602, 128
  %2619 = vxpose.xlu0.b32.cont [8/16] %v2603, 128
  %2620 = vxpose.xlu0.b32.cont [9/16] 0.0, 128
  %2621 = vxpose.xlu0.b32.cont [10/16] 0.0, 128
  %2622 = vxpose.xlu0.b32.cont [11/16] 0.0, 128
  %2623 = vxpose.xlu0.b32.cont [12/16] 0.0, 128
  %2624 = vxpose.xlu0.b32.cont [13/16] 0.0, 128
  %2625 = vxpose.xlu0.b32.cont [14/16] 0.0, 128
  %2626 = vxpose.xlu0.b32.cont [15/16] 0.0, 128
  %2627 = vxpose.xlu0.b32.end [16/16] 0.0, 128
  %v2628 = vpop.trf.xlu0
  %v2629 = vpop.trf.xlu0
  %v2630 = vpop.trf.xlu0
  %v2631 = vpop.trf.xlu0
  %v2632 = vpop.trf.xlu0
  %v2633 = vpop.trf.xlu0
  %v2634 = vpop.trf.xlu0
  %v2635 = vpop.trf.xlu0
  %v2636 = vpop.trf.xlu0
  %v2637 = vpop.trf.xlu0
  %v2638 = vpop.trf.xlu0
  %v2639 = vpop.trf.xlu0
  %v2640 = vpop.trf.xlu0
  %v2641 = vpop.trf.xlu0
  %v2642 = vpop.trf.xlu0
  %v2643 = vpop.trf.xlu0
  %vm2644 = vcmask 523264
  %2645 = vst.msk [vmem:[%s7] sm:$0xff] %vm2644, %v2628
  %2646 = vxpose.xlu0.b32.start [1/16] %v2604, 128
  %2647 = vxpose.xlu0.b32.cont [2/16] %v2605, 128
  %2648 = vxpose.xlu0.b32.cont [3/16] %v2606, 128
  %2649 = vxpose.xlu0.b32.cont [4/16] %v2607, 128
  %2650 = vxpose.xlu0.b32.cont [5/16] %v2608, 128
  %2651 = vxpose.xlu0.b32.cont [6/16] %v2609, 128
  %2652 = vxpose.xlu0.b32.cont [7/16] %v2610, 128
  %2653 = vxpose.xlu0.b32.cont [8/16] %v2611, 128
  %2654 = vxpose.xlu0.b32.cont [9/16] 0.0, 128
  %2655 = vxpose.xlu0.b32.cont [10/16] 0.0, 128
  %2656 = vxpose.xlu0.b32.cont [11/16] 0.0, 128
  %2657 = vxpose.xlu0.b32.cont [12/16] 0.0, 128
  %2658 = vxpose.xlu0.b32.cont [13/16] 0.0, 128
  %2659 = vxpose.xlu0.b32.cont [14/16] 0.0, 128
  %2660 = vxpose.xlu0.b32.cont [15/16] 0.0, 128
  %2661 = vxpose.xlu0.b32.end [16/16] 0.0, 128
  %v2662 = vpop.trf.xlu0
  %v2663 = vpop.trf.xlu0
  %v2664 = vpop.trf.xlu0
  %v2665 = vpop.trf.xlu0
  %v2666 = vpop.trf.xlu0
  %v2667 = vpop.trf.xlu0
  %v2668 = vpop.trf.xlu0
  %v2669 = vpop.trf.xlu0
  %v2670 = vpop.trf.xlu0
  %v2671 = vpop.trf.xlu0
  %v2672 = vpop.trf.xlu0
  %v2673 = vpop.trf.xlu0
  %v2674 = vpop.trf.xlu0
  %v2675 = vpop.trf.xlu0
  %v2676 = vpop.trf.xlu0
  %v2677 = vpop.trf.xlu0
  %s2678 = scalar_lea.vmem %s7, 8
  %2679 = vst.msk [vmem:[%s2678] sm:$0xff] %vm2644, %v2662
  // Predicated region
  $region30: #{latent_decoder_forward.2} parent=0 // pred_check
    _
  $region31: #{latent_decoder_forward.2} parent=0 // pred_check_branch
    %2681 = sbr.rel (0) target = $region33
  $region32: #{latent_decoder_forward.2} parent=0 // pred_region
    _
  $region33: #{latent_decoder_forward.2} parent=0 // pred_fallthru
    _
  // Predicated region
  $region34: #{latent_decoder_forward.2} parent=0 // pred_check
    _
  $region35: #{latent_decoder_forward.2} parent=0 // pred_check_branch
    %2683 = sbr.rel (0) target = $region37
  $region36: #{latent_decoder_forward.2} parent=0 // pred_region
    _
  $region37: #{latent_decoder_forward.2} parent=0 // pred_fallthru
    _

</llo_original>
